<compile_context>
chip_gen: v7x
topology: tpu7x:2x2x1
jax: 0.10.0
libtpu: 0.0.40
codegen_flags: <defaults>
</compile_context>

<pallas_src>
import math
from functools import partial

import jax
import jax.numpy as jnp
from jax.experimental import pallas as pl
from jax.experimental.pallas import tpu as pltpu

# ----------------------------- config ---------------------------------------
VOCAB = 100
HIDDEN = 32
LAYERS = 2
HEADS = 4
HEAD_DIM = HIDDEN // HEADS
INTERMEDIATE = 64
MAX_POS = 16
TYPE_VOCAB = 2
NUM_CLASSES = 4
LN_EPS = 1e-12
B = 2
S = 8
M = B * S  # rows of the 2-D activation slab

assert S & (S - 1) == 0, "S must be a power of two for the shift-based batch id"
S_LOG2 = S.bit_length() - 1

# -------- vector-slab row layout (all 1-row params live in one (NV,128) slab) --------
ROW_POS = 0                                  # rows 0:M -> (pos + type) embeddings, tiled
ROW_EMB_G = M
ROW_EMB_B = M + 1
ROWS_PER_LAYER = HEADS + 7                   # bq x HEADS, bo', ln1_g, ln1_b, bi, bf, ln2_g, ln2_b


def _lrow(li):
    return M + 2 + li * ROWS_PER_LAYER


def ROW_BQ(li, hd):
    return _lrow(li) + hd


def ROW_BO(li):
    return _lrow(li) + HEADS


def ROW_LN1G(li):
    return _lrow(li) + HEADS + 1


def ROW_LN1B(li):
    return _lrow(li) + HEADS + 2


def ROW_BI(li):
    return _lrow(li) + HEADS + 3


def ROW_BF(li):
    return _lrow(li) + HEADS + 4


def ROW_LN2G(li):
    return _lrow(li) + HEADS + 5


def ROW_LN2B(li):
    return _lrow(li) + HEADS + 6


ROW_POOL_B = M + 2 + LAYERS * ROWS_PER_LAYER
ROW_CLS_B = ROW_POOL_B + 1
N_VEC_ROWS = ((ROW_CLS_B + 1 + 7) // 8) * 8


# ----------------------------- in-kernel helpers ----------------------------


def _layernorm(x, g, b):
    mean = jnp.mean(x, axis=-1, keepdims=True)
    d = x - mean
    var = jnp.mean(d * d, axis=-1, keepdims=True)
    return d * jax.lax.rsqrt(var + LN_EPS) * g + b


def _gelu(x):
    # TODO(synk): HF 'gelu' is erf-based; tanh approximation differs by <1e-3.
    return 0.5 * x * (1.0 + jnp.tanh(0.7978845608028654 * (x + 0.044715 * x * x * x)))


def _softmax(s):
    # Note: pl.reciprocal(approx=True) trades a tiny relative error for a free EUP slot.
    s = s - jnp.max(s, axis=-1, keepdims=True)
    p = jnp.exp(s)
    return p * pl.reciprocal(jnp.sum(p, axis=-1, keepdims=True), approx=True)


# ----------------------------- the fused kernel ------------------------------


def bert_fused_kernel(ids_ref, amask_ref, wemb_ref, wqkv_ref, wo_ref,
                      wff_ref, wtail_ref, vecs_ref, logits_ref):
    def vrow(r, w):
        return vecs_ref[r:r + 1, 0:w]

    # --- fused embedding: one-hot gather on the MXU + (pos+type) add + LN ---
    ids = ids_ref[...]                                                   # (M, 1) int32
    vocab_iota = jax.lax.broadcasted_iota(jnp.int32, (M, VOCAB), 1)
    onehot = jnp.where(ids == vocab_iota, 1.0, 0.0).astype(jnp.bfloat16)  # (M, VOCAB)
    word = jnp.dot(onehot, wemb_ref[...], preferred_element_type=jnp.float32)  # (M, H)
    emb = word + vecs_ref[ROW_POS:ROW_POS + M, 0:HIDDEN]
    # embedding dropout is identity at inference
    h = _layernorm(emb, vrow(ROW_EMB_G, HIDDEN), vrow(ROW_EMB_B, HIDDEN))

    # --- additive block-diagonal mask built in-kernel (HF -1e4 convention) ---
    qi = jax.lax.broadcasted_iota(jnp.int32, (M, M), 0)
    kj = jax.lax.broadcasted_iota(jnp.int32, (M, M), 1)
    same_batch = jnp.right_shift(qi, S_LOG2) == jnp.right_shift(kj, S_LOG2)
    keep = amask_ref[...] > 0.5                                          # (1, M)
    amask = jnp.where(same_batch & keep, jnp.float32(0.0), jnp.float32(-10000.0))

    # --- encoder layers (statically unrolled; everything stays in VMEM/vregs) ---
    for li in range(LAYERS):
        hb = h.astype(jnp.bfloat16)
        attn = None
        for hd in range(HEADS):
            idx = li * HEADS + hd
            w3 = wqkv_ref[idx]                                           # (3H, D) bf16
            # scale folded into Q weight/bias; K bias cancels in softmax;
            # V bias folded into bo' at pack time (both exact).
            q = jnp.dot(hb, w3[0:HIDDEN, :],
                        preferred_element_type=jnp.float32) + vrow(ROW_BQ(li, hd), HEAD_DIM)
            k = jnp.dot(hb, w3[HIDDEN:2 * HIDDEN, :],
                        preferred_element_type=jnp.float32)
            v = jnp.dot(hb, w3[2 * HIDDEN:3 * HIDDEN, :],
                        preferred_element_type=jnp.float32)
            s = jax.lax.dot_general(q.astype(jnp.bfloat16), k.astype(jnp.bfloat16),
                                    (((1,), (1,)), ((), ())),
                                    preferred_element_type=jnp.float32) + amask
            p = _softmax(s)
            ctx = jnp.dot(p.astype(jnp.bfloat16), v.astype(jnp.bfloat16),
                          preferred_element_type=jnp.float32)            # (M, D)
            # merge-heads + output projection fused: ctx @ Wo == sum_h ctx_h @ Wo_rows_h
            part = jnp.dot(ctx.astype(jnp.bfloat16), wo_ref[idx],
                           preferred_element_type=jnp.float32)           # (M, H)
            attn = part if attn is None else attn + part
        attn = attn + vrow(ROW_BO(li), HIDDEN)
        # attention-output dropout is identity at inference
        h1 = _layernorm(attn + h, vrow(ROW_LN1G(li), HIDDEN), vrow(ROW_LN1B(li), HIDDEN))

        wff_l = wff_ref[li]                                              # (H+I, I) bf16
        ff = _gelu(jnp.dot(h1.astype(jnp.bfloat16), wff_l[0:HIDDEN, :],
                           preferred_element_type=jnp.float32)
                   + vrow(ROW_BI(li), INTERMEDIATE))                      # (M, I)
        ff2 = jnp.dot(ff.astype(jnp.bfloat16),
                      wff_l[HIDDEN:HIDDEN + INTERMEDIATE, 0:HIDDEN],
                      preferred_element_type=jnp.float32) + vrow(ROW_BF(li), HIDDEN)
        # FFN-output dropout is identity at inference
        h = _layernorm(ff2 + h1, vrow(ROW_LN2G(li), HIDDEN), vrow(ROW_LN2B(li), HIDDEN))

    # --- pooler on [CLS] rows (static sublane slices) + classifier ---
    cls_rows = jnp.concatenate([h[b * S:b * S + 1, :] for b in range(B)], axis=0)  # (B, H)
    wtail = wtail_ref[...]                                               # (2H, H) bf16
    pooled = jnp.tanh(jnp.dot(cls_rows.astype(jnp.bfloat16), wtail[0:HIDDEN, :],
                              preferred_element_type=jnp.float32)
                      + vrow(ROW_POOL_B, HIDDEN))                         # (B, H)
    # TODO(synk): nn.Dropout(0.3) is identity in eval mode; training-mode dropout not emitted.
    logits = jnp.dot(pooled.astype(jnp.bfloat16), wtail[HIDDEN:2 * HIDDEN, :],
                     preferred_element_type=jnp.float32)                 # (B, H), cols 4: zero
    logits_ref[...] = logits[:, 0:NUM_CLASSES] + vrow(ROW_CLS_B, NUM_CLASSES)


# ----------------------------- parameters -----------------------------------


def init_params(key):
    std = 0.02

    def dense(k, fan_in, fan_out):
        kw, kb = jax.random.split(k)
        return (
            jax.random.normal(kw, (fan_in, fan_out), jnp.float32) * std,
            jax.random.normal(kb, (fan_out,), jnp.float32) * std,
        )

    keys = jax.random.split(key, 8 + LAYERS)
    params = {
        "word_emb": jax.random.normal(keys[0], (VOCAB, HIDDEN), jnp.float32) * std,
        "pos_emb": jax.random.normal(keys[1], (MAX_POS, HIDDEN), jnp.float32) * std,
        "type_emb": jax.random.normal(keys[2], (TYPE_VOCAB, HIDDEN), jnp.float32) * std,
        "emb_ln_g": jnp.ones((HIDDEN,), jnp.float32),
        "emb_ln_b": jnp.zeros((HIDDEN,), jnp.float32),
        "layers": [],
    }
    for li in range(LAYERS):
        lk = jax.random.split(keys[3 + li], 6)
        wq, bq = dense(lk[0], HIDDEN, HIDDEN)
        wk, bk = dense(lk[1], HIDDEN, HIDDEN)
        wv, bv = dense(lk[2], HIDDEN, HIDDEN)
        wo, bo = dense(lk[3], HIDDEN, HIDDEN)
        wi, bi = dense(lk[4], HIDDEN, INTERMEDIATE)
        wf, bf = dense(lk[5], INTERMEDIATE, HIDDEN)
        params["layers"].append(
            dict(
                wq=wq, bq=bq, wk=wk, bk=bk, wv=wv, bv=bv, wo=wo, bo=bo,
                ln1_g=jnp.ones((HIDDEN,), jnp.float32),
                ln1_b=jnp.zeros((HIDDEN,), jnp.float32),
                wi=wi, bi=bi, wf=wf, bf=bf,
                ln2_g=jnp.ones((HIDDEN,), jnp.float32),
                ln2_b=jnp.zeros((HIDDEN,), jnp.float32),
            )
        )
    params["pool_w"], params["pool_b"] = dense(keys[3 + LAYERS], HIDDEN, HIDDEN)
    params["cls_w"], params["cls_b"] = dense(keys[4 + LAYERS], HIDDEN, NUM_CLASSES)
    return params


def pack_params(params):
    """One-time packing: per-head pre-split QKV (Q pre-scaled, K/V biases folded away
    exactly), bf16 MXU weight slabs, and a single (rows,128) f32 vector slab."""
    ls = params["layers"]
    scale = 1.0 / math.sqrt(HEAD_DIM)

    # per-head QKV weights, sublane-stacked so every in-kernel slice starts at lane 0
    wqkv_blocks, wo_blocks = [], []
    for p in ls:
        for hd in range(HEADS):
            sl = slice(hd * HEAD_DIM, (hd + 1) * HEAD_DIM)
            wqkv_blocks.append(jnp.concatenate(
                [p["wq"][:, sl] * scale, p["wk"][:, sl], p["wv"][:, sl]], axis=0))  # (3H, D)
            wo_blocks.append(p["wo"][sl, :])                                        # (D, H)
    wqkv_h = jnp.stack(wqkv_blocks).astype(jnp.bfloat16)        # (L*HEADS, 3H, D)
    wo_h = jnp.stack(wo_blocks).astype(jnp.bfloat16)            # (L*HEADS, D, H)

    # FFN slab: rows 0:H = Wi (H,I); rows H:H+I, lanes 0:H = Wf (I,H)
    wff_list = []
    for p in ls:
        slab = jnp.zeros((HIDDEN + INTERMEDIATE, INTERMEDIATE), jnp.float32)
        slab = slab.at[0:HIDDEN, :].set(p["wi"])
        slab = slab.at[HIDDEN:, 0:HIDDEN].set(p["wf"])
        wff_list.append(slab)
    wff = jnp.stack(wff_list).astype(jnp.bfloat16)              # (L, H+I, I)

    # pooler + classifier slab: rows 0:H = pool_w; rows H:2H lanes 0:4 = cls_w
    wtail = jnp.zeros((2 * HIDDEN, HIDDEN), jnp.float32)
    wtail = wtail.at[0:HIDDEN, :].set(params["pool_w"])
    wtail = wtail.at[HIDDEN:, 0:NUM_CLASSES].set(params["cls_w"])
    wtail = wtail.astype(jnp.bfloat16)

    # vector slab: (pos+type) tiled rows, LN params, biases
    vecs = jnp.zeros((N_VEC_ROWS, 128), jnp.float32)
    pos_type = params["pos_emb"][:S] + params["type_emb"][0][None, :]    # token_type_ids = 0
    vecs = vecs.at[ROW_POS:ROW_POS + M, 0:HIDDEN].set(jnp.tile(pos_type, (B, 1)))
    vecs = vecs.at[ROW_EMB_G, 0:HIDDEN].set(params["emb_ln_g"])
    vecs = vecs.at[ROW_EMB_B, 0:HIDDEN].set(params["emb_ln_b"])
    for li, p in enumerate(ls):
        for hd in range(HEADS):
            sl = slice(hd * HEAD_DIM, (hd + 1) * HEAD_DIM)
            vecs = vecs.at[ROW_BQ(li, hd), 0:HEAD_DIM].set(p["bq"][sl] * scale)
        # bo' = bo + bv @ Wo  (exact: softmax rows sum to 1); K bias dropped (exact)
        vecs = vecs.at[ROW_BO(li), 0:HIDDEN].set(p["bo"] + p["bv"] @ p["wo"])
        vecs = vecs.at[ROW_LN1G(li), 0:HIDDEN].set(p["ln1_g"])
        vecs = vecs.at[ROW_LN1B(li), 0:HIDDEN].set(p["ln1_b"])
        vecs = vecs.at[ROW_BI(li), 0:INTERMEDIATE].set(p["bi"])
        vecs = vecs.at[ROW_BF(li), 0:HIDDEN].set(p["bf"])
        vecs = vecs.at[ROW_LN2G(li), 0:HIDDEN].set(p["ln2_g"])
        vecs = vecs.at[ROW_LN2B(li), 0:HIDDEN].set(p["ln2_b"])
    vecs = vecs.at[ROW_POOL_B, 0:HIDDEN].set(params["pool_b"])
    vecs = vecs.at[ROW_CLS_B, 0:NUM_CLASSES].set(params["cls_b"])

    return dict(
        word_emb=params["word_emb"].astype(jnp.bfloat16),
        wqkv_h=wqkv_h, wo_h=wo_h, wff=wff, wtail=wtail, vecs=vecs,
    )


# ----------------------------- forward --------------------------------------


def bert_for_lcr_forward(packed, input_ids, attention_mask):
    """Mirrors BertForLCR.forward: bert(...) -> pooler_output -> dropout -> classifier."""
    ids_col = input_ids.reshape(M, 1).astype(jnp.int32)          # flat row b*S+s
    amask_row = attention_mask.reshape(1, M).astype(jnp.float32)

    vmem = pl.BlockSpec(memory_space=pltpu.MemorySpace.VMEM)
    logits = pl.pallas_call(
        bert_fused_kernel,
        out_shape=jax.ShapeDtypeStruct((B, NUM_CLASSES), jnp.float32),
        in_specs=[vmem] * 8,
        out_specs=vmem,
        compiler_params=pltpu.CompilerParams(vmem_limit_bytes=8 * 1024 * 1024),
    )(
        ids_col, amask_row,
        packed["word_emb"], packed["wqkv_h"], packed["wo_h"],
        packed["wff"], packed["wtail"], packed["vecs"],
    )
    return logits


# ----------------------------- main ------------------------------------------

if __name__ == "__main__":
    key = jax.random.PRNGKey(0)
    pkey, ikey = jax.random.split(key)

    params = init_params(pkey)
    packed = pack_params(params)

    input_ids = jax.random.randint(ikey, (B, S), 0, VOCAB, dtype=jnp.int32)
    attention_mask = jnp.array(
        [[1, 1, 1, 1, 1, 1, 1, 1],
         [1, 1, 1, 1, 1, 1, 0, 0]], dtype=jnp.int32
    )

    fwd = jax.jit(partial(bert_for_lcr_forward, packed))
    logits = jax.block_until_ready(fwd(input_ids, attention_mask))

    assert logits.shape == (B, NUM_CLASSES), logits.shape
    assert logits.dtype == jnp.float32
    assert bool(jnp.all(jnp.isfinite(logits)))
    print("KERNEL_OK")
</pallas_src>

<mosaic_0001>
module attributes {stable_mosaic.version = 11 : i64} {
  func.func @bert_fused_kernel(%arg0: memref<16x1xi32, #tpu.memory_space<vmem>>, %arg1: memref<1x16xf32, #tpu.memory_space<vmem>>, %arg2: memref<100x32xbf16, #tpu.memory_space<vmem>>, %arg3: memref<8x96x8xbf16, #tpu.memory_space<vmem>>, %arg4: memref<8x8x32xbf16, #tpu.memory_space<vmem>>, %arg5: memref<2x96x64xbf16, #tpu.memory_space<vmem>>, %arg6: memref<64x32xbf16, #tpu.memory_space<vmem>>, %arg7: memref<48x128xf32, #tpu.memory_space<vmem>>, %arg8: memref<2x4xf32, #tpu.memory_space<vmem>>) attributes {dimension_semantics = [], scalar_prefetch = 0 : i64, scratch_operands = 0 : i64, tpu.core_type = #tpu.core_type<tc>} {
    %c0 = arith.constant 0 : index
    %c0_0 = arith.constant 0 : index
    %0 = vector.load %arg0[%c0, %c0_0] : memref<16x1xi32, #tpu.memory_space<vmem>>, vector<16x1xi32>
    %1 = tpu.iota {dimensions = array<i32: 1>} : vector<16x100xi32>
    %2 = vector.broadcast %0 : vector<16x1xi32> to vector<16x100xi32>
    %3 = arith.cmpi eq, %2, %1 : vector<16x100xi32>
    %cst = arith.constant 1.000000e+00 : f32
    %cst_1 = arith.constant 0.000000e+00 : f32
    %4 = vector.broadcast %cst : f32 to vector<16x100xf32>
    %5 = vector.broadcast %cst_1 : f32 to vector<16x100xf32>
    %6 = arith.select %3, %4, %5 : vector<16x100xi1>, vector<16x100xf32>
    %7 = arith.truncf %6 : vector<16x100xf32> to vector<16x100xbf16>
    %c0_2 = arith.constant 0 : index
    %c0_3 = arith.constant 0 : index
    %8 = vector.load %arg2[%c0_2, %c0_3] : memref<100x32xbf16, #tpu.memory_space<vmem>>, vector<100x32xbf16>
    %cst_4 = arith.constant dense<0.000000e+00> : vector<16x32xf32>
    %9 = tpu.matmul %7, %8, %cst_4 {dimension_numbers = #tpu.dot_dimension_numbers<[1], [0], [0], [1], [0, 0, 1, 1], [], []>} : vector<16x100xbf16>, vector<100x32xbf16>, vector<16x32xf32> -> vector<16x32xf32>
    %c0_5 = arith.constant 0 : index
    %c0_6 = arith.constant 0 : index
    %10 = vector.load %arg7[%c0_5, %c0_6] : memref<48x128xf32, #tpu.memory_space<vmem>>, vector<16x32xf32>
    %11 = arith.addf %9, %10 : vector<16x32xf32>
    %c16 = arith.constant 16 : index
    %c0_7 = arith.constant 0 : index
    %12 = vector.load %arg7[%c16, %c0_7] : memref<48x128xf32, #tpu.memory_space<vmem>>, vector<1x32xf32>
    %c17 = arith.constant 17 : index
    %c0_8 = arith.constant 0 : index
    %13 = vector.load %arg7[%c17, %c0_8] : memref<48x128xf32, #tpu.memory_space<vmem>>, vector<1x32xf32>
    %cst_9 = arith.constant dense<0.000000e+00> : vector<16xf32>
    %14 = vector.multi_reduction <add>, %11, %cst_9 [1] : vector<16x32xf32> to vector<16xf32>
    %15 = vector.shape_cast %14 : vector<16xf32> to vector<16x1xf32>
    %cst_10 = arith.constant 3.200000e+01 : f32
    %16 = vector.broadcast %cst_10 : f32 to vector<16x1xf32>
    %17 = arith.divf %15, %16 : vector<16x1xf32>
    %18 = vector.broadcast %17 : vector<16x1xf32> to vector<16x32xf32>
    %19 = arith.subf %11, %18 : vector<16x32xf32>
    %20 = arith.mulf %19, %19 : vector<16x32xf32>
    %cst_11 = arith.constant dense<0.000000e+00> : vector<16xf32>
    %21 = vector.multi_reduction <add>, %20, %cst_11 [1] : vector<16x32xf32> to vector<16xf32>
    %22 = vector.shape_cast %21 : vector<16xf32> to vector<16x1xf32>
    %cst_12 = arith.constant 3.200000e+01 : f32
    %23 = vector.broadcast %cst_12 : f32 to vector<16x1xf32>
    %24 = arith.divf %22, %23 : vector<16x1xf32>
    %cst_13 = arith.constant 9.99999996E-13 : f32
    %25 = vector.broadcast %cst_13 : f32 to vector<16x1xf32>
    %26 = arith.addf %24, %25 : vector<16x1xf32>
    %27 = math.rsqrt %26 : vector<16x1xf32>
    %28 = vector.broadcast %27 : vector<16x1xf32> to vector<16x32xf32>
    %29 = arith.mulf %19, %28 : vector<16x32xf32>
    %30 = vector.broadcast %12 : vector<1x32xf32> to vector<16x32xf32>
    %31 = arith.mulf %29, %30 : vector<16x32xf32>
    %32 = vector.broadcast %13 : vector<1x32xf32> to vector<16x32xf32>
    %33 = arith.addf %31, %32 : vector<16x32xf32>
    %34 = tpu.iota {dimensions = array<i32: 0>} : vector<16x16xi32>
    %35 = tpu.iota {dimensions = array<i32: 1>} : vector<16x16xi32>
    %c3_i32 = arith.constant 3 : i32
    %36 = vector.broadcast %c3_i32 : i32 to vector<16x16xi32>
    %37 = arith.shrsi %34, %36 : vector<16x16xi32>
    %c3_i32_14 = arith.constant 3 : i32
    %38 = vector.broadcast %c3_i32_14 : i32 to vector<16x16xi32>
    %39 = arith.shrsi %35, %38 : vector<16x16xi32>
    %40 = arith.cmpi eq, %37, %39 : vector<16x16xi32>
    %c0_15 = arith.constant 0 : index
    %c0_16 = arith.constant 0 : index
    %41 = vector.load %arg1[%c0_15, %c0_16] : memref<1x16xf32, #tpu.memory_space<vmem>>, vector<1x16xf32>
    %cst_17 = arith.constant 5.000000e-01 : f32
    %42 = vector.broadcast %cst_17 : f32 to vector<1x16xf32>
    %43 = arith.cmpf ogt, %41, %42 : vector<1x16xf32>
    %44 = vector.broadcast %43 : vector<1x16xi1> to vector<16x16xi1>
    %45 = arith.andi %40, %44 : vector<16x16xi1>
    %cst_18 = arith.constant 0.000000e+00 : f32
    %cst_19 = arith.constant -1.000000e+04 : f32
    %46 = vector.broadcast %cst_18 : f32 to vector<16x16xf32>
    %47 = vector.broadcast %cst_19 : f32 to vector<16x16xf32>
    %48 = arith.select %45, %46, %47 : vector<16x16xi1>, vector<16x16xf32>
    %49 = arith.truncf %33 : vector<16x32xf32> to vector<16x32xbf16>
    %c0_20 = arith.constant 0 : index
    %c0_21 = arith.constant 0 : index
    %c0_22 = arith.constant 0 : index
    %50 = vector.load %arg3[%c0_20, %c0_21, %c0_22] : memref<8x96x8xbf16, #tpu.memory_space<vmem>>, vector<1x96x8xbf16>
    %51 = vector.shape_cast %50 : vector<1x96x8xbf16> to vector<96x8xbf16>
    %52 = vector.extract_strided_slice %51 {offsets = [0, 0], sizes = [32, 8], strides = [1, 1]} : vector<96x8xbf16> to vector<32x8xbf16>
    %cst_23 = arith.constant dense<0.000000e+00> : vector<16x8xf32>
    %53 = tpu.matmul %49, %52, %cst_23 {dimension_numbers = #tpu.dot_dimension_numbers<[1], [0], [0], [1], [0, 0, 1, 1], [], []>} : vector<16x32xbf16>, vector<32x8xbf16>, vector<16x8xf32> -> vector<16x8xf32>
    %c18 = arith.constant 18 : index
    %c0_24 = arith.constant 0 : index
    %54 = vector.load %arg7[%c18, %c0_24] : memref<48x128xf32, #tpu.memory_space<vmem>>, vector<1x8xf32>
    %55 = vector.broadcast %54 : vector<1x8xf32> to vector<16x8xf32>
    %56 = arith.addf %53, %55 : vector<16x8xf32>
    %57 = vector.extract_strided_slice %51 {offsets = [32, 0], sizes = [32, 8], strides = [1, 1]} : vector<96x8xbf16> to vector<32x8xbf16>
    %cst_25 = arith.constant dense<0.000000e+00> : vector<16x8xf32>
    %58 = tpu.matmul %49, %57, %cst_25 {dimension_numbers = #tpu.dot_dimension_numbers<[1], [0], [0], [1], [0, 0, 1, 1], [], []>} : vector<16x32xbf16>, vector<32x8xbf16>, vector<16x8xf32> -> vector<16x8xf32>
    %59 = vector.extract_strided_slice %51 {offsets = [64, 0], sizes = [32, 8], strides = [1, 1]} : vector<96x8xbf16> to vector<32x8xbf16>
    %cst_26 = arith.constant dense<0.000000e+00> : vector<16x8xf32>
    %60 = tpu.matmul %49, %59, %cst_26 {dimension_numbers = #tpu.dot_dimension_numbers<[1], [0], [0], [1], [0, 0, 1, 1], [], []>} : vector<16x32xbf16>, vector<32x8xbf16>, vector<16x8xf32> -> vector<16x8xf32>
    %61 = arith.truncf %56 : vector<16x8xf32> to vector<16x8xbf16>
    %62 = arith.truncf %58 : vector<16x8xf32> to vector<16x8xbf16>
    %cst_27 = arith.constant dense<0.000000e+00> : vector<16x16xf32>
    %63 = tpu.matmul %61, %62, %cst_27 {dimension_numbers = #tpu.dot_dimension_numbers<[1], [1], [0], [0], [0, 0, 1, 0], [], []>} : vector<16x8xbf16>, vector<16x8xbf16>, vector<16x16xf32> -> vector<16x16xf32>
    %64 = arith.addf %63, %48 : vector<16x16xf32>
    %cst_28 = arith.constant dense<0xFF800000> : vector<16xf32>
    %65 = vector.multi_reduction <maximumf>, %64, %cst_28 [1] : vector<16x16xf32> to vector<16xf32>
    %66 = vector.shape_cast %65 : vector<16xf32> to vector<16x1xf32>
    %67 = vector.broadcast %66 : vector<16x1xf32> to vector<16x16xf32>
    %68 = arith.subf %64, %67 : vector<16x16xf32>
    %69 = math.exp %68 : vector<16x16xf32>
    %cst_29 = arith.constant dense<0.000000e+00> : vector<16xf32>
    %70 = vector.multi_reduction <add>, %69, %cst_29 [1] : vector<16x16xf32> to vector<16xf32>
    %71 = vector.shape_cast %70 : vector<16xf32> to vector<16x1xf32>
    %72 = tpu.reciprocal %71 {approx = true} : vector<16x1xf32> -> vector<16x1xf32>
    %73 = vector.broadcast %72 : vector<16x1xf32> to vector<16x16xf32>
    %74 = arith.mulf %69, %73 : vector<16x16xf32>
    %75 = arith.truncf %74 : vector<16x16xf32> to vector<16x16xbf16>
    %76 = arith.truncf %60 : vector<16x8xf32> to vector<16x8xbf16>
    %cst_30 = arith.constant dense<0.000000e+00> : vector<16x8xf32>
    %77 = tpu.matmul %75, %76, %cst_30 {dimension_numbers = #tpu.dot_dimension_numbers<[1], [0], [0], [1], [0, 0, 1, 1], [], []>} : vector<16x16xbf16>, vector<16x8xbf16>, vector<16x8xf32> -> vector<16x8xf32>
    %78 = arith.truncf %77 : vector<16x8xf32> to vector<16x8xbf16>
    %c0_31 = arith.constant 0 : index
    %c0_32 = arith.constant 0 : index
    %c0_33 = arith.constant 0 : index
    %79 = vector.load %arg4[%c0_31, %c0_32, %c0_33] : memref<8x8x32xbf16, #tpu.memory_space<vmem>>, vector<1x8x32xbf16>
    %80 = vector.shape_cast %79 : vector<1x8x32xbf16> to vector<8x32xbf16>
    %cst_34 = arith.constant dense<0.000000e+00> : vector<16x32xf32>
    %81 = tpu.matmul %78, %80, %cst_34 {dimension_numbers = #tpu.dot_dimension_numbers<[1], [0], [0], [1], [0, 0, 1, 1], [], []>} : vector<16x8xbf16>, vector<8x32xbf16>, vector<16x32xf32> -> vector<16x32xf32>
    %c1 = arith.constant 1 : index
    %c0_35 = arith.constant 0 : index
    %c0_36 = arith.constant 0 : index
    %82 = vector.load %arg3[%c1, %c0_35, %c0_36] : memref<8x96x8xbf16, #tpu.memory_space<vmem>>, vector<1x96x8xbf16>
    %83 = vector.shape_cast %82 : vector<1x96x8xbf16> to vector<96x8xbf16>
    %84 = vector.extract_strided_slice %83 {offsets = [0, 0], sizes = [32, 8], strides = [1, 1]} : vector<96x8xbf16> to vector<32x8xbf16>
    %cst_37 = arith.constant dense<0.000000e+00> : vector<16x8xf32>
    %85 = tpu.matmul %49, %84, %cst_37 {dimension_numbers = #tpu.dot_dimension_numbers<[1], [0], [0], [1], [0, 0, 1, 1], [], []>} : vector<16x32xbf16>, vector<32x8xbf16>, vector<16x8xf32> -> vector<16x8xf32>
    %c19 = arith.constant 19 : index
    %c0_38 = arith.constant 0 : index
    %86 = vector.load %arg7[%c19, %c0_38] : memref<48x128xf32, #tpu.memory_space<vmem>>, vector<1x8xf32>
    %87 = vector.broadcast %86 : vector<1x8xf32> to vector<16x8xf32>
    %88 = arith.addf %85, %87 : vector<16x8xf32>
    %89 = vector.extract_strided_slice %83 {offsets = [32, 0], sizes = [32, 8], strides = [1, 1]} : vector<96x8xbf16> to vector<32x8xbf16>
    %cst_39 = arith.constant dense<0.000000e+00> : vector<16x8xf32>
    %90 = tpu.matmul %49, %89, %cst_39 {dimension_numbers = #tpu.dot_dimension_numbers<[1], [0], [0], [1], [0, 0, 1, 1], [], []>} : vector<16x32xbf16>, vector<32x8xbf16>, vector<16x8xf32> -> vector<16x8xf32>
    %91 = vector.extract_strided_slice %83 {offsets = [64, 0], sizes = [32, 8], strides = [1, 1]} : vector<96x8xbf16> to vector<32x8xbf16>
    %cst_40 = arith.constant dense<0.000000e+00> : vector<16x8xf32>
    %92 = tpu.matmul %49, %91, %cst_40 {dimension_numbers = #tpu.dot_dimension_numbers<[1], [0], [0], [1], [0, 0, 1, 1], [], []>} : vector<16x32xbf16>, vector<32x8xbf16>, vector<16x8xf32> -> vector<16x8xf32>
    %93 = arith.truncf %88 : vector<16x8xf32> to vector<16x8xbf16>
    %94 = arith.truncf %90 : vector<16x8xf32> to vector<16x8xbf16>
    %cst_41 = arith.constant dense<0.000000e+00> : vector<16x16xf32>
    %95 = tpu.matmul %93, %94, %cst_41 {dimension_numbers = #tpu.dot_dimension_numbers<[1], [1], [0], [0], [0, 0, 1, 0], [], []>} : vector<16x8xbf16>, vector<16x8xbf16>, vector<16x16xf32> -> vector<16x16xf32>
    %96 = arith.addf %95, %48 : vector<16x16xf32>
    %cst_42 = arith.constant dense<0xFF800000> : vector<16xf32>
    %97 = vector.multi_reduction <maximumf>, %96, %cst_42 [1] : vector<16x16xf32> to vector<16xf32>
    %98 = vector.shape_cast %97 : vector<16xf32> to vector<16x1xf32>
    %99 = vector.broadcast %98 : vector<16x1xf32> to vector<16x16xf32>
    %100 = arith.subf %96, %99 : vector<16x16xf32>
    %101 = math.exp %100 : vector<16x16xf32>
    %cst_43 = arith.constant dense<0.000000e+00> : vector<16xf32>
    %102 = vector.multi_reduction <add>, %101, %cst_43 [1] : vector<16x16xf32> to vector<16xf32>
    %103 = vector.shape_cast %102 : vector<16xf32> to vector<16x1xf32>
    %104 = tpu.reciprocal %103 {approx = true} : vector<16x1xf32> -> vector<16x1xf32>
    %105 = vector.broadcast %104 : vector<16x1xf32> to vector<16x16xf32>
    %106 = arith.mulf %101, %105 : vector<16x16xf32>
    %107 = arith.truncf %106 : vector<16x16xf32> to vector<16x16xbf16>
    %108 = arith.truncf %92 : vector<16x8xf32> to vector<16x8xbf16>
    %cst_44 = arith.constant dense<0.000000e+00> : vector<16x8xf32>
    %109 = tpu.matmul %107, %108, %cst_44 {dimension_numbers = #tpu.dot_dimension_numbers<[1], [0], [0], [1], [0, 0, 1, 1], [], []>} : vector<16x16xbf16>, vector<16x8xbf16>, vector<16x8xf32> -> vector<16x8xf32>
    %110 = arith.truncf %109 : vector<16x8xf32> to vector<16x8xbf16>
    %c1_45 = arith.constant 1 : index
    %c0_46 = arith.constant 0 : index
    %c0_47 = arith.constant 0 : index
    %111 = vector.load %arg4[%c1_45, %c0_46, %c0_47] : memref<8x8x32xbf16, #tpu.memory_space<vmem>>, vector<1x8x32xbf16>
    %112 = vector.shape_cast %111 : vector<1x8x32xbf16> to vector<8x32xbf16>
    %cst_48 = arith.constant dense<0.000000e+00> : vector<16x32xf32>
    %113 = tpu.matmul %110, %112, %cst_48 {dimension_numbers = #tpu.dot_dimension_numbers<[1], [0], [0], [1], [0, 0, 1, 1], [], []>} : vector<16x8xbf16>, vector<8x32xbf16>, vector<16x32xf32> -> vector<16x32xf32>
    %114 = arith.addf %81, %113 : vector<16x32xf32>
    %c2 = arith.constant 2 : index
    %c0_49 = arith.constant 0 : index
    %c0_50 = arith.constant 0 : index
    %115 = vector.load %arg3[%c2, %c0_49, %c0_50] : memref<8x96x8xbf16, #tpu.memory_space<vmem>>, vector<1x96x8xbf16>
    %116 = vector.shape_cast %115 : vector<1x96x8xbf16> to vector<96x8xbf16>
    %117 = vector.extract_strided_slice %116 {offsets = [0, 0], sizes = [32, 8], strides = [1, 1]} : vector<96x8xbf16> to vector<32x8xbf16>
    %cst_51 = arith.constant dense<0.000000e+00> : vector<16x8xf32>
    %118 = tpu.matmul %49, %117, %cst_51 {dimension_numbers = #tpu.dot_dimension_numbers<[1], [0], [0], [1], [0, 0, 1, 1], [], []>} : vector<16x32xbf16>, vector<32x8xbf16>, vector<16x8xf32> -> vector<16x8xf32>
    %c20 = arith.constant 20 : index
    %c0_52 = arith.constant 0 : index
    %119 = vector.load %arg7[%c20, %c0_52] : memref<48x128xf32, #tpu.memory_space<vmem>>, vector<1x8xf32>
    %120 = vector.broadcast %119 : vector<1x8xf32> to vector<16x8xf32>
    %121 = arith.addf %118, %120 : vector<16x8xf32>
    %122 = vector.extract_strided_slice %116 {offsets = [32, 0], sizes = [32, 8], strides = [1, 1]} : vector<96x8xbf16> to vector<32x8xbf16>
    %cst_53 = arith.constant dense<0.000000e+00> : vector<16x8xf32>
    %123 = tpu.matmul %49, %122, %cst_53 {dimension_numbers = #tpu.dot_dimension_numbers<[1], [0], [0], [1], [0, 0, 1, 1], [], []>} : vector<16x32xbf16>, vector<32x8xbf16>, vector<16x8xf32> -> vector<16x8xf32>
    %124 = vector.extract_strided_slice %116 {offsets = [64, 0], sizes = [32, 8], strides = [1, 1]} : vector<96x8xbf16> to vector<32x8xbf16>
    %cst_54 = arith.constant dense<0.000000e+00> : vector<16x8xf32>
    %125 = tpu.matmul %49, %124, %cst_54 {dimension_numbers = #tpu.dot_dimension_numbers<[1], [0], [0], [1], [0, 0, 1, 1], [], []>} : vector<16x32xbf16>, vector<32x8xbf16>, vector<16x8xf32> -> vector<16x8xf32>
    %126 = arith.truncf %121 : vector<16x8xf32> to vector<16x8xbf16>
    %127 = arith.truncf %123 : vector<16x8xf32> to vector<16x8xbf16>
    %cst_55 = arith.constant dense<0.000000e+00> : vector<16x16xf32>
    %128 = tpu.matmul %126, %127, %cst_55 {dimension_numbers = #tpu.dot_dimension_numbers<[1], [1], [0], [0], [0, 0, 1, 0], [], []>} : vector<16x8xbf16>, vector<16x8xbf16>, vector<16x16xf32> -> vector<16x16xf32>
    %129 = arith.addf %128, %48 : vector<16x16xf32>
    %cst_56 = arith.constant dense<0xFF800000> : vector<16xf32>
    %130 = vector.multi_reduction <maximumf>, %129, %cst_56 [1] : vector<16x16xf32> to vector<16xf32>
    %131 = vector.shape_cast %130 : vector<16xf32> to vector<16x1xf32>
    %132 = vector.broadcast %131 : vector<16x1xf32> to vector<16x16xf32>
    %133 = arith.subf %129, %132 : vector<16x16xf32>
    %134 = math.exp %133 : vector<16x16xf32>
    %cst_57 = arith.constant dense<0.000000e+00> : vector<16xf32>
    %135 = vector.multi_reduction <add>, %134, %cst_57 [1] : vector<16x16xf32> to vector<16xf32>
    %136 = vector.shape_cast %135 : vector<16xf32> to vector<16x1xf32>
    %137 = tpu.reciprocal %136 {approx = true} : vector<16x1xf32> -> vector<16x1xf32>
    %138 = vector.broadcast %137 : vector<16x1xf32> to vector<16x16xf32>
    %139 = arith.mulf %134, %138 : vector<16x16xf32>
    %140 = arith.truncf %139 : vector<16x16xf32> to vector<16x16xbf16>
    %141 = arith.truncf %125 : vector<16x8xf32> to vector<16x8xbf16>
    %cst_58 = arith.constant dense<0.000000e+00> : vector<16x8xf32>
    %142 = tpu.matmul %140, %141, %cst_58 {dimension_numbers = #tpu.dot_dimension_numbers<[1], [0], [0], [1], [0, 0, 1, 1], [], []>} : vector<16x16xbf16>, vector<16x8xbf16>, vector<16x8xf32> -> vector<16x8xf32>
    %143 = arith.truncf %142 : vector<16x8xf32> to vector<16x8xbf16>
    %c2_59 = arith.constant 2 : index
    %c0_60 = arith.constant 0 : index
    %c0_61 = arith.constant 0 : index
    %144 = vector.load %arg4[%c2_59, %c0_60, %c0_61] : memref<8x8x32xbf16, #tpu.memory_space<vmem>>, vector<1x8x32xbf16>
    %145 = vector.shape_cast %144 : vector<1x8x32xbf16> to vector<8x32xbf16>
    %cst_62 = arith.constant dense<0.000000e+00> : vector<16x32xf32>
    %146 = tpu.matmul %143, %145, %cst_62 {dimension_numbers = #tpu.dot_dimension_numbers<[1], [0], [0], [1], [0, 0, 1, 1], [], []>} : vector<16x8xbf16>, vector<8x32xbf16>, vector<16x32xf32> -> vector<16x32xf32>
    %147 = arith.addf %114, %146 : vector<16x32xf32>
    %c3 = arith.constant 3 : index
    %c0_63 = arith.constant 0 : index
    %c0_64 = arith.constant 0 : index
    %148 = vector.load %arg3[%c3, %c0_63, %c0_64] : memref<8x96x8xbf16, #tpu.memory_space<vmem>>, vector<1x96x8xbf16>
    %149 = vector.shape_cast %148 : vector<1x96x8xbf16> to vector<96x8xbf16>
    %150 = vector.extract_strided_slice %149 {offsets = [0, 0], sizes = [32, 8], strides = [1, 1]} : vector<96x8xbf16> to vector<32x8xbf16>
    %cst_65 = arith.constant dense<0.000000e+00> : vector<16x8xf32>
    %151 = tpu.matmul %49, %150, %cst_65 {dimension_numbers = #tpu.dot_dimension_numbers<[1], [0], [0], [1], [0, 0, 1, 1], [], []>} : vector<16x32xbf16>, vector<32x8xbf16>, vector<16x8xf32> -> vector<16x8xf32>
    %c21 = arith.constant 21 : index
    %c0_66 = arith.constant 0 : index
    %152 = vector.load %arg7[%c21, %c0_66] : memref<48x128xf32, #tpu.memory_space<vmem>>, vector<1x8xf32>
    %153 = vector.broadcast %152 : vector<1x8xf32> to vector<16x8xf32>
    %154 = arith.addf %151, %153 : vector<16x8xf32>
    %155 = vector.extract_strided_slice %149 {offsets = [32, 0], sizes = [32, 8], strides = [1, 1]} : vector<96x8xbf16> to vector<32x8xbf16>
    %cst_67 = arith.constant dense<0.000000e+00> : vector<16x8xf32>
    %156 = tpu.matmul %49, %155, %cst_67 {dimension_numbers = #tpu.dot_dimension_numbers<[1], [0], [0], [1], [0, 0, 1, 1], [], []>} : vector<16x32xbf16>, vector<32x8xbf16>, vector<16x8xf32> -> vector<16x8xf32>
    %157 = vector.extract_strided_slice %149 {offsets = [64, 0], sizes = [32, 8], strides = [1, 1]} : vector<96x8xbf16> to vector<32x8xbf16>
    %cst_68 = arith.constant dense<0.000000e+00> : vector<16x8xf32>
    %158 = tpu.matmul %49, %157, %cst_68 {dimension_numbers = #tpu.dot_dimension_numbers<[1], [0], [0], [1], [0, 0, 1, 1], [], []>} : vector<16x32xbf16>, vector<32x8xbf16>, vector<16x8xf32> -> vector<16x8xf32>
    %159 = arith.truncf %154 : vector<16x8xf32> to vector<16x8xbf16>
    %160 = arith.truncf %156 : vector<16x8xf32> to vector<16x8xbf16>
    %cst_69 = arith.constant dense<0.000000e+00> : vector<16x16xf32>
    %161 = tpu.matmul %159, %160, %cst_69 {dimension_numbers = #tpu.dot_dimension_numbers<[1], [1], [0], [0], [0, 0, 1, 0], [], []>} : vector<16x8xbf16>, vector<16x8xbf16>, vector<16x16xf32> -> vector<16x16xf32>
    %162 = arith.addf %161, %48 : vector<16x16xf32>
    %cst_70 = arith.constant dense<0xFF800000> : vector<16xf32>
    %163 = vector.multi_reduction <maximumf>, %162, %cst_70 [1] : vector<16x16xf32> to vector<16xf32>
    %164 = vector.shape_cast %163 : vector<16xf32> to vector<16x1xf32>
    %165 = vector.broadcast %164 : vector<16x1xf32> to vector<16x16xf32>
    %166 = arith.subf %162, %165 : vector<16x16xf32>
    %167 = math.exp %166 : vector<16x16xf32>
    %cst_71 = arith.constant dense<0.000000e+00> : vector<16xf32>
    %168 = vector.multi_reduction <add>, %167, %cst_71 [1] : vector<16x16xf32> to vector<16xf32>
    %169 = vector.shape_cast %168 : vector<16xf32> to vector<16x1xf32>
    %170 = tpu.reciprocal %169 {approx = true} : vector<16x1xf32> -> vector<16x1xf32>
    %171 = vector.broadcast %170 : vector<16x1xf32> to vector<16x16xf32>
    %172 = arith.mulf %167, %171 : vector<16x16xf32>
    %173 = arith.truncf %172 : vector<16x16xf32> to vector<16x16xbf16>
    %174 = arith.truncf %158 : vector<16x8xf32> to vector<16x8xbf16>
    %cst_72 = arith.constant dense<0.000000e+00> : vector<16x8xf32>
    %175 = tpu.matmul %173, %174, %cst_72 {dimension_numbers = #tpu.dot_dimension_numbers<[1], [0], [0], [1], [0, 0, 1, 1], [], []>} : vector<16x16xbf16>, vector<16x8xbf16>, vector<16x8xf32> -> vector<16x8xf32>
    %176 = arith.truncf %175 : vector<16x8xf32> to vector<16x8xbf16>
    %c3_73 = arith.constant 3 : index
    %c0_74 = arith.constant 0 : index
    %c0_75 = arith.constant 0 : index
    %177 = vector.load %arg4[%c3_73, %c0_74, %c0_75] : memref<8x8x32xbf16, #tpu.memory_space<vmem>>, vector<1x8x32xbf16>
    %178 = vector.shape_cast %177 : vector<1x8x32xbf16> to vector<8x32xbf16>
    %cst_76 = arith.constant dense<0.000000e+00> : vector<16x32xf32>
    %179 = tpu.matmul %176, %178, %cst_76 {dimension_numbers = #tpu.dot_dimension_numbers<[1], [0], [0], [1], [0, 0, 1, 1], [], []>} : vector<16x8xbf16>, vector<8x32xbf16>, vector<16x32xf32> -> vector<16x32xf32>
    %180 = arith.addf %147, %179 : vector<16x32xf32>
    %c22 = arith.constant 22 : index
    %c0_77 = arith.constant 0 : index
    %181 = vector.load %arg7[%c22, %c0_77] : memref<48x128xf32, #tpu.memory_space<vmem>>, vector<1x32xf32>
    %182 = vector.broadcast %181 : vector<1x32xf32> to vector<16x32xf32>
    %183 = arith.addf %180, %182 : vector<16x32xf32>
    %184 = arith.addf %183, %33 : vector<16x32xf32>
    %c23 = arith.constant 23 : index
    %c0_78 = arith.constant 0 : index
    %185 = vector.load %arg7[%c23, %c0_78] : memref<48x128xf32, #tpu.memory_space<vmem>>, vector<1x32xf32>
    %c24 = arith.constant 24 : index
    %c0_79 = arith.constant 0 : index
    %186 = vector.load %arg7[%c24, %c0_79] : memref<48x128xf32, #tpu.memory_space<vmem>>, vector<1x32xf32>
    %cst_80 = arith.constant dense<0.000000e+00> : vector<16xf32>
    %187 = vector.multi_reduction <add>, %184, %cst_80 [1] : vector<16x32xf32> to vector<16xf32>
    %188 = vector.shape_cast %187 : vector<16xf32> to vector<16x1xf32>
    %cst_81 = arith.constant 3.200000e+01 : f32
    %189 = vector.broadcast %cst_81 : f32 to vector<16x1xf32>
    %190 = arith.divf %188, %189 : vector<16x1xf32>
    %191 = vector.broadcast %190 : vector<16x1xf32> to vector<16x32xf32>
    %192 = arith.subf %184, %191 : vector<16x32xf32>
    %193 = arith.mulf %192, %192 : vector<16x32xf32>
    %cst_82 = arith.constant dense<0.000000e+00> : vector<16xf32>
    %194 = vector.multi_reduction <add>, %193, %cst_82 [1] : vector<16x32xf32> to vector<16xf32>
    %195 = vector.shape_cast %194 : vector<16xf32> to vector<16x1xf32>
    %cst_83 = arith.constant 3.200000e+01 : f32
    %196 = vector.broadcast %cst_83 : f32 to vector<16x1xf32>
    %197 = arith.divf %195, %196 : vector<16x1xf32>
    %cst_84 = arith.constant 9.99999996E-13 : f32
    %198 = vector.broadcast %cst_84 : f32 to vector<16x1xf32>
    %199 = arith.addf %197, %198 : vector<16x1xf32>
    %200 = math.rsqrt %199 : vector<16x1xf32>
    %201 = vector.broadcast %200 : vector<16x1xf32> to vector<16x32xf32>
    %202 = arith.mulf %192, %201 : vector<16x32xf32>
    %203 = vector.broadcast %185 : vector<1x32xf32> to vector<16x32xf32>
    %204 = arith.mulf %202, %203 : vector<16x32xf32>
    %205 = vector.broadcast %186 : vector<1x32xf32> to vector<16x32xf32>
    %206 = arith.addf %204, %205 : vector<16x32xf32>
    %c0_85 = arith.constant 0 : index
    %c0_86 = arith.constant 0 : index
    %c0_87 = arith.constant 0 : index
    %207 = vector.load %arg5[%c0_85, %c0_86, %c0_87] : memref<2x96x64xbf16, #tpu.memory_space<vmem>>, vector<1x96x64xbf16>
    %208 = vector.shape_cast %207 : vector<1x96x64xbf16> to vector<96x64xbf16>
    %209 = arith.truncf %206 : vector<16x32xf32> to vector<16x32xbf16>
    %210 = vector.extract_strided_slice %208 {offsets = [0, 0], sizes = [32, 64], strides = [1, 1]} : vector<96x64xbf16> to vector<32x64xbf16>
    %cst_88 = arith.constant dense<0.000000e+00> : vector<16x64xf32>
    %211 = tpu.matmul %209, %210, %cst_88 {dimension_numbers = #tpu.dot_dimension_numbers<[1], [0], [0], [1], [0, 0, 1, 1], [], []>} : vector<16x32xbf16>, vector<32x64xbf16>, vector<16x64xf32> -> vector<16x64xf32>
    %c25 = arith.constant 25 : index
    %c0_89 = arith.constant 0 : index
    %212 = vector.load %arg7[%c25, %c0_89] : memref<48x128xf32, #tpu.memory_space<vmem>>, vector<1x64xf32>
    %213 = vector.broadcast %212 : vector<1x64xf32> to vector<16x64xf32>
    %214 = arith.addf %211, %213 : vector<16x64xf32>
    %cst_90 = arith.constant 5.000000e-01 : f32
    %215 = vector.broadcast %cst_90 : f32 to vector<16x64xf32>
    %216 = arith.mulf %215, %214 : vector<16x64xf32>
    %cst_91 = arith.constant 4.471500e-02 : f32
    %217 = vector.broadcast %cst_91 : f32 to vector<16x64xf32>
    %218 = arith.mulf %217, %214 : vector<16x64xf32>
    %219 = arith.mulf %218, %214 : vector<16x64xf32>
    %220 = arith.mulf %219, %214 : vector<16x64xf32>
    %221 = arith.addf %214, %220 : vector<16x64xf32>
    %cst_92 = arith.constant 0.797884583 : f32
    %222 = vector.broadcast %cst_92 : f32 to vector<16x64xf32>
    %223 = arith.mulf %222, %221 : vector<16x64xf32>
    %224 = math.tanh %223 : vector<16x64xf32>
    %cst_93 = arith.constant 1.000000e+00 : f32
    %225 = vector.broadcast %cst_93 : f32 to vector<16x64xf32>
    %226 = arith.addf %225, %224 : vector<16x64xf32>
    %227 = arith.mulf %216, %226 : vector<16x64xf32>
    %228 = arith.truncf %227 : vector<16x64xf32> to vector<16x64xbf16>
    %229 = vector.extract_strided_slice %208 {offsets = [32, 0], sizes = [64, 32], strides = [1, 1]} : vector<96x64xbf16> to vector<64x32xbf16>
    %cst_94 = arith.constant dense<0.000000e+00> : vector<16x32xf32>
    %230 = tpu.matmul %228, %229, %cst_94 {dimension_numbers = #tpu.dot_dimension_numbers<[1], [0], [0], [1], [0, 0, 1, 1], [], []>} : vector<16x64xbf16>, vector<64x32xbf16>, vector<16x32xf32> -> vector<16x32xf32>
    %c26 = arith.constant 26 : index
    %c0_95 = arith.constant 0 : index
    %231 = vector.load %arg7[%c26, %c0_95] : memref<48x128xf32, #tpu.memory_space<vmem>>, vector<1x32xf32>
    %232 = vector.broadcast %231 : vector<1x32xf32> to vector<16x32xf32>
    %233 = arith.addf %230, %232 : vector<16x32xf32>
    %234 = arith.addf %233, %206 : vector<16x32xf32>
    %c27 = arith.constant 27 : index
    %c0_96 = arith.constant 0 : index
    %235 = vector.load %arg7[%c27, %c0_96] : memref<48x128xf32, #tpu.memory_space<vmem>>, vector<1x32xf32>
    %c28 = arith.constant 28 : index
    %c0_97 = arith.constant 0 : index
    %236 = vector.load %arg7[%c28, %c0_97] : memref<48x128xf32, #tpu.memory_space<vmem>>, vector<1x32xf32>
    %cst_98 = arith.constant dense<0.000000e+00> : vector<16xf32>
    %237 = vector.multi_reduction <add>, %234, %cst_98 [1] : vector<16x32xf32> to vector<16xf32>
    %238 = vector.shape_cast %237 : vector<16xf32> to vector<16x1xf32>
    %cst_99 = arith.constant 3.200000e+01 : f32
    %239 = vector.broadcast %cst_99 : f32 to vector<16x1xf32>
    %240 = arith.divf %238, %239 : vector<16x1xf32>
    %241 = vector.broadcast %240 : vector<16x1xf32> to vector<16x32xf32>
    %242 = arith.subf %234, %241 : vector<16x32xf32>
    %243 = arith.mulf %242, %242 : vector<16x32xf32>
    %cst_100 = arith.constant dense<0.000000e+00> : vector<16xf32>
    %244 = vector.multi_reduction <add>, %243, %cst_100 [1] : vector<16x32xf32> to vector<16xf32>
    %245 = vector.shape_cast %244 : vector<16xf32> to vector<16x1xf32>
    %cst_101 = arith.constant 3.200000e+01 : f32
    %246 = vector.broadcast %cst_101 : f32 to vector<16x1xf32>
    %247 = arith.divf %245, %246 : vector<16x1xf32>
    %cst_102 = arith.constant 9.99999996E-13 : f32
    %248 = vector.broadcast %cst_102 : f32 to vector<16x1xf32>
    %249 = arith.addf %247, %248 : vector<16x1xf32>
    %250 = math.rsqrt %249 : vector<16x1xf32>
    %251 = vector.broadcast %250 : vector<16x1xf32> to vector<16x32xf32>
    %252 = arith.mulf %242, %251 : vector<16x32xf32>
    %253 = vector.broadcast %235 : vector<1x32xf32> to vector<16x32xf32>
    %254 = arith.mulf %252, %253 : vector<16x32xf32>
    %255 = vector.broadcast %236 : vector<1x32xf32> to vector<16x32xf32>
    %256 = arith.addf %254, %255 : vector<16x32xf32>
    %257 = arith.truncf %256 : vector<16x32xf32> to vector<16x32xbf16>
    %c4 = arith.constant 4 : index
    %c0_103 = arith.constant 0 : index
    %c0_104 = arith.constant 0 : index
    %258 = vector.load %arg3[%c4, %c0_103, %c0_104] : memref<8x96x8xbf16, #tpu.memory_space<vmem>>, vector<1x96x8xbf16>
    %259 = vector.shape_cast %258 : vector<1x96x8xbf16> to vector<96x8xbf16>
    %260 = vector.extract_strided_slice %259 {offsets = [0, 0], sizes = [32, 8], strides = [1, 1]} : vector<96x8xbf16> to vector<32x8xbf16>
    %cst_105 = arith.constant dense<0.000000e+00> : vector<16x8xf32>
    %261 = tpu.matmul %257, %260, %cst_105 {dimension_numbers = #tpu.dot_dimension_numbers<[1], [0], [0], [1], [0, 0, 1, 1], [], []>} : vector<16x32xbf16>, vector<32x8xbf16>, vector<16x8xf32> -> vector<16x8xf32>
    %c29 = arith.constant 29 : index
    %c0_106 = arith.constant 0 : index
    %262 = vector.load %arg7[%c29, %c0_106] : memref<48x128xf32, #tpu.memory_space<vmem>>, vector<1x8xf32>
    %263 = vector.broadcast %262 : vector<1x8xf32> to vector<16x8xf32>
    %264 = arith.addf %261, %263 : vector<16x8xf32>
    %265 = vector.extract_strided_slice %259 {offsets = [32, 0], sizes = [32, 8], strides = [1, 1]} : vector<96x8xbf16> to vector<32x8xbf16>
    %cst_107 = arith.constant dense<0.000000e+00> : vector<16x8xf32>
    %266 = tpu.matmul %257, %265, %cst_107 {dimension_numbers = #tpu.dot_dimension_numbers<[1], [0], [0], [1], [0, 0, 1, 1], [], []>} : vector<16x32xbf16>, vector<32x8xbf16>, vector<16x8xf32> -> vector<16x8xf32>
    %267 = vector.extract_strided_slice %259 {offsets = [64, 0], sizes = [32, 8], strides = [1, 1]} : vector<96x8xbf16> to vector<32x8xbf16>
    %cst_108 = arith.constant dense<0.000000e+00> : vector<16x8xf32>
    %268 = tpu.matmul %257, %267, %cst_108 {dimension_numbers = #tpu.dot_dimension_numbers<[1], [0], [0], [1], [0, 0, 1, 1], [], []>} : vector<16x32xbf16>, vector<32x8xbf16>, vector<16x8xf32> -> vector<16x8xf32>
    %269 = arith.truncf %264 : vector<16x8xf32> to vector<16x8xbf16>
    %270 = arith.truncf %266 : vector<16x8xf32> to vector<16x8xbf16>
    %cst_109 = arith.constant dense<0.000000e+00> : vector<16x16xf32>
    %271 = tpu.matmul %269, %270, %cst_109 {dimension_numbers = #tpu.dot_dimension_numbers<[1], [1], [0], [0], [0, 0, 1, 0], [], []>} : vector<16x8xbf16>, vector<16x8xbf16>, vector<16x16xf32> -> vector<16x16xf32>
    %272 = arith.addf %271, %48 : vector<16x16xf32>
    %cst_110 = arith.constant dense<0xFF800000> : vector<16xf32>
    %273 = vector.multi_reduction <maximumf>, %272, %cst_110 [1] : vector<16x16xf32> to vector<16xf32>
    %274 = vector.shape_cast %273 : vector<16xf32> to vector<16x1xf32>
    %275 = vector.broadcast %274 : vector<16x1xf32> to vector<16x16xf32>
    %276 = arith.subf %272, %275 : vector<16x16xf32>
    %277 = math.exp %276 : vector<16x16xf32>
    %cst_111 = arith.constant dense<0.000000e+00> : vector<16xf32>
    %278 = vector.multi_reduction <add>, %277, %cst_111 [1] : vector<16x16xf32> to vector<16xf32>
    %279 = vector.shape_cast %278 : vector<16xf32> to vector<16x1xf32>
    %280 = tpu.reciprocal %279 {approx = true} : vector<16x1xf32> -> vector<16x1xf32>
    %281 = vector.broadcast %280 : vector<16x1xf32> to vector<16x16xf32>
    %282 = arith.mulf %277, %281 : vector<16x16xf32>
    %283 = arith.truncf %282 : vector<16x16xf32> to vector<16x16xbf16>
    %284 = arith.truncf %268 : vector<16x8xf32> to vector<16x8xbf16>
    %cst_112 = arith.constant dense<0.000000e+00> : vector<16x8xf32>
    %285 = tpu.matmul %283, %284, %cst_112 {dimension_numbers = #tpu.dot_dimension_numbers<[1], [0], [0], [1], [0, 0, 1, 1], [], []>} : vector<16x16xbf16>, vector<16x8xbf16>, vector<16x8xf32> -> vector<16x8xf32>
    %286 = arith.truncf %285 : vector<16x8xf32> to vector<16x8xbf16>
    %c4_113 = arith.constant 4 : index
    %c0_114 = arith.constant 0 : index
    %c0_115 = arith.constant 0 : index
    %287 = vector.load %arg4[%c4_113, %c0_114, %c0_115] : memref<8x8x32xbf16, #tpu.memory_space<vmem>>, vector<1x8x32xbf16>
    %288 = vector.shape_cast %287 : vector<1x8x32xbf16> to vector<8x32xbf16>
    %cst_116 = arith.constant dense<0.000000e+00> : vector<16x32xf32>
    %289 = tpu.matmul %286, %288, %cst_116 {dimension_numbers = #tpu.dot_dimension_numbers<[1], [0], [0], [1], [0, 0, 1, 1], [], []>} : vector<16x8xbf16>, vector<8x32xbf16>, vector<16x32xf32> -> vector<16x32xf32>
    %c5 = arith.constant 5 : index
    %c0_117 = arith.constant 0 : index
    %c0_118 = arith.constant 0 : index
    %290 = vector.load %arg3[%c5, %c0_117, %c0_118] : memref<8x96x8xbf16, #tpu.memory_space<vmem>>, vector<1x96x8xbf16>
    %291 = vector.shape_cast %290 : vector<1x96x8xbf16> to vector<96x8xbf16>
    %292 = vector.extract_strided_slice %291 {offsets = [0, 0], sizes = [32, 8], strides = [1, 1]} : vector<96x8xbf16> to vector<32x8xbf16>
    %cst_119 = arith.constant dense<0.000000e+00> : vector<16x8xf32>
    %293 = tpu.matmul %257, %292, %cst_119 {dimension_numbers = #tpu.dot_dimension_numbers<[1], [0], [0], [1], [0, 0, 1, 1], [], []>} : vector<16x32xbf16>, vector<32x8xbf16>, vector<16x8xf32> -> vector<16x8xf32>
    %c30 = arith.constant 30 : index
    %c0_120 = arith.constant 0 : index
    %294 = vector.load %arg7[%c30, %c0_120] : memref<48x128xf32, #tpu.memory_space<vmem>>, vector<1x8xf32>
    %295 = vector.broadcast %294 : vector<1x8xf32> to vector<16x8xf32>
    %296 = arith.addf %293, %295 : vector<16x8xf32>
    %297 = vector.extract_strided_slice %291 {offsets = [32, 0], sizes = [32, 8], strides = [1, 1]} : vector<96x8xbf16> to vector<32x8xbf16>
    %cst_121 = arith.constant dense<0.000000e+00> : vector<16x8xf32>
    %298 = tpu.matmul %257, %297, %cst_121 {dimension_numbers = #tpu.dot_dimension_numbers<[1], [0], [0], [1], [0, 0, 1, 1], [], []>} : vector<16x32xbf16>, vector<32x8xbf16>, vector<16x8xf32> -> vector<16x8xf32>
    %299 = vector.extract_strided_slice %291 {offsets = [64, 0], sizes = [32, 8], strides = [1, 1]} : vector<96x8xbf16> to vector<32x8xbf16>
    %cst_122 = arith.constant dense<0.000000e+00> : vector<16x8xf32>
    %300 = tpu.matmul %257, %299, %cst_122 {dimension_numbers = #tpu.dot_dimension_numbers<[1], [0], [0], [1], [0, 0, 1, 1], [], []>} : vector<16x32xbf16>, vector<32x8xbf16>, vector<16x8xf32> -> vector<16x8xf32>
    %301 = arith.truncf %296 : vector<16x8xf32> to vector<16x8xbf16>
    %302 = arith.truncf %298 : vector<16x8xf32> to vector<16x8xbf16>
    %cst_123 = arith.constant dense<0.000000e+00> : vector<16x16xf32>
    %303 = tpu.matmul %301, %302, %cst_123 {dimension_numbers = #tpu.dot_dimension_numbers<[1], [1], [0], [0], [0, 0, 1, 0], [], []>} : vector<16x8xbf16>, vector<16x8xbf16>, vector<16x16xf32> -> vector<16x16xf32>
    %304 = arith.addf %303, %48 : vector<16x16xf32>
    %cst_124 = arith.constant dense<0xFF800000> : vector<16xf32>
    %305 = vector.multi_reduction <maximumf>, %304, %cst_124 [1] : vector<16x16xf32> to vector<16xf32>
    %306 = vector.shape_cast %305 : vector<16xf32> to vector<16x1xf32>
    %307 = vector.broadcast %306 : vector<16x1xf32> to vector<16x16xf32>
    %308 = arith.subf %304, %307 : vector<16x16xf32>
    %309 = math.exp %308 : vector<16x16xf32>
    %cst_125 = arith.constant dense<0.000000e+00> : vector<16xf32>
    %310 = vector.multi_reduction <add>, %309, %cst_125 [1] : vector<16x16xf32> to vector<16xf32>
    %311 = vector.shape_cast %310 : vector<16xf32> to vector<16x1xf32>
    %312 = tpu.reciprocal %311 {approx = true} : vector<16x1xf32> -> vector<16x1xf32>
    %313 = vector.broadcast %312 : vector<16x1xf32> to vector<16x16xf32>
    %314 = arith.mulf %309, %313 : vector<16x16xf32>
    %315 = arith.truncf %314 : vector<16x16xf32> to vector<16x16xbf16>
    %316 = arith.truncf %300 : vector<16x8xf32> to vector<16x8xbf16>
    %cst_126 = arith.constant dense<0.000000e+00> : vector<16x8xf32>
    %317 = tpu.matmul %315, %316, %cst_126 {dimension_numbers = #tpu.dot_dimension_numbers<[1], [0], [0], [1], [0, 0, 1, 1], [], []>} : vector<16x16xbf16>, vector<16x8xbf16>, vector<16x8xf32> -> vector<16x8xf32>
    %318 = arith.truncf %317 : vector<16x8xf32> to vector<16x8xbf16>
    %c5_127 = arith.constant 5 : index
    %c0_128 = arith.constant 0 : index
    %c0_129 = arith.constant 0 : index
    %319 = vector.load %arg4[%c5_127, %c0_128, %c0_129] : memref<8x8x32xbf16, #tpu.memory_space<vmem>>, vector<1x8x32xbf16>
    %320 = vector.shape_cast %319 : vector<1x8x32xbf16> to vector<8x32xbf16>
    %cst_130 = arith.constant dense<0.000000e+00> : vector<16x32xf32>
    %321 = tpu.matmul %318, %320, %cst_130 {dimension_numbers = #tpu.dot_dimension_numbers<[1], [0], [0], [1], [0, 0, 1, 1], [], []>} : vector<16x8xbf16>, vector<8x32xbf16>, vector<16x32xf32> -> vector<16x32xf32>
    %322 = arith.addf %289, %321 : vector<16x32xf32>
    %c6 = arith.constant 6 : index
    %c0_131 = arith.constant 0 : index
    %c0_132 = arith.constant 0 : index
    %323 = vector.load %arg3[%c6, %c0_131, %c0_132] : memref<8x96x8xbf16, #tpu.memory_space<vmem>>, vector<1x96x8xbf16>
    %324 = vector.shape_cast %323 : vector<1x96x8xbf16> to vector<96x8xbf16>
    %325 = vector.extract_strided_slice %324 {offsets = [0, 0], sizes = [32, 8], strides = [1, 1]} : vector<96x8xbf16> to vector<32x8xbf16>
    %cst_133 = arith.constant dense<0.000000e+00> : vector<16x8xf32>
    %326 = tpu.matmul %257, %325, %cst_133 {dimension_numbers = #tpu.dot_dimension_numbers<[1], [0], [0], [1], [0, 0, 1, 1], [], []>} : vector<16x32xbf16>, vector<32x8xbf16>, vector<16x8xf32> -> vector<16x8xf32>
    %c31 = arith.constant 31 : index
    %c0_134 = arith.constant 0 : index
    %327 = vector.load %arg7[%c31, %c0_134] : memref<48x128xf32, #tpu.memory_space<vmem>>, vector<1x8xf32>
    %328 = vector.broadcast %327 : vector<1x8xf32> to vector<16x8xf32>
    %329 = arith.addf %326, %328 : vector<16x8xf32>
    %330 = vector.extract_strided_slice %324 {offsets = [32, 0], sizes = [32, 8], strides = [1, 1]} : vector<96x8xbf16> to vector<32x8xbf16>
    %cst_135 = arith.constant dense<0.000000e+00> : vector<16x8xf32>
    %331 = tpu.matmul %257, %330, %cst_135 {dimension_numbers = #tpu.dot_dimension_numbers<[1], [0], [0], [1], [0, 0, 1, 1], [], []>} : vector<16x32xbf16>, vector<32x8xbf16>, vector<16x8xf32> -> vector<16x8xf32>
    %332 = vector.extract_strided_slice %324 {offsets = [64, 0], sizes = [32, 8], strides = [1, 1]} : vector<96x8xbf16> to vector<32x8xbf16>
    %cst_136 = arith.constant dense<0.000000e+00> : vector<16x8xf32>
    %333 = tpu.matmul %257, %332, %cst_136 {dimension_numbers = #tpu.dot_dimension_numbers<[1], [0], [0], [1], [0, 0, 1, 1], [], []>} : vector<16x32xbf16>, vector<32x8xbf16>, vector<16x8xf32> -> vector<16x8xf32>
    %334 = arith.truncf %329 : vector<16x8xf32> to vector<16x8xbf16>
    %335 = arith.truncf %331 : vector<16x8xf32> to vector<16x8xbf16>
    %cst_137 = arith.constant dense<0.000000e+00> : vector<16x16xf32>
    %336 = tpu.matmul %334, %335, %cst_137 {dimension_numbers = #tpu.dot_dimension_numbers<[1], [1], [0], [0], [0, 0, 1, 0], [], []>} : vector<16x8xbf16>, vector<16x8xbf16>, vector<16x16xf32> -> vector<16x16xf32>
    %337 = arith.addf %336, %48 : vector<16x16xf32>
    %cst_138 = arith.constant dense<0xFF800000> : vector<16xf32>
    %338 = vector.multi_reduction <maximumf>, %337, %cst_138 [1] : vector<16x16xf32> to vector<16xf32>
    %339 = vector.shape_cast %338 : vector<16xf32> to vector<16x1xf32>
    %340 = vector.broadcast %339 : vector<16x1xf32> to vector<16x16xf32>
    %341 = arith.subf %337, %340 : vector<16x16xf32>
    %342 = math.exp %341 : vector<16x16xf32>
    %cst_139 = arith.constant dense<0.000000e+00> : vector<16xf32>
    %343 = vector.multi_reduction <add>, %342, %cst_139 [1] : vector<16x16xf32> to vector<16xf32>
    %344 = vector.shape_cast %343 : vector<16xf32> to vector<16x1xf32>
    %345 = tpu.reciprocal %344 {approx = true} : vector<16x1xf32> -> vector<16x1xf32>
    %346 = vector.broadcast %345 : vector<16x1xf32> to vector<16x16xf32>
    %347 = arith.mulf %342, %346 : vector<16x16xf32>
    %348 = arith.truncf %347 : vector<16x16xf32> to vector<16x16xbf16>
    %349 = arith.truncf %333 : vector<16x8xf32> to vector<16x8xbf16>
    %cst_140 = arith.constant dense<0.000000e+00> : vector<16x8xf32>
    %350 = tpu.matmul %348, %349, %cst_140 {dimension_numbers = #tpu.dot_dimension_numbers<[1], [0], [0], [1], [0, 0, 1, 1], [], []>} : vector<16x16xbf16>, vector<16x8xbf16>, vector<16x8xf32> -> vector<16x8xf32>
    %351 = arith.truncf %350 : vector<16x8xf32> to vector<16x8xbf16>
    %c6_141 = arith.constant 6 : index
    %c0_142 = arith.constant 0 : index
    %c0_143 = arith.constant 0 : index
    %352 = vector.load %arg4[%c6_141, %c0_142, %c0_143] : memref<8x8x32xbf16, #tpu.memory_space<vmem>>, vector<1x8x32xbf16>
    %353 = vector.shape_cast %352 : vector<1x8x32xbf16> to vector<8x32xbf16>
    %cst_144 = arith.constant dense<0.000000e+00> : vector<16x32xf32>
    %354 = tpu.matmul %351, %353, %cst_144 {dimension_numbers = #tpu.dot_dimension_numbers<[1], [0], [0], [1], [0, 0, 1, 1], [], []>} : vector<16x8xbf16>, vector<8x32xbf16>, vector<16x32xf32> -> vector<16x32xf32>
    %355 = arith.addf %322, %354 : vector<16x32xf32>
    %c7 = arith.constant 7 : index
    %c0_145 = arith.constant 0 : index
    %c0_146 = arith.constant 0 : index
    %356 = vector.load %arg3[%c7, %c0_145, %c0_146] : memref<8x96x8xbf16, #tpu.memory_space<vmem>>, vector<1x96x8xbf16>
    %357 = vector.shape_cast %356 : vector<1x96x8xbf16> to vector<96x8xbf16>
    %358 = vector.extract_strided_slice %357 {offsets = [0, 0], sizes = [32, 8], strides = [1, 1]} : vector<96x8xbf16> to vector<32x8xbf16>
    %cst_147 = arith.constant dense<0.000000e+00> : vector<16x8xf32>
    %359 = tpu.matmul %257, %358, %cst_147 {dimension_numbers = #tpu.dot_dimension_numbers<[1], [0], [0], [1], [0, 0, 1, 1], [], []>} : vector<16x32xbf16>, vector<32x8xbf16>, vector<16x8xf32> -> vector<16x8xf32>
    %c32 = arith.constant 32 : index
    %c0_148 = arith.constant 0 : index
    %360 = vector.load %arg7[%c32, %c0_148] : memref<48x128xf32, #tpu.memory_space<vmem>>, vector<1x8xf32>
    %361 = vector.broadcast %360 : vector<1x8xf32> to vector<16x8xf32>
    %362 = arith.addf %359, %361 : vector<16x8xf32>
    %363 = vector.extract_strided_slice %357 {offsets = [32, 0], sizes = [32, 8], strides = [1, 1]} : vector<96x8xbf16> to vector<32x8xbf16>
    %cst_149 = arith.constant dense<0.000000e+00> : vector<16x8xf32>
    %364 = tpu.matmul %257, %363, %cst_149 {dimension_numbers = #tpu.dot_dimension_numbers<[1], [0], [0], [1], [0, 0, 1, 1], [], []>} : vector<16x32xbf16>, vector<32x8xbf16>, vector<16x8xf32> -> vector<16x8xf32>
    %365 = vector.extract_strided_slice %357 {offsets = [64, 0], sizes = [32, 8], strides = [1, 1]} : vector<96x8xbf16> to vector<32x8xbf16>
    %cst_150 = arith.constant dense<0.000000e+00> : vector<16x8xf32>
    %366 = tpu.matmul %257, %365, %cst_150 {dimension_numbers = #tpu.dot_dimension_numbers<[1], [0], [0], [1], [0, 0, 1, 1], [], []>} : vector<16x32xbf16>, vector<32x8xbf16>, vector<16x8xf32> -> vector<16x8xf32>
    %367 = arith.truncf %362 : vector<16x8xf32> to vector<16x8xbf16>
    %368 = arith.truncf %364 : vector<16x8xf32> to vector<16x8xbf16>
    %cst_151 = arith.constant dense<0.000000e+00> : vector<16x16xf32>
    %369 = tpu.matmul %367, %368, %cst_151 {dimension_numbers = #tpu.dot_dimension_numbers<[1], [1], [0], [0], [0, 0, 1, 0], [], []>} : vector<16x8xbf16>, vector<16x8xbf16>, vector<16x16xf32> -> vector<16x16xf32>
    %370 = arith.addf %369, %48 : vector<16x16xf32>
    %cst_152 = arith.constant dense<0xFF800000> : vector<16xf32>
    %371 = vector.multi_reduction <maximumf>, %370, %cst_152 [1] : vector<16x16xf32> to vector<16xf32>
    %372 = vector.shape_cast %371 : vector<16xf32> to vector<16x1xf32>
    %373 = vector.broadcast %372 : vector<16x1xf32> to vector<16x16xf32>
    %374 = arith.subf %370, %373 : vector<16x16xf32>
    %375 = math.exp %374 : vector<16x16xf32>
    %cst_153 = arith.constant dense<0.000000e+00> : vector<16xf32>
    %376 = vector.multi_reduction <add>, %375, %cst_153 [1] : vector<16x16xf32> to vector<16xf32>
    %377 = vector.shape_cast %376 : vector<16xf32> to vector<16x1xf32>
    %378 = tpu.reciprocal %377 {approx = true} : vector<16x1xf32> -> vector<16x1xf32>
    %379 = vector.broadcast %378 : vector<16x1xf32> to vector<16x16xf32>
    %380 = arith.mulf %375, %379 : vector<16x16xf32>
    %381 = arith.truncf %380 : vector<16x16xf32> to vector<16x16xbf16>
    %382 = arith.truncf %366 : vector<16x8xf32> to vector<16x8xbf16>
    %cst_154 = arith.constant dense<0.000000e+00> : vector<16x8xf32>
    %383 = tpu.matmul %381, %382, %cst_154 {dimension_numbers = #tpu.dot_dimension_numbers<[1], [0], [0], [1], [0, 0, 1, 1], [], []>} : vector<16x16xbf16>, vector<16x8xbf16>, vector<16x8xf32> -> vector<16x8xf32>
    %384 = arith.truncf %383 : vector<16x8xf32> to vector<16x8xbf16>
    %c7_155 = arith.constant 7 : index
    %c0_156 = arith.constant 0 : index
    %c0_157 = arith.constant 0 : index
    %385 = vector.load %arg4[%c7_155, %c0_156, %c0_157] : memref<8x8x32xbf16, #tpu.memory_space<vmem>>, vector<1x8x32xbf16>
    %386 = vector.shape_cast %385 : vector<1x8x32xbf16> to vector<8x32xbf16>
    %cst_158 = arith.constant dense<0.000000e+00> : vector<16x32xf32>
    %387 = tpu.matmul %384, %386, %cst_158 {dimension_numbers = #tpu.dot_dimension_numbers<[1], [0], [0], [1], [0, 0, 1, 1], [], []>} : vector<16x8xbf16>, vector<8x32xbf16>, vector<16x32xf32> -> vector<16x32xf32>
    %388 = arith.addf %355, %387 : vector<16x32xf32>
    %c33 = arith.constant 33 : index
    %c0_159 = arith.constant 0 : index
    %389 = vector.load %arg7[%c33, %c0_159] : memref<48x128xf32, #tpu.memory_space<vmem>>, vector<1x32xf32>
    %390 = vector.broadcast %389 : vector<1x32xf32> to vector<16x32xf32>
    %391 = arith.addf %388, %390 : vector<16x32xf32>
    %392 = arith.addf %391, %256 : vector<16x32xf32>
    %c34 = arith.constant 34 : index
    %c0_160 = arith.constant 0 : index
    %393 = vector.load %arg7[%c34, %c0_160] : memref<48x128xf32, #tpu.memory_space<vmem>>, vector<1x32xf32>
    %c35 = arith.constant 35 : index
    %c0_161 = arith.constant 0 : index
    %394 = vector.load %arg7[%c35, %c0_161] : memref<48x128xf32, #tpu.memory_space<vmem>>, vector<1x32xf32>
    %cst_162 = arith.constant dense<0.000000e+00> : vector<16xf32>
    %395 = vector.multi_reduction <add>, %392, %cst_162 [1] : vector<16x32xf32> to vector<16xf32>
    %396 = vector.shape_cast %395 : vector<16xf32> to vector<16x1xf32>
    %cst_163 = arith.constant 3.200000e+01 : f32
    %397 = vector.broadcast %cst_163 : f32 to vector<16x1xf32>
    %398 = arith.divf %396, %397 : vector<16x1xf32>
    %399 = vector.broadcast %398 : vector<16x1xf32> to vector<16x32xf32>
    %400 = arith.subf %392, %399 : vector<16x32xf32>
    %401 = arith.mulf %400, %400 : vector<16x32xf32>
    %cst_164 = arith.constant dense<0.000000e+00> : vector<16xf32>
    %402 = vector.multi_reduction <add>, %401, %cst_164 [1] : vector<16x32xf32> to vector<16xf32>
    %403 = vector.shape_cast %402 : vector<16xf32> to vector<16x1xf32>
    %cst_165 = arith.constant 3.200000e+01 : f32
    %404 = vector.broadcast %cst_165 : f32 to vector<16x1xf32>
    %405 = arith.divf %403, %404 : vector<16x1xf32>
    %cst_166 = arith.constant 9.99999996E-13 : f32
    %406 = vector.broadcast %cst_166 : f32 to vector<16x1xf32>
    %407 = arith.addf %405, %406 : vector<16x1xf32>
    %408 = math.rsqrt %407 : vector<16x1xf32>
    %409 = vector.broadcast %408 : vector<16x1xf32> to vector<16x32xf32>
    %410 = arith.mulf %400, %409 : vector<16x32xf32>
    %411 = vector.broadcast %393 : vector<1x32xf32> to vector<16x32xf32>
    %412 = arith.mulf %410, %411 : vector<16x32xf32>
    %413 = vector.broadcast %394 : vector<1x32xf32> to vector<16x32xf32>
    %414 = arith.addf %412, %413 : vector<16x32xf32>
    %c1_167 = arith.constant 1 : index
    %c0_168 = arith.constant 0 : index
    %c0_169 = arith.constant 0 : index
    %415 = vector.load %arg5[%c1_167, %c0_168, %c0_169] : memref<2x96x64xbf16, #tpu.memory_space<vmem>>, vector<1x96x64xbf16>
    %416 = vector.shape_cast %415 : vector<1x96x64xbf16> to vector<96x64xbf16>
    %417 = arith.truncf %414 : vector<16x32xf32> to vector<16x32xbf16>
    %418 = vector.extract_strided_slice %416 {offsets = [0, 0], sizes = [32, 64], strides = [1, 1]} : vector<96x64xbf16> to vector<32x64xbf16>
    %cst_170 = arith.constant dense<0.000000e+00> : vector<16x64xf32>
    %419 = tpu.matmul %417, %418, %cst_170 {dimension_numbers = #tpu.dot_dimension_numbers<[1], [0], [0], [1], [0, 0, 1, 1], [], []>} : vector<16x32xbf16>, vector<32x64xbf16>, vector<16x64xf32> -> vector<16x64xf32>
    %c36 = arith.constant 36 : index
    %c0_171 = arith.constant 0 : index
    %420 = vector.load %arg7[%c36, %c0_171] : memref<48x128xf32, #tpu.memory_space<vmem>>, vector<1x64xf32>
    %421 = vector.broadcast %420 : vector<1x64xf32> to vector<16x64xf32>
    %422 = arith.addf %419, %421 : vector<16x64xf32>
    %cst_172 = arith.constant 5.000000e-01 : f32
    %423 = vector.broadcast %cst_172 : f32 to vector<16x64xf32>
    %424 = arith.mulf %423, %422 : vector<16x64xf32>
    %cst_173 = arith.constant 4.471500e-02 : f32
    %425 = vector.broadcast %cst_173 : f32 to vector<16x64xf32>
    %426 = arith.mulf %425, %422 : vector<16x64xf32>
    %427 = arith.mulf %426, %422 : vector<16x64xf32>
    %428 = arith.mulf %427, %422 : vector<16x64xf32>
    %429 = arith.addf %422, %428 : vector<16x64xf32>
    %cst_174 = arith.constant 0.797884583 : f32
    %430 = vector.broadcast %cst_174 : f32 to vector<16x64xf32>
    %431 = arith.mulf %430, %429 : vector<16x64xf32>
    %432 = math.tanh %431 : vector<16x64xf32>
    %cst_175 = arith.constant 1.000000e+00 : f32
    %433 = vector.broadcast %cst_175 : f32 to vector<16x64xf32>
    %434 = arith.addf %433, %432 : vector<16x64xf32>
    %435 = arith.mulf %424, %434 : vector<16x64xf32>
    %436 = arith.truncf %435 : vector<16x64xf32> to vector<16x64xbf16>
    %437 = vector.extract_strided_slice %416 {offsets = [32, 0], sizes = [64, 32], strides = [1, 1]} : vector<96x64xbf16> to vector<64x32xbf16>
    %cst_176 = arith.constant dense<0.000000e+00> : vector<16x32xf32>
    %438 = tpu.matmul %436, %437, %cst_176 {dimension_numbers = #tpu.dot_dimension_numbers<[1], [0], [0], [1], [0, 0, 1, 1], [], []>} : vector<16x64xbf16>, vector<64x32xbf16>, vector<16x32xf32> -> vector<16x32xf32>
    %c37 = arith.constant 37 : index
    %c0_177 = arith.constant 0 : index
    %439 = vector.load %arg7[%c37, %c0_177] : memref<48x128xf32, #tpu.memory_space<vmem>>, vector<1x32xf32>
    %440 = vector.broadcast %439 : vector<1x32xf32> to vector<16x32xf32>
    %441 = arith.addf %438, %440 : vector<16x32xf32>
    %442 = arith.addf %441, %414 : vector<16x32xf32>
    %c38 = arith.constant 38 : index
    %c0_178 = arith.constant 0 : index
    %443 = vector.load %arg7[%c38, %c0_178] : memref<48x128xf32, #tpu.memory_space<vmem>>, vector<1x32xf32>
    %c39 = arith.constant 39 : index
    %c0_179 = arith.constant 0 : index
    %444 = vector.load %arg7[%c39, %c0_179] : memref<48x128xf32, #tpu.memory_space<vmem>>, vector<1x32xf32>
    %cst_180 = arith.constant dense<0.000000e+00> : vector<16xf32>
    %445 = vector.multi_reduction <add>, %442, %cst_180 [1] : vector<16x32xf32> to vector<16xf32>
    %446 = vector.shape_cast %445 : vector<16xf32> to vector<16x1xf32>
    %cst_181 = arith.constant 3.200000e+01 : f32
    %447 = vector.broadcast %cst_181 : f32 to vector<16x1xf32>
    %448 = arith.divf %446, %447 : vector<16x1xf32>
    %449 = vector.broadcast %448 : vector<16x1xf32> to vector<16x32xf32>
    %450 = arith.subf %442, %449 : vector<16x32xf32>
    %451 = arith.mulf %450, %450 : vector<16x32xf32>
    %cst_182 = arith.constant dense<0.000000e+00> : vector<16xf32>
    %452 = vector.multi_reduction <add>, %451, %cst_182 [1] : vector<16x32xf32> to vector<16xf32>
    %453 = vector.shape_cast %452 : vector<16xf32> to vector<16x1xf32>
    %cst_183 = arith.constant 3.200000e+01 : f32
    %454 = vector.broadcast %cst_183 : f32 to vector<16x1xf32>
    %455 = arith.divf %453, %454 : vector<16x1xf32>
    %cst_184 = arith.constant 9.99999996E-13 : f32
    %456 = vector.broadcast %cst_184 : f32 to vector<16x1xf32>
    %457 = arith.addf %455, %456 : vector<16x1xf32>
    %458 = math.rsqrt %457 : vector<16x1xf32>
    %459 = vector.broadcast %458 : vector<16x1xf32> to vector<16x32xf32>
    %460 = arith.mulf %450, %459 : vector<16x32xf32>
    %461 = vector.broadcast %443 : vector<1x32xf32> to vector<16x32xf32>
    %462 = arith.mulf %460, %461 : vector<16x32xf32>
    %463 = vector.broadcast %444 : vector<1x32xf32> to vector<16x32xf32>
    %464 = arith.addf %462, %463 : vector<16x32xf32>
    %465 = vector.extract_strided_slice %464 {offsets = [0, 0], sizes = [1, 32], strides = [1, 1]} : vector<16x32xf32> to vector<1x32xf32>
    %466 = vector.extract_strided_slice %464 {offsets = [8, 0], sizes = [1, 32], strides = [1, 1]} : vector<16x32xf32> to vector<1x32xf32>
    %467 = tpu.concatenate %465, %466 in 0 : vector<1x32xf32>, vector<1x32xf32> -> vector<2x32xf32>
    %c0_185 = arith.constant 0 : index
    %c0_186 = arith.constant 0 : index
    %468 = vector.load %arg6[%c0_185, %c0_186] : memref<64x32xbf16, #tpu.memory_space<vmem>>, vector<64x32xbf16>
    %469 = arith.truncf %467 : vector<2x32xf32> to vector<2x32xbf16>
    %470 = vector.extract_strided_slice %468 {offsets = [0, 0], sizes = [32, 32], strides = [1, 1]} : vector<64x32xbf16> to vector<32x32xbf16>
    %cst_187 = arith.constant dense<0.000000e+00> : vector<2x32xf32>
    %471 = tpu.matmul %469, %470, %cst_187 {dimension_numbers = #tpu.dot_dimension_numbers<[1], [0], [0], [1], [0, 0, 1, 1], [], []>} : vector<2x32xbf16>, vector<32x32xbf16>, vector<2x32xf32> -> vector<2x32xf32>
    %c40 = arith.constant 40 : index
    %c0_188 = arith.constant 0 : index
    %472 = vector.load %arg7[%c40, %c0_188] : memref<48x128xf32, #tpu.memory_space<vmem>>, vector<1x32xf32>
    %473 = vector.broadcast %472 : vector<1x32xf32> to vector<2x32xf32>
    %474 = arith.addf %471, %473 : vector<2x32xf32>
    %475 = math.tanh %474 : vector<2x32xf32>
    %476 = arith.truncf %475 : vector<2x32xf32> to vector<2x32xbf16>
    %477 = vector.extract_strided_slice %468 {offsets = [32, 0], sizes = [32, 32], strides = [1, 1]} : vector<64x32xbf16> to vector<32x32xbf16>
    %cst_189 = arith.constant dense<0.000000e+00> : vector<2x32xf32>
    %478 = tpu.matmul %476, %477, %cst_189 {dimension_numbers = #tpu.dot_dimension_numbers<[1], [0], [0], [1], [0, 0, 1, 1], [], []>} : vector<2x32xbf16>, vector<32x32xbf16>, vector<2x32xf32> -> vector<2x32xf32>
    %479 = vector.extract_strided_slice %478 {offsets = [0, 0], sizes = [2, 4], strides = [1, 1]} : vector<2x32xf32> to vector<2x4xf32>
    %c41 = arith.constant 41 : index
    %c0_190 = arith.constant 0 : index
    %480 = vector.load %arg7[%c41, %c0_190] : memref<48x128xf32, #tpu.memory_space<vmem>>, vector<1x4xf32>
    %481 = vector.broadcast %480 : vector<1x4xf32> to vector<2x4xf32>
    %482 = arith.addf %479, %481 : vector<2x4xf32>
    %c0_191 = arith.constant 0 : index
    %c0_192 = arith.constant 0 : index
    %483 = vector.load %arg8[%c0_191, %c0_192] : memref<2x4xf32, #tpu.memory_space<vmem>>, vector<2x4xf32>
    tpu.vector_store %arg8[%c0_191, %c0_192], %482 {strides = array<i32>} : memref<2x4xf32, #tpu.memory_space<vmem>>, vector<2x4xf32>,
    return
  }
}

</mosaic_0001>

<llo_original>
// kernel: bert_for_lcr_forward.1
$region0: #{bert_for_lcr_forward.1}
  #allocation0 [shape = 'u32[]', space=smem, size = 0x4, offset = 0x4, fixed_abs, tag = 'smem constant byte address 0x4 - core index']
  #allocation1 [shape = 'u32[144,128]{1,0:T(1,128)}', space=vmem, size = 0x12000, scoped, tag = 'internal scratch']
  %s0 = inlined_call_operand.vmem [shape: s32[16,1], index: 0, kind: input, shape index: {}]
  %s1 = inlined_call_operand.vmem [shape: f32[1,16], index: 1, kind: input, shape index: {}]
  %s2 = inlined_call_operand.hbm [shape: bf16[100,32], index: 2, kind: input, shape index: {}]
  %s3 = inlined_call_operand.hbm [shape: bf16[8,96,8], index: 3, kind: input, shape index: {}]
  %s4 = inlined_call_operand.hbm [shape: bf16[8,8,32], index: 4, kind: input, shape index: {}]
  %s5 = inlined_call_operand.hbm [shape: bf16[2,96,64], index: 5, kind: input, shape index: {}]
  %s6 = inlined_call_operand.hbm [shape: bf16[64,32], index: 6, kind: input, shape index: {}]
  %s7 = inlined_call_operand.vmem [shape: f32[48,128], index: 7, kind: input, shape index: {}]
  %s8 = inlined_call_operand.hbm [shape: f32[2,4], index: 8, kind: output, shape index: {}]
  %s9 = sld [smem:[#allocation0]]
  $region62: #{bert_for_lcr_forward.1} parent=0
    _
  %s11 = ssub.s32 1, %s9
  %s12 = scalar_select 0, %s11, %s9
  $region1: #{bert_for_lcr_forward.1} parent=0
    #allocation2 [shape = 'u8[26624]{0}', space=vmem, size = 0x6800, scoped, tag = 'input window, operand 2, single buffered']
    #allocation3 [shape = 's32[1]{0}', space=sflag, size = 0x4, scoped, tag = 'scoped memory for bert_for_lcr_forward.1']
    #allocation4 [shape = 's32[1]{0}', space=sflag, size = 0x4, scoped, tag = 'scoped memory for bert_for_lcr_forward.1']
    #allocation5 [shape = 'u8[196608]{0}', space=vmem, size = 0x30000, scoped, tag = 'input window, operand 3, single buffered']
    #allocation6 [shape = 's32[1]{0}', space=sflag, size = 0x4, scoped, tag = 'scoped memory for bert_for_lcr_forward.1']
    #allocation7 [shape = 'u8[16384]{0}', space=vmem, size = 0x4000, scoped, tag = 'input window, operand 4, single buffered']
    #allocation8 [shape = 'u8[49152]{0}', space=vmem, size = 0xc000, scoped, tag = 'input window, operand 5, single buffered']
    #allocation9 [shape = 's32[1]{0}', space=sflag, size = 0x4, scoped, tag = 'scoped memory for bert_for_lcr_forward.1']
    #allocation10 [shape = 'u8[16384]{0}', space=vmem, size = 0x4000, scoped, tag = 'input window, operand 6, single buffered']
    #allocation11 [shape = 'u8[1024]{0}', space=vmem, size = 0x400, scoped, tag = 'output window, operand 0, single buffered']
    %13 = vsyncpa [#allocation3], 0
    %14 = vsyncpa [#allocation6], 0
    %15 = vsyncpa [#allocation9], 0
    %16 = vsyncpa [#allocation4], 0
    // Predicated region
    $region2: #{bert_for_lcr_forward.1} parent=1 // pred_check
      _
    $region3: #{bert_for_lcr_forward.1} parent=1 // pred_check_branch
      %18 = sbr.rel (0) target = $region5
    $region4: #{bert_for_lcr_forward.1} parent=1 // pred_region
      _
    $region5: #{bert_for_lcr_forward.1} parent=1 // pred_fallthru
      _
    // Predicated region
    $region6: #{bert_for_lcr_forward.1} parent=1 // pred_check
      _
    $region7: #{bert_for_lcr_forward.1} parent=1 // pred_check_branch
      %20 = sbr.rel (0) target = $region9
    $region8: #{bert_for_lcr_forward.1} parent=1 // pred_region
      _
    $region9: #{bert_for_lcr_forward.1} parent=1 // pred_fallthru
      _
    // Predicated region
    $region10: #{bert_for_lcr_forward.1} parent=1 // pred_check
      _
    $region11: #{bert_for_lcr_forward.1} parent=1 // pred_check_branch
      %22 = sbr.rel (0) target = $region13
    $region12: #{bert_for_lcr_forward.1} parent=1 // pred_region
      %s24 = ssub.s32 832, 832
      %25 = vsyncadd [#allocation3], %s24
      %s26 = sshll.u32 [#allocation2], 4
      %s27 = int_to_ptr.vmem [resolvable:$true] %s26
      %32 = dma.hbm_to_vmem [thread:$0]  %s2, 832, %s27, [#allocation3], 64, 64, 4
    $region13: #{bert_for_lcr_forward.1} parent=1 // pred_fallthru
      _
    // Predicated region
    $region14: #{bert_for_lcr_forward.1} parent=1 // pred_check
      _
    $region15: #{bert_for_lcr_forward.1} parent=1 // pred_check_branch
      %34 = sbr.rel (0) target = $region17
    $region16: #{bert_for_lcr_forward.1} parent=1 // pred_region
      %s36 = ssub.s32 6144, 6144
      %37 = vsyncadd [#allocation6], %s36
      %s38 = sshll.u32 [#allocation5], 4
      %s39 = int_to_ptr.vmem [resolvable:$true] %s38
      %44 = dma.hbm_to_vmem [thread:$0]  %s3, 6144, %s39, [#allocation6], 64, 64, 4
    $region17: #{bert_for_lcr_forward.1} parent=1 // pred_fallthru
      _
    // Predicated region
    $region18: #{bert_for_lcr_forward.1} parent=1 // pred_check
      _
    $region19: #{bert_for_lcr_forward.1} parent=1 // pred_check_branch
      %46 = sbr.rel (0) target = $region21
    $region20: #{bert_for_lcr_forward.1} parent=1 // pred_region
      %s48 = ssub.s32 512, 512
      %49 = vsyncadd [#allocation6], %s48
      %s50 = sshll.u32 [#allocation7], 4
      %s51 = int_to_ptr.vmem [resolvable:$true] %s50
      %56 = dma.hbm_to_vmem [thread:$0]  %s4, 512, %s51, [#allocation6], 64, 64, 4
    $region21: #{bert_for_lcr_forward.1} parent=1 // pred_fallthru
      _
    // Predicated region
    $region22: #{bert_for_lcr_forward.1} parent=1 // pred_check
      _
    $region23: #{bert_for_lcr_forward.1} parent=1 // pred_check_branch
      %58 = sbr.rel (0) target = $region25
    $region24: #{bert_for_lcr_forward.1} parent=1 // pred_region
      %s60 = ssub.s32 1536, 1536
      %61 = vsyncadd [#allocation9], %s60
      %s62 = sshll.u32 [#allocation8], 4
      %s63 = int_to_ptr.vmem [resolvable:$true] %s62
      %68 = dma.hbm_to_vmem [thread:$0]  %s5, 1536, %s63, [#allocation9], 64, 64, 4
    $region25: #{bert_for_lcr_forward.1} parent=1 // pred_fallthru
      _
    // Predicated region
    $region26: #{bert_for_lcr_forward.1} parent=1 // pred_check
      _
    $region27: #{bert_for_lcr_forward.1} parent=1 // pred_check_branch
      %70 = sbr.rel (0) target = $region29
    $region28: #{bert_for_lcr_forward.1} parent=1 // pred_region
      %s72 = ssub.s32 512, 512
      %73 = vsyncadd [#allocation9], %s72
      %s74 = sshll.u32 [#allocation10], 4
      %s75 = int_to_ptr.vmem [resolvable:$true] %s74
      %80 = dma.hbm_to_vmem [thread:$0]  %s6, 512, %s75, [#allocation9], 64, 64, 4
    $region29: #{bert_for_lcr_forward.1} parent=1 // pred_fallthru
      _
    // Predicated region
    $region30: #{bert_for_lcr_forward.1} parent=1 // pred_check
      _
    $region31: #{bert_for_lcr_forward.1} parent=1 // pred_check_branch
      %82 = sbr.rel (0) target = $region33
    $region32: #{bert_for_lcr_forward.1} parent=1 // pred_region
      _
    $region33: #{bert_for_lcr_forward.1} parent=1 // pred_fallthru
      _
    // Predicated region
    $region34: #{bert_for_lcr_forward.1} parent=1 // pred_check
      _
    $region35: #{bert_for_lcr_forward.1} parent=1 // pred_check_branch
      %84 = sbr.rel (0) target = $region37
    $region36: #{bert_for_lcr_forward.1} parent=1 // pred_region
      %85 = dma.done [#allocation3], 832
    $region37: #{bert_for_lcr_forward.1} parent=1 // pred_fallthru
      _
    // Predicated region
    $region38: #{bert_for_lcr_forward.1} parent=1 // pred_check
      _
    $region39: #{bert_for_lcr_forward.1} parent=1 // pred_check_branch
      %87 = sbr.rel (0) target = $region41
    $region40: #{bert_for_lcr_forward.1} parent=1 // pred_region
      %88 = dma.done [#allocation6], 6144
    $region41: #{bert_for_lcr_forward.1} parent=1 // pred_fallthru
      _
    // Predicated region
    $region42: #{bert_for_lcr_forward.1} parent=1 // pred_check
      _
    $region43: #{bert_for_lcr_forward.1} parent=1 // pred_check_branch
      %90 = sbr.rel (0) target = $region45
    $region44: #{bert_for_lcr_forward.1} parent=1 // pred_region
      %91 = dma.done [#allocation6], 512
    $region45: #{bert_for_lcr_forward.1} parent=1 // pred_fallthru
      _
    // Predicated region
    $region46: #{bert_for_lcr_forward.1} parent=1 // pred_check
      _
    $region47: #{bert_for_lcr_forward.1} parent=1 // pred_check_branch
      %93 = sbr.rel (0) target = $region49
    $region48: #{bert_for_lcr_forward.1} parent=1 // pred_region
      %94 = dma.done [#allocation9], 1536
    $region49: #{bert_for_lcr_forward.1} parent=1 // pred_fallthru
      _
    // Predicated region
    $region50: #{bert_for_lcr_forward.1} parent=1 // pred_check
      _
    $region51: #{bert_for_lcr_forward.1} parent=1 // pred_check_branch
      %96 = sbr.rel (0) target = $region53
    $region52: #{bert_for_lcr_forward.1} parent=1 // pred_region
      %97 = dma.done [#allocation9], 512
    $region53: #{bert_for_lcr_forward.1} parent=1 // pred_fallthru
      _
    %v99 = vld [vmem:[%s0] sm:$0xff]
    %v100 = vld [vmem:[%s0 + $0x8] sm:$0xff]
    %v101 = vlaneseq
    %v102 = vand.u32 %v101, 127
    %103 = vset.pattern.permute.xlu0 0
    %104 = vperm.xlu0 %103, %v99
    %v105 = vpop.permute.xlu0 %104
    %106 = vset.pattern.permute.xlu0 0
    %107 = vperm.xlu0 %106, %v100
    %v108 = vpop.permute.xlu0 %107
    %vm109 = vcmp.eq.s32.totalorder %v105, %v102
    %vm110 = vcmp.eq.s32.totalorder %v108, %v102
    %v111 = vsel %vm109, 1.0, 0.0
    %v112 = vsel %vm110, 1.0, 0.0
    %v113 = vpack.c.bf16 %v112, %v111
    %v114 = vld [vmem:[#allocation2] sm:$0xf]
    %v115 = vld [vmem:[#allocation2 + $0x4] sm:$0xf]
    %v116 = vld [vmem:[#allocation2 + $0x8] sm:$0xf]
    %v117 = vld [vmem:[#allocation2 + $0xc] sm:$0xf]
    %v118 = vld [vmem:[#allocation2 + $0x10] sm:$0xf]
    %v119 = vld [vmem:[#allocation2 + $0x14] sm:$0xf]
    %v120 = vld [vmem:[#allocation2 + $0x18] sm:$0xf]
    %v121 = vld [vmem:[#allocation2 + $0x1c] sm:$0xf]
    %v122 = vld [vmem:[#allocation2 + $0x20] sm:$0xf]
    %v123 = vld [vmem:[#allocation2 + $0x24] sm:$0xf]
    %v124 = vld [vmem:[#allocation2 + $0x28] sm:$0xf]
    %v125 = vld [vmem:[#allocation2 + $0x2c] sm:$0xf]
    %v126 = vld [vmem:[#allocation2 + $0x30] sm:$0x3]
    %v127 = vld [vmem:[%s7] sm:$0xff]
    %v128 = vld [vmem:[%s7 + $0x8] sm:$0xff]
    %v142 = vunpack.c.l.b16 %v114
    %v143 = vunpack.c.l.b16 %v115
    %v144 = vunpack.c.l.b16 %v116
    %v145 = vunpack.c.l.b16 %v117
    %v146 = vunpack.c.l.b16 %v118
    %v147 = vunpack.c.l.b16 %v119
    %v148 = vunpack.c.l.b16 %v120
    %v149 = vunpack.c.l.b16 %v121
    %v150 = vunpack.c.l.b16 %v122
    %v151 = vunpack.c.l.b16 %v123
    %v152 = vunpack.c.l.b16 %v124
    %v153 = vunpack.c.l.b16 %v125
    %v154 = vunpack.c.l.b16 %v126
    %v155 = vpack.c.b16 %v143, %v142
    %v156 = vpack.c.b16 %v145, %v144
    %v157 = vpack.c.b16 %v147, %v146
    %v158 = vpack.c.b16 %v149, %v148
    %v159 = vpack.c.b16 %v151, %v150
    %v160 = vpack.c.b16 %v153, %v152
    %v161 = vpack.c.b16 %v154, %v154
    %vm168 = vcmask 818176
    %v170 = vsel %vm168, %v113, 0
    %vm172 = vcmask 1041408
    %v174 = vsel %vm172, %v161, 0
    %176 = vmatprep.subr.bf16.mxu0 0
    %177 = vmatpush1.bf16.msra.mxu0 %v155
    %178 = vmatprep.subr.bf16.mxu0 0
    %179 = vmatpush1.bf16.msra.mxu0 %v156
    %180 = vmatprep.subr.bf16.mxu0 0
    %181 = vmatpush1.bf16.msra.mxu0 %v157
    %182 = vmatprep.subr.bf16.mxu0 0
    %183 = vmatpush1.bf16.msra.mxu0 %v158
    %184 = vmatprep.subr.bf16.mxu0 0
    %185 = vmatpush1.bf16.msra.mxu0 %v159
    %186 = vmatprep.subr.bf16.mxu0 0
    %187 = vmatpush1.bf16.msra.mxu0 %v160
    %188 = vmatprep.subr.bf16.mxu0 0
    %189 = vmatpush1.bf16.msra.mxu0 %v174
    %190 = vmatprep.subr.bf16.mxu0 0
    %191 = vmatpush1.bf16.msra.mxu0 0
    %192 = vmatprep.subr.bf16.mxu0 0
    %193 = vmatpush1.bf16.msra.mxu0 0
    %194 = vmatprep.subr.bf16.mxu0 0
    %195 = vmatpush1.bf16.msra.mxu0 0
    %196 = vmatprep.subr.bf16.mxu0 0
    %197 = vmatpush1.bf16.msra.mxu0 0
    %198 = vmatprep.subr.bf16.mxu0 0
    %199 = vmatpush1.bf16.msra.mxu0 0
    %200 = vmatprep.subr.bf16.mxu0 0
    %201 = vmatpush1.bf16.msra.mxu0 0
    %202 = vmatprep.subr.bf16.mxu0 0
    %203 = vmatpush1.bf16.msra.mxu0 0
    %204 = vmatprep.subr.bf16.mxu0 0
    %205 = vmatpush1.bf16.msra.mxu0 0
    %206 = vmatprep.subr.bf16.mxu0 0
    %207 = vmatpush1.bf16.msra.mxu0 0
    %208 = vmatprep.mubr.bf16.mxu0 0
    %209 = vmatmul.mubr.bf16.gmra.mrb[0].mxu0 %v170
    %v210 = vpop.f32.mrb[0].mxu0
    %v211 = vadd.f32 %v127, %v210
    %v212 = vpop.f32.mrb[0].mxu0
    %v213 = vpop.f32.mrb[0].mxu0
    %v214 = vadd.f32 %v128, %v213
    %v215 = vpop.f32.mrb[0].mxu0
    %216 = vdwg.mxu0
    %v217 = vld [vmem:[%s7 + $0x10] sm:$0x1]
    %v218 = vld [vmem:[%s7 + $0x11] sm:$0x1]
    %vm219 = vcmask 261120
    %v220 = vsel %vm219, %v211, 0.0
    %221 = vadd.xlane.f32.xlu0 %v220
    %v222 = vpop.xlane.xlu0 %221
    %v223 = vsel %vm219, %v214, 0.0
    %224 = vadd.xlane.f32.xlu0 %v223
    %v225 = vpop.xlane.xlu0 %224
    %v226 = vrcp.pop 32.0
    %v227 = vmul.f32 %v222, %v226
    %v228 = vmul.f32 %v225, %v226
    %v229 = vsub.f32 %v211, %v227
    %v230 = vsub.f32 %v214, %v228
    %v231 = vmul.f32 %v229, %v229
    %v232 = vmul.f32 %v230, %v230
    %v233 = vsel %vm219, %v231, 0.0
    %234 = vadd.xlane.f32.xlu0 %v233
    %v235 = vpop.xlane.xlu0 %234
    %v236 = vsel %vm219, %v232, 0.0
    %237 = vadd.xlane.f32.xlu0 %v236
    %v238 = vpop.xlane.xlu0 %237
    %v239 = vmul.f32 %v235, %v226
    %v240 = vmul.f32 %v238, %v226
    %v241 = vadd.f32 %v239, 1e-12
    %v242 = vadd.f32 %v240, 1e-12
    %v243 = vrsqrt.pop %v241
    %v244 = vrsqrt.pop %v242
    %v245 = vmul.f32 %v229, %v243
    %v246 = vmul.f32 %v230, %v244
    %v247 = vlaneseq
    %v248 = vshrl.u32 %v247, 7
    %v249 = vsub.s32 0, %v248
    %v250 = vrot.slane %v217, %v249
    %v251 = vmul.f32 %v245, %v250
    %v252 = vmul.f32 %v246, %v250
    %v253 = vlaneseq
    %v254 = vshrl.u32 %v253, 7
    %v255 = vsub.s32 0, %v254
    %v256 = vrot.slane %v218, %v255
    %v257 = vadd.f32 %v251, %v256
    %v258 = vadd.f32 %v252, %v256
    %v259 = vlaneseq
    %v260 = vshrl.u32 %v259, 7
    %v261 = vadd.s32 %v260, 8
    %v262 = vshra.s32 %v260, 3
    %v263 = vshra.s32 %v261, 3
    %v264 = vshra.s32 %v102, 3
    %vm265 = vcmp.eq.s32.totalorder %v262, %v264
    %vm266 = vcmp.eq.s32.totalorder %v263, %v264
    %v267 = vld [vmem:[%s1] sm:$0x1]
    %vm268 = vcmp.gt.f32.partialorder %v267, 0.5
    %v269 = vsel %vm268, 1, 0
    %v270 = vlaneseq
    %v271 = vshrl.u32 %v270, 7
    %v272 = vsub.s32 0, %v271
    %v273 = vrot.slane %v269, %v272
    %vm274 = vcmp.eq.s32.totalorder %v273, 1
    %vm275 = vmand %vm265, %vm274
    %vm276 = vmand %vm266, %vm274
    %v277 = vsel %vm275, 0.0, -10000.0
    %v278 = vsel %vm276, 0.0, -10000.0
    %v279 = vpack.c.bf16 %v258, %v257
    %v280 = vld [vmem:[#allocation5] sm:$0xf]
    %v281 = vld [vmem:[#allocation5 + $0x4] sm:$0xf]
    %v282 = vld [vmem:[#allocation5 + $0x8] sm:$0xf]
    %v283 = vld [vmem:[#allocation5 + $0xc] sm:$0xf]
    %v284 = vld [vmem:[#allocation5 + $0x10] sm:$0xf]
    %v285 = vld [vmem:[#allocation5 + $0x14] sm:$0xf]
    %v286 = vld [vmem:[#allocation5 + $0x18] sm:$0xf]
    %v287 = vld [vmem:[#allocation5 + $0x1c] sm:$0xf]
    %v288 = vld [vmem:[#allocation5 + $0x20] sm:$0xf]
    %v289 = vld [vmem:[#allocation5 + $0x24] sm:$0xf]
    %v290 = vld [vmem:[#allocation5 + $0x28] sm:$0xf]
    %v291 = vld [vmem:[#allocation5 + $0x2c] sm:$0xf]
    %v292 = vld [vmem:[%s7 + $0x12] sm:$0x1]
    %v293 = vlaneseq
    %v294 = vshrl.u32 %v293, 7
    %v295 = vsub.s32 0, %v294
    %v296 = vrot.slane %v292, %v295
    %v301 = vunpack.c.l.b16 %v280
    %v302 = vunpack.c.l.b16 %v281
    %v303 = vunpack.c.l.b16 %v282
    %v304 = vunpack.c.l.b16 %v283
    %v305 = vpack.c.b16 %v302, %v301
    %v306 = vpack.c.b16 %v304, %v303
    %v310 = vsel %vm219, %v279, 0
    %312 = vmatprep.subr.bf16.mxu0 0
    %313 = vmatpush1.bf16.msra.mxu0 %v305
    %314 = vmatprep.subr.bf16.mxu0 0
    %315 = vmatpush1.bf16.msra.mxu0 %v306
    %316 = vmatprep.subr.bf16.mxu0 0
    %317 = vmatpush1.bf16.msra.mxu0 0
    %318 = vmatprep.subr.bf16.mxu0 0
    %319 = vmatpush1.bf16.msra.mxu0 0
    %320 = vmatprep.subr.bf16.mxu0 0
    %321 = vmatpush1.bf16.msra.mxu0 0
    %322 = vmatprep.subr.bf16.mxu0 0
    %323 = vmatpush1.bf16.msra.mxu0 0
    %324 = vmatprep.subr.bf16.mxu0 0
    %325 = vmatpush1.bf16.msra.mxu0 0
    %326 = vmatprep.subr.bf16.mxu0 0
    %327 = vmatpush1.bf16.msra.mxu0 0
    %328 = vmatprep.subr.bf16.mxu0 0
    %329 = vmatpush1.bf16.msra.mxu0 0
    %330 = vmatprep.subr.bf16.mxu0 0
    %331 = vmatpush1.bf16.msra.mxu0 0
    %332 = vmatprep.subr.bf16.mxu0 0
    %333 = vmatpush1.bf16.msra.mxu0 0
    %334 = vmatprep.subr.bf16.mxu0 0
    %335 = vmatpush1.bf16.msra.mxu0 0
    %336 = vmatprep.subr.bf16.mxu0 0
    %337 = vmatpush1.bf16.msra.mxu0 0
    %338 = vmatprep.subr.bf16.mxu0 0
    %339 = vmatpush1.bf16.msra.mxu0 0
    %340 = vmatprep.subr.bf16.mxu0 0
    %341 = vmatpush1.bf16.msra.mxu0 0
    %342 = vmatprep.subr.bf16.mxu0 0
    %343 = vmatpush1.bf16.msra.mxu0 0
    %344 = vmatprep.mubr.bf16.mxu0 0
    %345 = vmatmul.mubr.bf16.gmra.mrb[0].mxu0 %v310
    %v346 = vpop.f32.mrb[0].mxu0
    %v347 = vadd.f32 %v296, %v346
    %v348 = vpop.f32.mrb[0].mxu0
    %v349 = vpop.f32.mrb[0].mxu0
    %v350 = vadd.f32 %v296, %v349
    %v351 = vpop.f32.mrb[0].mxu0
    %352 = vdwg.mxu0
    %v357 = vunpack.c.l.b16 %v284
    %v358 = vunpack.c.l.b16 %v285
    %v359 = vunpack.c.l.b16 %v286
    %v360 = vunpack.c.l.b16 %v287
    %v361 = vpack.c.b16 %v358, %v357
    %v362 = vpack.c.b16 %v360, %v359
    %365 = vmatprep.subr.bf16.mxu0 0
    %366 = vmatpush1.bf16.msra.mxu0 %v361
    %367 = vmatprep.subr.bf16.mxu0 0
    %368 = vmatpush1.bf16.msra.mxu0 %v362
    %369 = vmatprep.subr.bf16.mxu0 0
    %370 = vmatpush1.bf16.msra.mxu0 0
    %371 = vmatprep.subr.bf16.mxu0 0
    %372 = vmatpush1.bf16.msra.mxu0 0
    %373 = vmatprep.subr.bf16.mxu0 0
    %374 = vmatpush1.bf16.msra.mxu0 0
    %375 = vmatprep.subr.bf16.mxu0 0
    %376 = vmatpush1.bf16.msra.mxu0 0
    %377 = vmatprep.subr.bf16.mxu0 0
    %378 = vmatpush1.bf16.msra.mxu0 0
    %379 = vmatprep.subr.bf16.mxu0 0
    %380 = vmatpush1.bf16.msra.mxu0 0
    %381 = vmatprep.subr.bf16.mxu0 0
    %382 = vmatpush1.bf16.msra.mxu0 0
    %383 = vmatprep.subr.bf16.mxu0 0
    %384 = vmatpush1.bf16.msra.mxu0 0
    %385 = vmatprep.subr.bf16.mxu0 0
    %386 = vmatpush1.bf16.msra.mxu0 0
    %387 = vmatprep.subr.bf16.mxu0 0
    %388 = vmatpush1.bf16.msra.mxu0 0
    %389 = vmatprep.subr.bf16.mxu0 0
    %390 = vmatpush1.bf16.msra.mxu0 0
    %391 = vmatprep.subr.bf16.mxu0 0
    %392 = vmatpush1.bf16.msra.mxu0 0
    %393 = vmatprep.subr.bf16.mxu0 0
    %394 = vmatpush1.bf16.msra.mxu0 0
    %395 = vmatprep.subr.bf16.mxu0 0
    %396 = vmatpush1.bf16.msra.mxu0 0
    %397 = vmatprep.mubr.bf16.mxu0 0
    %398 = vmatmul.mubr.bf16.gmra.mrb[0].mxu0 %v310
    %v399 = vpop.f32.mrb[0].mxu0
    %v400 = vadd.f32 0.0, %v399
    %v401 = vpop.f32.mrb[0].mxu0
    %v402 = vpop.f32.mrb[0].mxu0
    %v403 = vadd.f32 0.0, %v402
    %v404 = vpop.f32.mrb[0].mxu0
    %405 = vdwg.mxu0
    %v410 = vunpack.c.l.b16 %v288
    %v411 = vunpack.c.l.b16 %v289
    %v412 = vunpack.c.l.b16 %v290
    %v413 = vunpack.c.l.b16 %v291
    %v414 = vpack.c.b16 %v411, %v410
    %v415 = vpack.c.b16 %v413, %v412
    %418 = vmatprep.subr.bf16.mxu0 0
    %419 = vmatpush1.bf16.msra.mxu0 %v414
    %420 = vmatprep.subr.bf16.mxu0 0
    %421 = vmatpush1.bf16.msra.mxu0 %v415
    %422 = vmatprep.subr.bf16.mxu0 0
    %423 = vmatpush1.bf16.msra.mxu0 0
    %424 = vmatprep.subr.bf16.mxu0 0
    %425 = vmatpush1.bf16.msra.mxu0 0
    %426 = vmatprep.subr.bf16.mxu0 0
    %427 = vmatpush1.bf16.msra.mxu0 0
    %428 = vmatprep.subr.bf16.mxu0 0
    %429 = vmatpush1.bf16.msra.mxu0 0
    %430 = vmatprep.subr.bf16.mxu0 0
    %431 = vmatpush1.bf16.msra.mxu0 0
    %432 = vmatprep.subr.bf16.mxu0 0
    %433 = vmatpush1.bf16.msra.mxu0 0
    %434 = vmatprep.subr.bf16.mxu0 0
    %435 = vmatpush1.bf16.msra.mxu0 0
    %436 = vmatprep.subr.bf16.mxu0 0
    %437 = vmatpush1.bf16.msra.mxu0 0
    %438 = vmatprep.subr.bf16.mxu0 0
    %439 = vmatpush1.bf16.msra.mxu0 0
    %440 = vmatprep.subr.bf16.mxu0 0
    %441 = vmatpush1.bf16.msra.mxu0 0
    %442 = vmatprep.subr.bf16.mxu0 0
    %443 = vmatpush1.bf16.msra.mxu0 0
    %444 = vmatprep.subr.bf16.mxu0 0
    %445 = vmatpush1.bf16.msra.mxu0 0
    %446 = vmatprep.subr.bf16.mxu0 0
    %447 = vmatpush1.bf16.msra.mxu0 0
    %448 = vmatprep.subr.bf16.mxu0 0
    %449 = vmatpush1.bf16.msra.mxu0 0
    %450 = vmatprep.mubr.bf16.mxu0 0
    %451 = vmatmul.mubr.bf16.gmra.mrb[0].mxu0 %v310
    %v452 = vpop.f32.mrb[0].mxu0
    %v453 = vadd.f32 0.0, %v452
    %v454 = vpop.f32.mrb[0].mxu0
    %v455 = vpop.f32.mrb[0].mxu0
    %v456 = vadd.f32 0.0, %v455
    %v457 = vpop.f32.mrb[0].mxu0
    %458 = vdwg.mxu0
    %v459 = vpack.c.bf16 %v350, %v347
    %v460 = vpack.c.bf16 %v403, %v400
    %vm461 = vcmask 64512
    %v463 = vsel %vm461, %v459, 0
    %v466 = vsel %vm461, %v460, 0
    %468 = vmatprep.subr.bf16.mxu0 0
    %469 = vmatpush1.bf16.xpose.msra.mxu0 %v466
    %470 = vmatprep.subr.bf16.mxu0 0
    %471 = vmatpush1.bf16.xpose.msra.mxu0 0
    %472 = vmatprep.subr.bf16.mxu0 0
    %473 = vmatpush1.bf16.xpose.msra.mxu0 0
    %474 = vmatprep.subr.bf16.mxu0 0
    %475 = vmatpush1.bf16.xpose.msra.mxu0 0
    %476 = vmatprep.subr.bf16.mxu0 0
    %477 = vmatpush1.bf16.xpose.msra.mxu0 0
    %478 = vmatprep.subr.bf16.mxu0 0
    %479 = vmatpush1.bf16.xpose.msra.mxu0 0
    %480 = vmatprep.subr.bf16.mxu0 0
    %481 = vmatpush1.bf16.xpose.msra.mxu0 0
    %482 = vmatprep.subr.bf16.mxu0 0
    %483 = vmatpush1.bf16.xpose.msra.mxu0 0
    %484 = vmatprep.subr.bf16.mxu0 0
    %485 = vmatpush1.bf16.xpose.msra.mxu0 0
    %486 = vmatprep.subr.bf16.mxu0 0
    %487 = vmatpush1.bf16.xpose.msra.mxu0 0
    %488 = vmatprep.subr.bf16.mxu0 0
    %489 = vmatpush1.bf16.xpose.msra.mxu0 0
    %490 = vmatprep.subr.bf16.mxu0 0
    %491 = vmatpush1.bf16.xpose.msra.mxu0 0
    %492 = vmatprep.subr.bf16.mxu0 0
    %493 = vmatpush1.bf16.xpose.msra.mxu0 0
    %494 = vmatprep.subr.bf16.mxu0 0
    %495 = vmatpush1.bf16.xpose.msra.mxu0 0
    %496 = vmatprep.subr.bf16.mxu0 0
    %497 = vmatpush1.bf16.xpose.msra.mxu0 0
    %498 = vmatprep.subr.bf16.mxu0 0
    %499 = vmatpush1.bf16.xpose.msra.mxu0 0
    %500 = vmatprep.mubr.bf16.mxu0 0
    %501 = vmatmul.mubr.bf16.gmra.mrb[0].mxu0 %v463
    %v502 = vpop.f32.mrb[0].mxu0
    %v503 = vadd.f32 %v277, %v502
    %v504 = vpop.f32.mrb[0].mxu0
    %v505 = vpop.f32.mrb[0].mxu0
    %v506 = vadd.f32 %v278, %v505
    %v507 = vpop.f32.mrb[0].mxu0
    %508 = vdwg.mxu0
    %vm509 = vcmask 130048
    %v510 = vsel %vm509, %v503, -inf
    %511 = vmax.xlane.f32.xlu0 %v510
    %v512 = vpop.xlane.xlu0 %511
    %v513 = vsel %vm509, %v506, -inf
    %514 = vmax.xlane.f32.xlu0 %v513
    %v515 = vpop.xlane.xlu0 %514
    %v516 = vsub.f32 %v503, %v512
    %v517 = vsub.f32 %v506, %v515
    %v518 = vmul.f32 %v516, 1.442695
    %v519 = vpow.pop %v518
    %v520 = vmul.f32 %v517, 1.442695
    %v521 = vpow.pop %v520
    %v522 = vsel %vm509, %v519, 0.0
    %523 = vadd.xlane.f32.xlu0 %v522
    %v524 = vpop.xlane.xlu0 %523
    %v525 = vsel %vm509, %v521, 0.0
    %526 = vadd.xlane.f32.xlu0 %v525
    %v527 = vpop.xlane.xlu0 %526
    %v528 = vrcp.pop %v524
    %v529 = vrcp.pop %v527
    %v530 = vmul.f32 %v519, %v528
    %v531 = vmul.f32 %v521, %v529
    %v532 = vpack.c.bf16 %v531, %v530
    %v533 = vpack.c.bf16 %v456, %v453
    %v535 = vsel %vm509, %v532, 0
    %537 = vmatprep.subr.bf16.mxu0 0
    %538 = vmatpush1.bf16.msra.mxu0 %v533
    %539 = vmatprep.subr.bf16.mxu0 0
    %540 = vmatpush1.bf16.msra.mxu0 0
    %541 = vmatprep.subr.bf16.mxu0 0
    %542 = vmatpush1.bf16.msra.mxu0 0
    %543 = vmatprep.subr.bf16.mxu0 0
    %544 = vmatpush1.bf16.msra.mxu0 0
    %545 = vmatprep.subr.bf16.mxu0 0
    %546 = vmatpush1.bf16.msra.mxu0 0
    %547 = vmatprep.subr.bf16.mxu0 0
    %548 = vmatpush1.bf16.msra.mxu0 0
    %549 = vmatprep.subr.bf16.mxu0 0
    %550 = vmatpush1.bf16.msra.mxu0 0
    %551 = vmatprep.subr.bf16.mxu0 0
    %552 = vmatpush1.bf16.msra.mxu0 0
    %553 = vmatprep.subr.bf16.mxu0 0
    %554 = vmatpush1.bf16.msra.mxu0 0
    %555 = vmatprep.subr.bf16.mxu0 0
    %556 = vmatpush1.bf16.msra.mxu0 0
    %557 = vmatprep.subr.bf16.mxu0 0
    %558 = vmatpush1.bf16.msra.mxu0 0
    %559 = vmatprep.subr.bf16.mxu0 0
    %560 = vmatpush1.bf16.msra.mxu0 0
    %561 = vmatprep.subr.bf16.mxu0 0
    %562 = vmatpush1.bf16.msra.mxu0 0
    %563 = vmatprep.subr.bf16.mxu0 0
    %564 = vmatpush1.bf16.msra.mxu0 0
    %565 = vmatprep.subr.bf16.mxu0 0
    %566 = vmatpush1.bf16.msra.mxu0 0
    %567 = vmatprep.subr.bf16.mxu0 0
    %568 = vmatpush1.bf16.msra.mxu0 0
    %569 = vmatprep.mubr.bf16.mxu0 0
    %570 = vmatmul.mubr.bf16.gmra.mrb[0].mxu0 %v535
    %v571 = vpop.f32.mrb[0].mxu0
    %v572 = vadd.f32 0.0, %v571
    %v573 = vpop.f32.mrb[0].mxu0
    %v574 = vpop.f32.mrb[0].mxu0
    %v575 = vadd.f32 0.0, %v574
    %v576 = vpop.f32.mrb[0].mxu0
    %577 = vdwg.mxu0
    %v578 = vpack.c.bf16 %v575, %v572
    %v579 = vld [vmem:[#allocation7] sm:$0xf]
    %s580 = scalar_lea.vmem [#allocation5], 48
    %v581 = vld [vmem:[%s580] sm:$0xf]
    %v582 = vld [vmem:[%s580 + $0x4] sm:$0xf]
    %v583 = vld [vmem:[%s580 + $0x8] sm:$0xf]
    %v584 = vld [vmem:[%s580 + $0xc] sm:$0xf]
    %v585 = vld [vmem:[%s580 + $0x10] sm:$0xf]
    %v586 = vld [vmem:[%s580 + $0x14] sm:$0xf]
    %v587 = vld [vmem:[%s580 + $0x18] sm:$0xf]
    %v588 = vld [vmem:[%s580 + $0x1c] sm:$0xf]
    %v589 = vld [vmem:[%s580 + $0x20] sm:$0xf]
    %v590 = vld [vmem:[%s580 + $0x24] sm:$0xf]
    %v591 = vld [vmem:[%s580 + $0x28] sm:$0xf]
    %v592 = vld [vmem:[%s580 + $0x2c] sm:$0xf]
    %v593 = vld [vmem:[%s7 + $0x13] sm:$0x1]
    %v594 = vlaneseq
    %v595 = vshrl.u32 %v594, 7
    %v596 = vsub.s32 0, %v595
    %v597 = vrot.slane %v593, %v596
    %v602 = vunpack.c.l.b16 %v581
    %v603 = vunpack.c.l.b16 %v582
    %v604 = vunpack.c.l.b16 %v583
    %v605 = vunpack.c.l.b16 %v584
    %v606 = vpack.c.b16 %v603, %v602
    %v607 = vpack.c.b16 %v605, %v604
    %610 = vmatprep.subr.bf16.mxu0 0
    %611 = vmatpush1.bf16.msra.mxu0 %v606
    %612 = vmatprep.subr.bf16.mxu0 0
    %613 = vmatpush1.bf16.msra.mxu0 %v607
    %614 = vmatprep.subr.bf16.mxu0 0
    %615 = vmatpush1.bf16.msra.mxu0 0
    %616 = vmatprep.subr.bf16.mxu0 0
    %617 = vmatpush1.bf16.msra.mxu0 0
    %618 = vmatprep.subr.bf16.mxu0 0
    %619 = vmatpush1.bf16.msra.mxu0 0
    %620 = vmatprep.subr.bf16.mxu0 0
    %621 = vmatpush1.bf16.msra.mxu0 0
    %622 = vmatprep.subr.bf16.mxu0 0
    %623 = vmatpush1.bf16.msra.mxu0 0
    %624 = vmatprep.subr.bf16.mxu0 0
    %625 = vmatpush1.bf16.msra.mxu0 0
    %626 = vmatprep.subr.bf16.mxu0 0
    %627 = vmatpush1.bf16.msra.mxu0 0
    %628 = vmatprep.subr.bf16.mxu0 0
    %629 = vmatpush1.bf16.msra.mxu0 0
    %630 = vmatprep.subr.bf16.mxu0 0
    %631 = vmatpush1.bf16.msra.mxu0 0
    %632 = vmatprep.subr.bf16.mxu0 0
    %633 = vmatpush1.bf16.msra.mxu0 0
    %634 = vmatprep.subr.bf16.mxu0 0
    %635 = vmatpush1.bf16.msra.mxu0 0
    %636 = vmatprep.subr.bf16.mxu0 0
    %637 = vmatpush1.bf16.msra.mxu0 0
    %638 = vmatprep.subr.bf16.mxu0 0
    %639 = vmatpush1.bf16.msra.mxu0 0
    %640 = vmatprep.subr.bf16.mxu0 0
    %641 = vmatpush1.bf16.msra.mxu0 0
    %642 = vmatprep.mubr.bf16.mxu0 0
    %643 = vmatmul.mubr.bf16.gmra.mrb[0].mxu0 %v310
    %v644 = vpop.f32.mrb[0].mxu0
    %v645 = vadd.f32 %v597, %v644
    %v646 = vpop.f32.mrb[0].mxu0
    %v647 = vpop.f32.mrb[0].mxu0
    %v648 = vadd.f32 %v597, %v647
    %v649 = vpop.f32.mrb[0].mxu0
    %650 = vdwg.mxu0
    %v655 = vunpack.c.l.b16 %v585
    %v656 = vunpack.c.l.b16 %v586
    %v657 = vunpack.c.l.b16 %v587
    %v658 = vunpack.c.l.b16 %v588
    %v659 = vpack.c.b16 %v656, %v655
    %v660 = vpack.c.b16 %v658, %v657
    %663 = vmatprep.subr.bf16.mxu0 0
    %664 = vmatpush1.bf16.msra.mxu0 %v659
    %665 = vmatprep.subr.bf16.mxu0 0
    %666 = vmatpush1.bf16.msra.mxu0 %v660
    %667 = vmatprep.subr.bf16.mxu0 0
    %668 = vmatpush1.bf16.msra.mxu0 0
    %669 = vmatprep.subr.bf16.mxu0 0
    %670 = vmatpush1.bf16.msra.mxu0 0
    %671 = vmatprep.subr.bf16.mxu0 0
    %672 = vmatpush1.bf16.msra.mxu0 0
    %673 = vmatprep.subr.bf16.mxu0 0
    %674 = vmatpush1.bf16.msra.mxu0 0
    %675 = vmatprep.subr.bf16.mxu0 0
    %676 = vmatpush1.bf16.msra.mxu0 0
    %677 = vmatprep.subr.bf16.mxu0 0
    %678 = vmatpush1.bf16.msra.mxu0 0
    %679 = vmatprep.subr.bf16.mxu0 0
    %680 = vmatpush1.bf16.msra.mxu0 0
    %681 = vmatprep.subr.bf16.mxu0 0
    %682 = vmatpush1.bf16.msra.mxu0 0
    %683 = vmatprep.subr.bf16.mxu0 0
    %684 = vmatpush1.bf16.msra.mxu0 0
    %685 = vmatprep.subr.bf16.mxu0 0
    %686 = vmatpush1.bf16.msra.mxu0 0
    %687 = vmatprep.subr.bf16.mxu0 0
    %688 = vmatpush1.bf16.msra.mxu0 0
    %689 = vmatprep.subr.bf16.mxu0 0
    %690 = vmatpush1.bf16.msra.mxu0 0
    %691 = vmatprep.subr.bf16.mxu0 0
    %692 = vmatpush1.bf16.msra.mxu0 0
    %693 = vmatprep.subr.bf16.mxu0 0
    %694 = vmatpush1.bf16.msra.mxu0 0
    %695 = vmatprep.mubr.bf16.mxu0 0
    %696 = vmatmul.mubr.bf16.gmra.mrb[0].mxu0 %v310
    %v697 = vpop.f32.mrb[0].mxu0
    %v698 = vadd.f32 0.0, %v697
    %v699 = vpop.f32.mrb[0].mxu0
    %v700 = vpop.f32.mrb[0].mxu0
    %v701 = vadd.f32 0.0, %v700
    %v702 = vpop.f32.mrb[0].mxu0
    %703 = vdwg.mxu0
    %v708 = vunpack.c.l.b16 %v589
    %v709 = vunpack.c.l.b16 %v590
    %v710 = vunpack.c.l.b16 %v591
    %v711 = vunpack.c.l.b16 %v592
    %v712 = vpack.c.b16 %v709, %v708
    %v713 = vpack.c.b16 %v711, %v710
    %716 = vmatprep.subr.bf16.mxu0 0
    %717 = vmatpush1.bf16.msra.mxu0 %v712
    %718 = vmatprep.subr.bf16.mxu0 0
    %719 = vmatpush1.bf16.msra.mxu0 %v713
    %720 = vmatprep.subr.bf16.mxu0 0
    %721 = vmatpush1.bf16.msra.mxu0 0
    %722 = vmatprep.subr.bf16.mxu0 0
    %723 = vmatpush1.bf16.msra.mxu0 0
    %724 = vmatprep.subr.bf16.mxu0 0
    %725 = vmatpush1.bf16.msra.mxu0 0
    %726 = vmatprep.subr.bf16.mxu0 0
    %727 = vmatpush1.bf16.msra.mxu0 0
    %728 = vmatprep.subr.bf16.mxu0 0
    %729 = vmatpush1.bf16.msra.mxu0 0
    %730 = vmatprep.subr.bf16.mxu0 0
    %731 = vmatpush1.bf16.msra.mxu0 0
    %732 = vmatprep.subr.bf16.mxu0 0
    %733 = vmatpush1.bf16.msra.mxu0 0
    %734 = vmatprep.subr.bf16.mxu0 0
    %735 = vmatpush1.bf16.msra.mxu0 0
    %736 = vmatprep.subr.bf16.mxu0 0
    %737 = vmatpush1.bf16.msra.mxu0 0
    %738 = vmatprep.subr.bf16.mxu0 0
    %739 = vmatpush1.bf16.msra.mxu0 0
    %740 = vmatprep.subr.bf16.mxu0 0
    %741 = vmatpush1.bf16.msra.mxu0 0
    %742 = vmatprep.subr.bf16.mxu0 0
    %743 = vmatpush1.bf16.msra.mxu0 0
    %744 = vmatprep.subr.bf16.mxu0 0
    %745 = vmatpush1.bf16.msra.mxu0 0
    %746 = vmatprep.subr.bf16.mxu0 0
    %747 = vmatpush1.bf16.msra.mxu0 0
    %748 = vmatprep.mubr.bf16.mxu0 0
    %749 = vmatmul.mubr.bf16.gmra.mrb[0].mxu0 %v310
    %v750 = vpop.f32.mrb[0].mxu0
    %v751 = vadd.f32 0.0, %v750
    %v752 = vpop.f32.mrb[0].mxu0
    %v753 = vpop.f32.mrb[0].mxu0
    %v754 = vadd.f32 0.0, %v753
    %v755 = vpop.f32.mrb[0].mxu0
    %756 = vdwg.mxu0
    %v757 = vpack.c.bf16 %v648, %v645
    %v758 = vpack.c.bf16 %v701, %v698
    %v760 = vsel %vm461, %v757, 0
    %v763 = vsel %vm461, %v758, 0
    %765 = vmatprep.subr.bf16.mxu0 0
    %766 = vmatpush1.bf16.xpose.msra.mxu0 %v763
    %767 = vmatprep.subr.bf16.mxu0 0
    %768 = vmatpush1.bf16.xpose.msra.mxu0 0
    %769 = vmatprep.subr.bf16.mxu0 0
    %770 = vmatpush1.bf16.xpose.msra.mxu0 0
    %771 = vmatprep.subr.bf16.mxu0 0
    %772 = vmatpush1.bf16.xpose.msra.mxu0 0
    %773 = vmatprep.subr.bf16.mxu0 0
    %774 = vmatpush1.bf16.xpose.msra.mxu0 0
    %775 = vmatprep.subr.bf16.mxu0 0
    %776 = vmatpush1.bf16.xpose.msra.mxu0 0
    %777 = vmatprep.subr.bf16.mxu0 0
    %778 = vmatpush1.bf16.xpose.msra.mxu0 0
    %779 = vmatprep.subr.bf16.mxu0 0
    %780 = vmatpush1.bf16.xpose.msra.mxu0 0
    %781 = vmatprep.subr.bf16.mxu0 0
    %782 = vmatpush1.bf16.xpose.msra.mxu0 0
    %783 = vmatprep.subr.bf16.mxu0 0
    %784 = vmatpush1.bf16.xpose.msra.mxu0 0
    %785 = vmatprep.subr.bf16.mxu0 0
    %786 = vmatpush1.bf16.xpose.msra.mxu0 0
    %787 = vmatprep.subr.bf16.mxu0 0
    %788 = vmatpush1.bf16.xpose.msra.mxu0 0
    %789 = vmatprep.subr.bf16.mxu0 0
    %790 = vmatpush1.bf16.xpose.msra.mxu0 0
    %791 = vmatprep.subr.bf16.mxu0 0
    %792 = vmatpush1.bf16.xpose.msra.mxu0 0
    %793 = vmatprep.subr.bf16.mxu0 0
    %794 = vmatpush1.bf16.xpose.msra.mxu0 0
    %795 = vmatprep.subr.bf16.mxu0 0
    %796 = vmatpush1.bf16.xpose.msra.mxu0 0
    %797 = vmatprep.mubr.bf16.mxu0 0
    %798 = vmatmul.mubr.bf16.gmra.mrb[0].mxu0 %v760
    %v799 = vpop.f32.mrb[0].mxu0
    %v800 = vadd.f32 %v277, %v799
    %v801 = vpop.f32.mrb[0].mxu0
    %v802 = vpop.f32.mrb[0].mxu0
    %v803 = vadd.f32 %v278, %v802
    %v804 = vpop.f32.mrb[0].mxu0
    %805 = vdwg.mxu0
    %v806 = vsel %vm509, %v800, -inf
    %807 = vmax.xlane.f32.xlu0 %v806
    %v808 = vpop.xlane.xlu0 %807
    %v809 = vsel %vm509, %v803, -inf
    %810 = vmax.xlane.f32.xlu0 %v809
    %v811 = vpop.xlane.xlu0 %810
    %v812 = vsub.f32 %v800, %v808
    %v813 = vsub.f32 %v803, %v811
    %v814 = vmul.f32 %v812, 1.442695
    %v815 = vpow.pop %v814
    %v816 = vmul.f32 %v813, 1.442695
    %v817 = vpow.pop %v816
    %v818 = vsel %vm509, %v815, 0.0
    %819 = vadd.xlane.f32.xlu0 %v818
    %v820 = vpop.xlane.xlu0 %819
    %v821 = vsel %vm509, %v817, 0.0
    %822 = vadd.xlane.f32.xlu0 %v821
    %v823 = vpop.xlane.xlu0 %822
    %v824 = vrcp.pop %v820
    %v825 = vrcp.pop %v823
    %v826 = vmul.f32 %v815, %v824
    %v827 = vmul.f32 %v817, %v825
    %v828 = vpack.c.bf16 %v827, %v826
    %v829 = vpack.c.bf16 %v754, %v751
    %v831 = vsel %vm509, %v828, 0
    %833 = vmatprep.subr.bf16.mxu0 0
    %834 = vmatpush1.bf16.msra.mxu0 %v829
    %835 = vmatprep.subr.bf16.mxu0 0
    %836 = vmatpush1.bf16.msra.mxu0 0
    %837 = vmatprep.subr.bf16.mxu0 0
    %838 = vmatpush1.bf16.msra.mxu0 0
    %839 = vmatprep.subr.bf16.mxu0 0
    %840 = vmatpush1.bf16.msra.mxu0 0
    %841 = vmatprep.subr.bf16.mxu0 0
    %842 = vmatpush1.bf16.msra.mxu0 0
    %843 = vmatprep.subr.bf16.mxu0 0
    %844 = vmatpush1.bf16.msra.mxu0 0
    %845 = vmatprep.subr.bf16.mxu0 0
    %846 = vmatpush1.bf16.msra.mxu0 0
    %847 = vmatprep.subr.bf16.mxu0 0
    %848 = vmatpush1.bf16.msra.mxu0 0
    %849 = vmatprep.subr.bf16.mxu0 0
    %850 = vmatpush1.bf16.msra.mxu0 0
    %851 = vmatprep.subr.bf16.mxu0 0
    %852 = vmatpush1.bf16.msra.mxu0 0
    %853 = vmatprep.subr.bf16.mxu0 0
    %854 = vmatpush1.bf16.msra.mxu0 0
    %855 = vmatprep.subr.bf16.mxu0 0
    %856 = vmatpush1.bf16.msra.mxu0 0
    %857 = vmatprep.subr.bf16.mxu0 0
    %858 = vmatpush1.bf16.msra.mxu0 0
    %859 = vmatprep.subr.bf16.mxu0 0
    %860 = vmatpush1.bf16.msra.mxu0 0
    %861 = vmatprep.subr.bf16.mxu0 0
    %862 = vmatpush1.bf16.msra.mxu0 0
    %863 = vmatprep.subr.bf16.mxu0 0
    %864 = vmatpush1.bf16.msra.mxu0 0
    %865 = vmatprep.mubr.bf16.mxu0 0
    %866 = vmatmul.mubr.bf16.gmra.mrb[0].mxu0 %v831
    %v867 = vpop.f32.mrb[0].mxu0
    %v868 = vadd.f32 0.0, %v867
    %v869 = vpop.f32.mrb[0].mxu0
    %v870 = vpop.f32.mrb[0].mxu0
    %v871 = vadd.f32 0.0, %v870
    %v872 = vpop.f32.mrb[0].mxu0
    %873 = vdwg.mxu0
    %v874 = vpack.c.bf16 %v871, %v868
    %s875 = scalar_lea.vmem [#allocation7], 4
    %v876 = vld [vmem:[%s875] sm:$0xf]
    %v878 = vsel %vm461, %v874, 0
    %vm880 = vcmask 1043456
    %v882 = vsel %vm880, %v876, 0
    %884 = vmatprep.subr.bf16.mxu0 0
    %885 = vmatpush1.bf16.msra.mxu0 %v882
    %886 = vmatprep.subr.bf16.mxu0 0
    %887 = vmatpush1.bf16.msra.mxu0 0
    %888 = vmatprep.subr.bf16.mxu0 0
    %889 = vmatpush1.bf16.msra.mxu0 0
    %890 = vmatprep.subr.bf16.mxu0 0
    %891 = vmatpush1.bf16.msra.mxu0 0
    %892 = vmatprep.subr.bf16.mxu0 0
    %893 = vmatpush1.bf16.msra.mxu0 0
    %894 = vmatprep.subr.bf16.mxu0 0
    %895 = vmatpush1.bf16.msra.mxu0 0
    %896 = vmatprep.subr.bf16.mxu0 0
    %897 = vmatpush1.bf16.msra.mxu0 0
    %898 = vmatprep.subr.bf16.mxu0 0
    %899 = vmatpush1.bf16.msra.mxu0 0
    %900 = vmatprep.subr.bf16.mxu0 0
    %901 = vmatpush1.bf16.msra.mxu0 0
    %902 = vmatprep.subr.bf16.mxu0 0
    %903 = vmatpush1.bf16.msra.mxu0 0
    %904 = vmatprep.subr.bf16.mxu0 0
    %905 = vmatpush1.bf16.msra.mxu0 0
    %906 = vmatprep.subr.bf16.mxu0 0
    %907 = vmatpush1.bf16.msra.mxu0 0
    %908 = vmatprep.subr.bf16.mxu0 0
    %909 = vmatpush1.bf16.msra.mxu0 0
    %910 = vmatprep.subr.bf16.mxu0 0
    %911 = vmatpush1.bf16.msra.mxu0 0
    %912 = vmatprep.subr.bf16.mxu0 0
    %913 = vmatpush1.bf16.msra.mxu0 0
    %914 = vmatprep.subr.bf16.mxu0 0
    %915 = vmatpush1.bf16.msra.mxu0 0
    %916 = vmatprep.mubr.bf16.mxu0 0
    %917 = vmatmul.mubr.bf16.gmra.mrb[0].mxu0 %v878
    %v918 = vpop.f32.mrb[0].mxu0
    %v919 = vadd.f32 0.0, %v918
    %v920 = vpop.f32.mrb[0].mxu0
    %v921 = vpop.f32.mrb[0].mxu0
    %v922 = vadd.f32 0.0, %v921
    %v923 = vpop.f32.mrb[0].mxu0
    %924 = vdwg.mxu0
    %v926 = vsel %vm461, %v578, 0
    %v929 = vsel %vm880, %v579, 0
    %931 = vmatprep.subr.bf16.mxu0 0
    %932 = vmatpush1.bf16.msra.mxu0 %v929
    %933 = vmatprep.subr.bf16.mxu0 0
    %934 = vmatpush1.bf16.msra.mxu0 0
    %935 = vmatprep.subr.bf16.mxu0 0
    %936 = vmatpush1.bf16.msra.mxu0 0
    %937 = vmatprep.subr.bf16.mxu0 0
    %938 = vmatpush1.bf16.msra.mxu0 0
    %939 = vmatprep.subr.bf16.mxu0 0
    %940 = vmatpush1.bf16.msra.mxu0 0
    %941 = vmatprep.subr.bf16.mxu0 0
    %942 = vmatpush1.bf16.msra.mxu0 0
    %943 = vmatprep.subr.bf16.mxu0 0
    %944 = vmatpush1.bf16.msra.mxu0 0
    %945 = vmatprep.subr.bf16.mxu0 0
    %946 = vmatpush1.bf16.msra.mxu0 0
    %947 = vmatprep.subr.bf16.mxu0 0
    %948 = vmatpush1.bf16.msra.mxu0 0
    %949 = vmatprep.subr.bf16.mxu0 0
    %950 = vmatpush1.bf16.msra.mxu0 0
    %951 = vmatprep.subr.bf16.mxu0 0
    %952 = vmatpush1.bf16.msra.mxu0 0
    %953 = vmatprep.subr.bf16.mxu0 0
    %954 = vmatpush1.bf16.msra.mxu0 0
    %955 = vmatprep.subr.bf16.mxu0 0
    %956 = vmatpush1.bf16.msra.mxu0 0
    %957 = vmatprep.subr.bf16.mxu0 0
    %958 = vmatpush1.bf16.msra.mxu0 0
    %959 = vmatprep.subr.bf16.mxu0 0
    %960 = vmatpush1.bf16.msra.mxu0 0
    %961 = vmatprep.subr.bf16.mxu0 0
    %962 = vmatpush1.bf16.msra.mxu0 0
    %963 = vmatprep.mubr.bf16.mxu0 0
    %964 = vmatmul.mubr.bf16.gmra.mrb[0].mxu0 %v926
    %v965 = vpop.f32.mrb[0].mxu0
    %v966 = vadd.f32 %v919, %v965
    %v967 = vpop.f32.mrb[0].mxu0
    %v968 = vpop.f32.mrb[0].mxu0
    %v969 = vadd.f32 %v922, %v968
    %v970 = vpop.f32.mrb[0].mxu0
    %971 = vdwg.mxu0
    %s972 = scalar_lea.vmem [#allocation5], 96
    %v973 = vld [vmem:[%s972] sm:$0xf]
    %v974 = vld [vmem:[%s972 + $0x4] sm:$0xf]
    %v975 = vld [vmem:[%s972 + $0x8] sm:$0xf]
    %v976 = vld [vmem:[%s972 + $0xc] sm:$0xf]
    %v977 = vld [vmem:[%s972 + $0x10] sm:$0xf]
    %v978 = vld [vmem:[%s972 + $0x14] sm:$0xf]
    %v979 = vld [vmem:[%s972 + $0x18] sm:$0xf]
    %v980 = vld [vmem:[%s972 + $0x1c] sm:$0xf]
    %v981 = vld [vmem:[%s972 + $0x20] sm:$0xf]
    %v982 = vld [vmem:[%s972 + $0x24] sm:$0xf]
    %v983 = vld [vmem:[%s972 + $0x28] sm:$0xf]
    %v984 = vld [vmem:[%s972 + $0x2c] sm:$0xf]
    %v985 = vld [vmem:[%s7 + $0x14] sm:$0x1]
    %v986 = vlaneseq
    %v987 = vshrl.u32 %v986, 7
    %v988 = vsub.s32 0, %v987
    %v989 = vrot.slane %v985, %v988
    %v994 = vunpack.c.l.b16 %v973
    %v995 = vunpack.c.l.b16 %v974
    %v996 = vunpack.c.l.b16 %v975
    %v997 = vunpack.c.l.b16 %v976
    %v998 = vpack.c.b16 %v995, %v994
    %v999 = vpack.c.b16 %v997, %v996
    %1002 = vmatprep.subr.bf16.mxu0 0
    %1003 = vmatpush1.bf16.msra.mxu0 %v998
    %1004 = vmatprep.subr.bf16.mxu0 0
    %1005 = vmatpush1.bf16.msra.mxu0 %v999
    %1006 = vmatprep.subr.bf16.mxu0 0
    %1007 = vmatpush1.bf16.msra.mxu0 0
    %1008 = vmatprep.subr.bf16.mxu0 0
    %1009 = vmatpush1.bf16.msra.mxu0 0
    %1010 = vmatprep.subr.bf16.mxu0 0
    %1011 = vmatpush1.bf16.msra.mxu0 0
    %1012 = vmatprep.subr.bf16.mxu0 0
    %1013 = vmatpush1.bf16.msra.mxu0 0
    %1014 = vmatprep.subr.bf16.mxu0 0
    %1015 = vmatpush1.bf16.msra.mxu0 0
    %1016 = vmatprep.subr.bf16.mxu0 0
    %1017 = vmatpush1.bf16.msra.mxu0 0
    %1018 = vmatprep.subr.bf16.mxu0 0
    %1019 = vmatpush1.bf16.msra.mxu0 0
    %1020 = vmatprep.subr.bf16.mxu0 0
    %1021 = vmatpush1.bf16.msra.mxu0 0
    %1022 = vmatprep.subr.bf16.mxu0 0
    %1023 = vmatpush1.bf16.msra.mxu0 0
    %1024 = vmatprep.subr.bf16.mxu0 0
    %1025 = vmatpush1.bf16.msra.mxu0 0
    %1026 = vmatprep.subr.bf16.mxu0 0
    %1027 = vmatpush1.bf16.msra.mxu0 0
    %1028 = vmatprep.subr.bf16.mxu0 0
    %1029 = vmatpush1.bf16.msra.mxu0 0
    %1030 = vmatprep.subr.bf16.mxu0 0
    %1031 = vmatpush1.bf16.msra.mxu0 0
    %1032 = vmatprep.subr.bf16.mxu0 0
    %1033 = vmatpush1.bf16.msra.mxu0 0
    %1034 = vmatprep.mubr.bf16.mxu0 0
    %1035 = vmatmul.mubr.bf16.gmra.mrb[0].mxu0 %v310
    %v1036 = vpop.f32.mrb[0].mxu0
    %v1037 = vadd.f32 %v989, %v1036
    %v1038 = vpop.f32.mrb[0].mxu0
    %v1039 = vpop.f32.mrb[0].mxu0
    %v1040 = vadd.f32 %v989, %v1039
    %v1041 = vpop.f32.mrb[0].mxu0
    %1042 = vdwg.mxu0
    %v1047 = vunpack.c.l.b16 %v977
    %v1048 = vunpack.c.l.b16 %v978
    %v1049 = vunpack.c.l.b16 %v979
    %v1050 = vunpack.c.l.b16 %v980
    %v1051 = vpack.c.b16 %v1048, %v1047
    %v1052 = vpack.c.b16 %v1050, %v1049
    %1055 = vmatprep.subr.bf16.mxu0 0
    %1056 = vmatpush1.bf16.msra.mxu0 %v1051
    %1057 = vmatprep.subr.bf16.mxu0 0
    %1058 = vmatpush1.bf16.msra.mxu0 %v1052
    %1059 = vmatprep.subr.bf16.mxu0 0
    %1060 = vmatpush1.bf16.msra.mxu0 0
    %1061 = vmatprep.subr.bf16.mxu0 0
    %1062 = vmatpush1.bf16.msra.mxu0 0
    %1063 = vmatprep.subr.bf16.mxu0 0
    %1064 = vmatpush1.bf16.msra.mxu0 0
    %1065 = vmatprep.subr.bf16.mxu0 0
    %1066 = vmatpush1.bf16.msra.mxu0 0
    %1067 = vmatprep.subr.bf16.mxu0 0
    %1068 = vmatpush1.bf16.msra.mxu0 0
    %1069 = vmatprep.subr.bf16.mxu0 0
    %1070 = vmatpush1.bf16.msra.mxu0 0
    %1071 = vmatprep.subr.bf16.mxu0 0
    %1072 = vmatpush1.bf16.msra.mxu0 0
    %1073 = vmatprep.subr.bf16.mxu0 0
    %1074 = vmatpush1.bf16.msra.mxu0 0
    %1075 = vmatprep.subr.bf16.mxu0 0
    %1076 = vmatpush1.bf16.msra.mxu0 0
    %1077 = vmatprep.subr.bf16.mxu0 0
    %1078 = vmatpush1.bf16.msra.mxu0 0
    %1079 = vmatprep.subr.bf16.mxu0 0
    %1080 = vmatpush1.bf16.msra.mxu0 0
    %1081 = vmatprep.subr.bf16.mxu0 0
    %1082 = vmatpush1.bf16.msra.mxu0 0
    %1083 = vmatprep.subr.bf16.mxu0 0
    %1084 = vmatpush1.bf16.msra.mxu0 0
    %1085 = vmatprep.subr.bf16.mxu0 0
    %1086 = vmatpush1.bf16.msra.mxu0 0
    %1087 = vmatprep.mubr.bf16.mxu0 0
    %1088 = vmatmul.mubr.bf16.gmra.mrb[0].mxu0 %v310
    %v1089 = vpop.f32.mrb[0].mxu0
    %v1090 = vadd.f32 0.0, %v1089
    %v1091 = vpop.f32.mrb[0].mxu0
    %v1092 = vpop.f32.mrb[0].mxu0
    %v1093 = vadd.f32 0.0, %v1092
    %v1094 = vpop.f32.mrb[0].mxu0
    %1095 = vdwg.mxu0
    %v1100 = vunpack.c.l.b16 %v981
    %v1101 = vunpack.c.l.b16 %v982
    %v1102 = vunpack.c.l.b16 %v983
    %v1103 = vunpack.c.l.b16 %v984
    %v1104 = vpack.c.b16 %v1101, %v1100
    %v1105 = vpack.c.b16 %v1103, %v1102
    %1108 = vmatprep.subr.bf16.mxu0 0
    %1109 = vmatpush1.bf16.msra.mxu0 %v1104
    %1110 = vmatprep.subr.bf16.mxu0 0
    %1111 = vmatpush1.bf16.msra.mxu0 %v1105
    %1112 = vmatprep.subr.bf16.mxu0 0
    %1113 = vmatpush1.bf16.msra.mxu0 0
    %1114 = vmatprep.subr.bf16.mxu0 0
    %1115 = vmatpush1.bf16.msra.mxu0 0
    %1116 = vmatprep.subr.bf16.mxu0 0
    %1117 = vmatpush1.bf16.msra.mxu0 0
    %1118 = vmatprep.subr.bf16.mxu0 0
    %1119 = vmatpush1.bf16.msra.mxu0 0
    %1120 = vmatprep.subr.bf16.mxu0 0
    %1121 = vmatpush1.bf16.msra.mxu0 0
    %1122 = vmatprep.subr.bf16.mxu0 0
    %1123 = vmatpush1.bf16.msra.mxu0 0
    %1124 = vmatprep.subr.bf16.mxu0 0
    %1125 = vmatpush1.bf16.msra.mxu0 0
    %1126 = vmatprep.subr.bf16.mxu0 0
    %1127 = vmatpush1.bf16.msra.mxu0 0
    %1128 = vmatprep.subr.bf16.mxu0 0
    %1129 = vmatpush1.bf16.msra.mxu0 0
    %1130 = vmatprep.subr.bf16.mxu0 0
    %1131 = vmatpush1.bf16.msra.mxu0 0
    %1132 = vmatprep.subr.bf16.mxu0 0
    %1133 = vmatpush1.bf16.msra.mxu0 0
    %1134 = vmatprep.subr.bf16.mxu0 0
    %1135 = vmatpush1.bf16.msra.mxu0 0
    %1136 = vmatprep.subr.bf16.mxu0 0
    %1137 = vmatpush1.bf16.msra.mxu0 0
    %1138 = vmatprep.subr.bf16.mxu0 0
    %1139 = vmatpush1.bf16.msra.mxu0 0
    %1140 = vmatprep.mubr.bf16.mxu0 0
    %1141 = vmatmul.mubr.bf16.gmra.mrb[0].mxu0 %v310
    %v1142 = vpop.f32.mrb[0].mxu0
    %v1143 = vadd.f32 0.0, %v1142
    %v1144 = vpop.f32.mrb[0].mxu0
    %v1145 = vpop.f32.mrb[0].mxu0
    %v1146 = vadd.f32 0.0, %v1145
    %v1147 = vpop.f32.mrb[0].mxu0
    %1148 = vdwg.mxu0
    %v1149 = vpack.c.bf16 %v1040, %v1037
    %v1150 = vpack.c.bf16 %v1093, %v1090
    %v1152 = vsel %vm461, %v1149, 0
    %v1155 = vsel %vm461, %v1150, 0
    %1157 = vmatprep.subr.bf16.mxu0 0
    %1158 = vmatpush1.bf16.xpose.msra.mxu0 %v1155
    %1159 = vmatprep.subr.bf16.mxu0 0
    %1160 = vmatpush1.bf16.xpose.msra.mxu0 0
    %1161 = vmatprep.subr.bf16.mxu0 0
    %1162 = vmatpush1.bf16.xpose.msra.mxu0 0
    %1163 = vmatprep.subr.bf16.mxu0 0
    %1164 = vmatpush1.bf16.xpose.msra.mxu0 0
    %1165 = vmatprep.subr.bf16.mxu0 0
    %1166 = vmatpush1.bf16.xpose.msra.mxu0 0
    %1167 = vmatprep.subr.bf16.mxu0 0
    %1168 = vmatpush1.bf16.xpose.msra.mxu0 0
    %1169 = vmatprep.subr.bf16.mxu0 0
    %1170 = vmatpush1.bf16.xpose.msra.mxu0 0
    %1171 = vmatprep.subr.bf16.mxu0 0
    %1172 = vmatpush1.bf16.xpose.msra.mxu0 0
    %1173 = vmatprep.subr.bf16.mxu0 0
    %1174 = vmatpush1.bf16.xpose.msra.mxu0 0
    %1175 = vmatprep.subr.bf16.mxu0 0
    %1176 = vmatpush1.bf16.xpose.msra.mxu0 0
    %1177 = vmatprep.subr.bf16.mxu0 0
    %1178 = vmatpush1.bf16.xpose.msra.mxu0 0
    %1179 = vmatprep.subr.bf16.mxu0 0
    %1180 = vmatpush1.bf16.xpose.msra.mxu0 0
    %1181 = vmatprep.subr.bf16.mxu0 0
    %1182 = vmatpush1.bf16.xpose.msra.mxu0 0
    %1183 = vmatprep.subr.bf16.mxu0 0
    %1184 = vmatpush1.bf16.xpose.msra.mxu0 0
    %1185 = vmatprep.subr.bf16.mxu0 0
    %1186 = vmatpush1.bf16.xpose.msra.mxu0 0
    %1187 = vmatprep.subr.bf16.mxu0 0
    %1188 = vmatpush1.bf16.xpose.msra.mxu0 0
    %1189 = vmatprep.mubr.bf16.mxu0 0
    %1190 = vmatmul.mubr.bf16.gmra.mrb[0].mxu0 %v1152
    %v1191 = vpop.f32.mrb[0].mxu0
    %v1192 = vadd.f32 %v277, %v1191
    %v1193 = vpop.f32.mrb[0].mxu0
    %v1194 = vpop.f32.mrb[0].mxu0
    %v1195 = vadd.f32 %v278, %v1194
    %v1196 = vpop.f32.mrb[0].mxu0
    %1197 = vdwg.mxu0
    %v1198 = vsel %vm509, %v1192, -inf
    %1199 = vmax.xlane.f32.xlu0 %v1198
    %v1200 = vpop.xlane.xlu0 %1199
    %v1201 = vsel %vm509, %v1195, -inf
    %1202 = vmax.xlane.f32.xlu0 %v1201
    %v1203 = vpop.xlane.xlu0 %1202
    %v1204 = vsub.f32 %v1192, %v1200
    %v1205 = vsub.f32 %v1195, %v1203
    %v1206 = vmul.f32 %v1204, 1.442695
    %v1207 = vpow.pop %v1206
    %v1208 = vmul.f32 %v1205, 1.442695
    %v1209 = vpow.pop %v1208
    %v1210 = vsel %vm509, %v1207, 0.0
    %1211 = vadd.xlane.f32.xlu0 %v1210
    %v1212 = vpop.xlane.xlu0 %1211
    %v1213 = vsel %vm509, %v1209, 0.0
    %1214 = vadd.xlane.f32.xlu0 %v1213
    %v1215 = vpop.xlane.xlu0 %1214
    %v1216 = vrcp.pop %v1212
    %v1217 = vrcp.pop %v1215
    %v1218 = vmul.f32 %v1207, %v1216
    %v1219 = vmul.f32 %v1209, %v1217
    %v1220 = vpack.c.bf16 %v1219, %v1218
    %v1221 = vpack.c.bf16 %v1146, %v1143
    %v1223 = vsel %vm509, %v1220, 0
    %1225 = vmatprep.subr.bf16.mxu0 0
    %1226 = vmatpush1.bf16.msra.mxu0 %v1221
    %1227 = vmatprep.subr.bf16.mxu0 0
    %1228 = vmatpush1.bf16.msra.mxu0 0
    %1229 = vmatprep.subr.bf16.mxu0 0
    %1230 = vmatpush1.bf16.msra.mxu0 0
    %1231 = vmatprep.subr.bf16.mxu0 0
    %1232 = vmatpush1.bf16.msra.mxu0 0
    %1233 = vmatprep.subr.bf16.mxu0 0
    %1234 = vmatpush1.bf16.msra.mxu0 0
    %1235 = vmatprep.subr.bf16.mxu0 0
    %1236 = vmatpush1.bf16.msra.mxu0 0
    %1237 = vmatprep.subr.bf16.mxu0 0
    %1238 = vmatpush1.bf16.msra.mxu0 0
    %1239 = vmatprep.subr.bf16.mxu0 0
    %1240 = vmatpush1.bf16.msra.mxu0 0
    %1241 = vmatprep.subr.bf16.mxu0 0
    %1242 = vmatpush1.bf16.msra.mxu0 0
    %1243 = vmatprep.subr.bf16.mxu0 0
    %1244 = vmatpush1.bf16.msra.mxu0 0
    %1245 = vmatprep.subr.bf16.mxu0 0
    %1246 = vmatpush1.bf16.msra.mxu0 0
    %1247 = vmatprep.subr.bf16.mxu0 0
    %1248 = vmatpush1.bf16.msra.mxu0 0
    %1249 = vmatprep.subr.bf16.mxu0 0
    %1250 = vmatpush1.bf16.msra.mxu0 0
    %1251 = vmatprep.subr.bf16.mxu0 0
    %1252 = vmatpush1.bf16.msra.mxu0 0
    %1253 = vmatprep.subr.bf16.mxu0 0
    %1254 = vmatpush1.bf16.msra.mxu0 0
    %1255 = vmatprep.subr.bf16.mxu0 0
    %1256 = vmatpush1.bf16.msra.mxu0 0
    %1257 = vmatprep.mubr.bf16.mxu0 0
    %1258 = vmatmul.mubr.bf16.gmra.mrb[0].mxu0 %v1223
    %v1259 = vpop.f32.mrb[0].mxu0
    %v1260 = vadd.f32 0.0, %v1259
    %v1261 = vpop.f32.mrb[0].mxu0
    %v1262 = vpop.f32.mrb[0].mxu0
    %v1263 = vadd.f32 0.0, %v1262
    %v1264 = vpop.f32.mrb[0].mxu0
    %1265 = vdwg.mxu0
    %v1266 = vpack.c.bf16 %v1263, %v1260
    %s1267 = scalar_lea.vmem [#allocation7], 8
    %v1268 = vld [vmem:[%s1267] sm:$0xf]
    %v1270 = vsel %vm461, %v1266, 0
    %v1273 = vsel %vm880, %v1268, 0
    %1275 = vmatprep.subr.bf16.mxu0 0
    %1276 = vmatpush1.bf16.msra.mxu0 %v1273
    %1277 = vmatprep.subr.bf16.mxu0 0
    %1278 = vmatpush1.bf16.msra.mxu0 0
    %1279 = vmatprep.subr.bf16.mxu0 0
    %1280 = vmatpush1.bf16.msra.mxu0 0
    %1281 = vmatprep.subr.bf16.mxu0 0
    %1282 = vmatpush1.bf16.msra.mxu0 0
    %1283 = vmatprep.subr.bf16.mxu0 0
    %1284 = vmatpush1.bf16.msra.mxu0 0
    %1285 = vmatprep.subr.bf16.mxu0 0
    %1286 = vmatpush1.bf16.msra.mxu0 0
    %1287 = vmatprep.subr.bf16.mxu0 0
    %1288 = vmatpush1.bf16.msra.mxu0 0
    %1289 = vmatprep.subr.bf16.mxu0 0
    %1290 = vmatpush1.bf16.msra.mxu0 0
    %1291 = vmatprep.subr.bf16.mxu0 0
    %1292 = vmatpush1.bf16.msra.mxu0 0
    %1293 = vmatprep.subr.bf16.mxu0 0
    %1294 = vmatpush1.bf16.msra.mxu0 0
    %1295 = vmatprep.subr.bf16.mxu0 0
    %1296 = vmatpush1.bf16.msra.mxu0 0
    %1297 = vmatprep.subr.bf16.mxu0 0
    %1298 = vmatpush1.bf16.msra.mxu0 0
    %1299 = vmatprep.subr.bf16.mxu0 0
    %1300 = vmatpush1.bf16.msra.mxu0 0
    %1301 = vmatprep.subr.bf16.mxu0 0
    %1302 = vmatpush1.bf16.msra.mxu0 0
    %1303 = vmatprep.subr.bf16.mxu0 0
    %1304 = vmatpush1.bf16.msra.mxu0 0
    %1305 = vmatprep.subr.bf16.mxu0 0
    %1306 = vmatpush1.bf16.msra.mxu0 0
    %1307 = vmatprep.mubr.bf16.mxu0 0
    %1308 = vmatmul.mubr.bf16.gmra.mrb[0].mxu0 %v1270
    %v1309 = vpop.f32.mrb[0].mxu0
    %v1310 = vadd.f32 0.0, %v1309
    %v1311 = vpop.f32.mrb[0].mxu0
    %v1312 = vpop.f32.mrb[0].mxu0
    %v1313 = vadd.f32 0.0, %v1312
    %v1314 = vpop.f32.mrb[0].mxu0
    %1315 = vdwg.mxu0
    %v1316 = vadd.f32 %v966, %v1310
    %v1317 = vadd.f32 %v969, %v1313
    %s1318 = scalar_lea.vmem [#allocation5], 144
    %v1319 = vld [vmem:[%s1318] sm:$0xf]
    %v1320 = vld [vmem:[%s1318 + $0x4] sm:$0xf]
    %v1321 = vld [vmem:[%s1318 + $0x8] sm:$0xf]
    %v1322 = vld [vmem:[%s1318 + $0xc] sm:$0xf]
    %v1323 = vld [vmem:[%s1318 + $0x10] sm:$0xf]
    %v1324 = vld [vmem:[%s1318 + $0x14] sm:$0xf]
    %v1325 = vld [vmem:[%s1318 + $0x18] sm:$0xf]
    %v1326 = vld [vmem:[%s1318 + $0x1c] sm:$0xf]
    %v1327 = vld [vmem:[%s1318 + $0x20] sm:$0xf]
    %v1328 = vld [vmem:[%s1318 + $0x24] sm:$0xf]
    %v1329 = vld [vmem:[%s1318 + $0x28] sm:$0xf]
    %v1330 = vld [vmem:[%s1318 + $0x2c] sm:$0xf]
    %v1331 = vld [vmem:[%s7 + $0x15] sm:$0x1]
    %v1332 = vlaneseq
    %v1333 = vshrl.u32 %v1332, 7
    %v1334 = vsub.s32 0, %v1333
    %v1335 = vrot.slane %v1331, %v1334
    %v1340 = vunpack.c.l.b16 %v1319
    %v1341 = vunpack.c.l.b16 %v1320
    %v1342 = vunpack.c.l.b16 %v1321
    %v1343 = vunpack.c.l.b16 %v1322
    %v1344 = vpack.c.b16 %v1341, %v1340
    %v1345 = vpack.c.b16 %v1343, %v1342
    %1348 = vmatprep.subr.bf16.mxu0 0
    %1349 = vmatpush1.bf16.msra.mxu0 %v1344
    %1350 = vmatprep.subr.bf16.mxu0 0
    %1351 = vmatpush1.bf16.msra.mxu0 %v1345
    %1352 = vmatprep.subr.bf16.mxu0 0
    %1353 = vmatpush1.bf16.msra.mxu0 0
    %1354 = vmatprep.subr.bf16.mxu0 0
    %1355 = vmatpush1.bf16.msra.mxu0 0
    %1356 = vmatprep.subr.bf16.mxu0 0
    %1357 = vmatpush1.bf16.msra.mxu0 0
    %1358 = vmatprep.subr.bf16.mxu0 0
    %1359 = vmatpush1.bf16.msra.mxu0 0
    %1360 = vmatprep.subr.bf16.mxu0 0
    %1361 = vmatpush1.bf16.msra.mxu0 0
    %1362 = vmatprep.subr.bf16.mxu0 0
    %1363 = vmatpush1.bf16.msra.mxu0 0
    %1364 = vmatprep.subr.bf16.mxu0 0
    %1365 = vmatpush1.bf16.msra.mxu0 0
    %1366 = vmatprep.subr.bf16.mxu0 0
    %1367 = vmatpush1.bf16.msra.mxu0 0
    %1368 = vmatprep.subr.bf16.mxu0 0
    %1369 = vmatpush1.bf16.msra.mxu0 0
    %1370 = vmatprep.subr.bf16.mxu0 0
    %1371 = vmatpush1.bf16.msra.mxu0 0
    %1372 = vmatprep.subr.bf16.mxu0 0
    %1373 = vmatpush1.bf16.msra.mxu0 0
    %1374 = vmatprep.subr.bf16.mxu0 0
    %1375 = vmatpush1.bf16.msra.mxu0 0
    %1376 = vmatprep.subr.bf16.mxu0 0
    %1377 = vmatpush1.bf16.msra.mxu0 0
    %1378 = vmatprep.subr.bf16.mxu0 0
    %1379 = vmatpush1.bf16.msra.mxu0 0
    %1380 = vmatprep.mubr.bf16.mxu0 0
    %1381 = vmatmul.mubr.bf16.gmra.mrb[0].mxu0 %v310
    %v1382 = vpop.f32.mrb[0].mxu0
    %v1383 = vadd.f32 %v1335, %v1382
    %v1384 = vpop.f32.mrb[0].mxu0
    %v1385 = vpop.f32.mrb[0].mxu0
    %v1386 = vadd.f32 %v1335, %v1385
    %v1387 = vpop.f32.mrb[0].mxu0
    %1388 = vdwg.mxu0
    %v1393 = vunpack.c.l.b16 %v1323
    %v1394 = vunpack.c.l.b16 %v1324
    %v1395 = vunpack.c.l.b16 %v1325
    %v1396 = vunpack.c.l.b16 %v1326
    %v1397 = vpack.c.b16 %v1394, %v1393
    %v1398 = vpack.c.b16 %v1396, %v1395
    %1401 = vmatprep.subr.bf16.mxu0 0
    %1402 = vmatpush1.bf16.msra.mxu0 %v1397
    %1403 = vmatprep.subr.bf16.mxu0 0
    %1404 = vmatpush1.bf16.msra.mxu0 %v1398
    %1405 = vmatprep.subr.bf16.mxu0 0
    %1406 = vmatpush1.bf16.msra.mxu0 0
    %1407 = vmatprep.subr.bf16.mxu0 0
    %1408 = vmatpush1.bf16.msra.mxu0 0
    %1409 = vmatprep.subr.bf16.mxu0 0
    %1410 = vmatpush1.bf16.msra.mxu0 0
    %1411 = vmatprep.subr.bf16.mxu0 0
    %1412 = vmatpush1.bf16.msra.mxu0 0
    %1413 = vmatprep.subr.bf16.mxu0 0
    %1414 = vmatpush1.bf16.msra.mxu0 0
    %1415 = vmatprep.subr.bf16.mxu0 0
    %1416 = vmatpush1.bf16.msra.mxu0 0
    %1417 = vmatprep.subr.bf16.mxu0 0
    %1418 = vmatpush1.bf16.msra.mxu0 0
    %1419 = vmatprep.subr.bf16.mxu0 0
    %1420 = vmatpush1.bf16.msra.mxu0 0
    %1421 = vmatprep.subr.bf16.mxu0 0
    %1422 = vmatpush1.bf16.msra.mxu0 0
    %1423 = vmatprep.subr.bf16.mxu0 0
    %1424 = vmatpush1.bf16.msra.mxu0 0
    %1425 = vmatprep.subr.bf16.mxu0 0
    %1426 = vmatpush1.bf16.msra.mxu0 0
    %1427 = vmatprep.subr.bf16.mxu0 0
    %1428 = vmatpush1.bf16.msra.mxu0 0
    %1429 = vmatprep.subr.bf16.mxu0 0
    %1430 = vmatpush1.bf16.msra.mxu0 0
    %1431 = vmatprep.subr.bf16.mxu0 0
    %1432 = vmatpush1.bf16.msra.mxu0 0
    %1433 = vmatprep.mubr.bf16.mxu0 0
    %1434 = vmatmul.mubr.bf16.gmra.mrb[0].mxu0 %v310
    %v1435 = vpop.f32.mrb[0].mxu0
    %v1436 = vadd.f32 0.0, %v1435
    %v1437 = vpop.f32.mrb[0].mxu0
    %v1438 = vpop.f32.mrb[0].mxu0
    %v1439 = vadd.f32 0.0, %v1438
    %v1440 = vpop.f32.mrb[0].mxu0
    %1441 = vdwg.mxu0
    %v1446 = vunpack.c.l.b16 %v1327
    %v1447 = vunpack.c.l.b16 %v1328
    %v1448 = vunpack.c.l.b16 %v1329
    %v1449 = vunpack.c.l.b16 %v1330
    %v1450 = vpack.c.b16 %v1447, %v1446
    %v1451 = vpack.c.b16 %v1449, %v1448
    %1454 = vmatprep.subr.bf16.mxu0 0
    %1455 = vmatpush1.bf16.msra.mxu0 %v1450
    %1456 = vmatprep.subr.bf16.mxu0 0
    %1457 = vmatpush1.bf16.msra.mxu0 %v1451
    %1458 = vmatprep.subr.bf16.mxu0 0
    %1459 = vmatpush1.bf16.msra.mxu0 0
    %1460 = vmatprep.subr.bf16.mxu0 0
    %1461 = vmatpush1.bf16.msra.mxu0 0
    %1462 = vmatprep.subr.bf16.mxu0 0
    %1463 = vmatpush1.bf16.msra.mxu0 0
    %1464 = vmatprep.subr.bf16.mxu0 0
    %1465 = vmatpush1.bf16.msra.mxu0 0
    %1466 = vmatprep.subr.bf16.mxu0 0
    %1467 = vmatpush1.bf16.msra.mxu0 0
    %1468 = vmatprep.subr.bf16.mxu0 0
    %1469 = vmatpush1.bf16.msra.mxu0 0
    %1470 = vmatprep.subr.bf16.mxu0 0
    %1471 = vmatpush1.bf16.msra.mxu0 0
    %1472 = vmatprep.subr.bf16.mxu0 0
    %1473 = vmatpush1.bf16.msra.mxu0 0
    %1474 = vmatprep.subr.bf16.mxu0 0
    %1475 = vmatpush1.bf16.msra.mxu0 0
    %1476 = vmatprep.subr.bf16.mxu0 0
    %1477 = vmatpush1.bf16.msra.mxu0 0
    %1478 = vmatprep.subr.bf16.mxu0 0
    %1479 = vmatpush1.bf16.msra.mxu0 0
    %1480 = vmatprep.subr.bf16.mxu0 0
    %1481 = vmatpush1.bf16.msra.mxu0 0
    %1482 = vmatprep.subr.bf16.mxu0 0
    %1483 = vmatpush1.bf16.msra.mxu0 0
    %1484 = vmatprep.subr.bf16.mxu0 0
    %1485 = vmatpush1.bf16.msra.mxu0 0
    %1486 = vmatprep.mubr.bf16.mxu0 0
    %1487 = vmatmul.mubr.bf16.gmra.mrb[0].mxu0 %v310
    %v1488 = vpop.f32.mrb[0].mxu0
    %v1489 = vadd.f32 0.0, %v1488
    %v1490 = vpop.f32.mrb[0].mxu0
    %v1491 = vpop.f32.mrb[0].mxu0
    %v1492 = vadd.f32 0.0, %v1491
    %v1493 = vpop.f32.mrb[0].mxu0
    %1494 = vdwg.mxu0
    %v1495 = vpack.c.bf16 %v1386, %v1383
    %v1496 = vpack.c.bf16 %v1439, %v1436
    %v1498 = vsel %vm461, %v1495, 0
    %v1501 = vsel %vm461, %v1496, 0
    %1503 = vmatprep.subr.bf16.mxu0 0
    %1504 = vmatpush1.bf16.xpose.msra.mxu0 %v1501
    %1505 = vmatprep.subr.bf16.mxu0 0
    %1506 = vmatpush1.bf16.xpose.msra.mxu0 0
    %1507 = vmatprep.subr.bf16.mxu0 0
    %1508 = vmatpush1.bf16.xpose.msra.mxu0 0
    %1509 = vmatprep.subr.bf16.mxu0 0
    %1510 = vmatpush1.bf16.xpose.msra.mxu0 0
    %1511 = vmatprep.subr.bf16.mxu0 0
    %1512 = vmatpush1.bf16.xpose.msra.mxu0 0
    %1513 = vmatprep.subr.bf16.mxu0 0
    %1514 = vmatpush1.bf16.xpose.msra.mxu0 0
    %1515 = vmatprep.subr.bf16.mxu0 0
    %1516 = vmatpush1.bf16.xpose.msra.mxu0 0
    %1517 = vmatprep.subr.bf16.mxu0 0
    %1518 = vmatpush1.bf16.xpose.msra.mxu0 0
    %1519 = vmatprep.subr.bf16.mxu0 0
    %1520 = vmatpush1.bf16.xpose.msra.mxu0 0
    %1521 = vmatprep.subr.bf16.mxu0 0
    %1522 = vmatpush1.bf16.xpose.msra.mxu0 0
    %1523 = vmatprep.subr.bf16.mxu0 0
    %1524 = vmatpush1.bf16.xpose.msra.mxu0 0
    %1525 = vmatprep.subr.bf16.mxu0 0
    %1526 = vmatpush1.bf16.xpose.msra.mxu0 0
    %1527 = vmatprep.subr.bf16.mxu0 0
    %1528 = vmatpush1.bf16.xpose.msra.mxu0 0
    %1529 = vmatprep.subr.bf16.mxu0 0
    %1530 = vmatpush1.bf16.xpose.msra.mxu0 0
    %1531 = vmatprep.subr.bf16.mxu0 0
    %1532 = vmatpush1.bf16.xpose.msra.mxu0 0
    %1533 = vmatprep.subr.bf16.mxu0 0
    %1534 = vmatpush1.bf16.xpose.msra.mxu0 0
    %1535 = vmatprep.mubr.bf16.mxu0 0
    %1536 = vmatmul.mubr.bf16.gmra.mrb[0].mxu0 %v1498
    %v1537 = vpop.f32.mrb[0].mxu0
    %v1538 = vadd.f32 %v277, %v1537
    %v1539 = vpop.f32.mrb[0].mxu0
    %v1540 = vpop.f32.mrb[0].mxu0
    %v1541 = vadd.f32 %v278, %v1540
    %v1542 = vpop.f32.mrb[0].mxu0
    %1543 = vdwg.mxu0
    %v1544 = vsel %vm509, %v1538, -inf
    %1545 = vmax.xlane.f32.xlu0 %v1544
    %v1546 = vpop.xlane.xlu0 %1545
    %v1547 = vsel %vm509, %v1541, -inf
    %1548 = vmax.xlane.f32.xlu0 %v1547
    %v1549 = vpop.xlane.xlu0 %1548
    %v1550 = vsub.f32 %v1538, %v1546
    %v1551 = vsub.f32 %v1541, %v1549
    %v1552 = vmul.f32 %v1550, 1.442695
    %v1553 = vpow.pop %v1552
    %v1554 = vmul.f32 %v1551, 1.442695
    %v1555 = vpow.pop %v1554
    %v1556 = vsel %vm509, %v1553, 0.0
    %1557 = vadd.xlane.f32.xlu0 %v1556
    %v1558 = vpop.xlane.xlu0 %1557
    %v1559 = vsel %vm509, %v1555, 0.0
    %1560 = vadd.xlane.f32.xlu0 %v1559
    %v1561 = vpop.xlane.xlu0 %1560
    %v1562 = vrcp.pop %v1558
    %v1563 = vrcp.pop %v1561
    %v1564 = vmul.f32 %v1553, %v1562
    %v1565 = vmul.f32 %v1555, %v1563
    %v1566 = vpack.c.bf16 %v1565, %v1564
    %v1567 = vpack.c.bf16 %v1492, %v1489
    %v1569 = vsel %vm509, %v1566, 0
    %1571 = vmatprep.subr.bf16.mxu0 0
    %1572 = vmatpush1.bf16.msra.mxu0 %v1567
    %1573 = vmatprep.subr.bf16.mxu0 0
    %1574 = vmatpush1.bf16.msra.mxu0 0
    %1575 = vmatprep.subr.bf16.mxu0 0
    %1576 = vmatpush1.bf16.msra.mxu0 0
    %1577 = vmatprep.subr.bf16.mxu0 0
    %1578 = vmatpush1.bf16.msra.mxu0 0
    %1579 = vmatprep.subr.bf16.mxu0 0
    %1580 = vmatpush1.bf16.msra.mxu0 0
    %1581 = vmatprep.subr.bf16.mxu0 0
    %1582 = vmatpush1.bf16.msra.mxu0 0
    %1583 = vmatprep.subr.bf16.mxu0 0
    %1584 = vmatpush1.bf16.msra.mxu0 0
    %1585 = vmatprep.subr.bf16.mxu0 0
    %1586 = vmatpush1.bf16.msra.mxu0 0
    %1587 = vmatprep.subr.bf16.mxu0 0
    %1588 = vmatpush1.bf16.msra.mxu0 0
    %1589 = vmatprep.subr.bf16.mxu0 0
    %1590 = vmatpush1.bf16.msra.mxu0 0
    %1591 = vmatprep.subr.bf16.mxu0 0
    %1592 = vmatpush1.bf16.msra.mxu0 0
    %1593 = vmatprep.subr.bf16.mxu0 0
    %1594 = vmatpush1.bf16.msra.mxu0 0
    %1595 = vmatprep.subr.bf16.mxu0 0
    %1596 = vmatpush1.bf16.msra.mxu0 0
    %1597 = vmatprep.subr.bf16.mxu0 0
    %1598 = vmatpush1.bf16.msra.mxu0 0
    %1599 = vmatprep.subr.bf16.mxu0 0
    %1600 = vmatpush1.bf16.msra.mxu0 0
    %1601 = vmatprep.subr.bf16.mxu0 0
    %1602 = vmatpush1.bf16.msra.mxu0 0
    %1603 = vmatprep.mubr.bf16.mxu0 0
    %1604 = vmatmul.mubr.bf16.gmra.mrb[0].mxu0 %v1569
    %v1605 = vpop.f32.mrb[0].mxu0
    %v1606 = vadd.f32 0.0, %v1605
    %v1607 = vpop.f32.mrb[0].mxu0
    %v1608 = vpop.f32.mrb[0].mxu0
    %v1609 = vadd.f32 0.0, %v1608
    %v1610 = vpop.f32.mrb[0].mxu0
    %1611 = vdwg.mxu0
    %v1612 = vpack.c.bf16 %v1609, %v1606
    %s1613 = scalar_lea.vmem [#allocation7], 12
    %v1614 = vld [vmem:[%s1613] sm:$0xf]
    %v1616 = vsel %vm461, %v1612, 0
    %v1619 = vsel %vm880, %v1614, 0
    %1621 = vmatprep.subr.bf16.mxu0 0
    %1622 = vmatpush1.bf16.msra.mxu0 %v1619
    %1623 = vmatprep.subr.bf16.mxu0 0
    %1624 = vmatpush1.bf16.msra.mxu0 0
    %1625 = vmatprep.subr.bf16.mxu0 0
    %1626 = vmatpush1.bf16.msra.mxu0 0
    %1627 = vmatprep.subr.bf16.mxu0 0
    %1628 = vmatpush1.bf16.msra.mxu0 0
    %1629 = vmatprep.subr.bf16.mxu0 0
    %1630 = vmatpush1.bf16.msra.mxu0 0
    %1631 = vmatprep.subr.bf16.mxu0 0
    %1632 = vmatpush1.bf16.msra.mxu0 0
    %1633 = vmatprep.subr.bf16.mxu0 0
    %1634 = vmatpush1.bf16.msra.mxu0 0
    %1635 = vmatprep.subr.bf16.mxu0 0
    %1636 = vmatpush1.bf16.msra.mxu0 0
    %1637 = vmatprep.subr.bf16.mxu0 0
    %1638 = vmatpush1.bf16.msra.mxu0 0
    %1639 = vmatprep.subr.bf16.mxu0 0
    %1640 = vmatpush1.bf16.msra.mxu0 0
    %1641 = vmatprep.subr.bf16.mxu0 0
    %1642 = vmatpush1.bf16.msra.mxu0 0
    %1643 = vmatprep.subr.bf16.mxu0 0
    %1644 = vmatpush1.bf16.msra.mxu0 0
    %1645 = vmatprep.subr.bf16.mxu0 0
    %1646 = vmatpush1.bf16.msra.mxu0 0
    %1647 = vmatprep.subr.bf16.mxu0 0
    %1648 = vmatpush1.bf16.msra.mxu0 0
    %1649 = vmatprep.subr.bf16.mxu0 0
    %1650 = vmatpush1.bf16.msra.mxu0 0
    %1651 = vmatprep.subr.bf16.mxu0 0
    %1652 = vmatpush1.bf16.msra.mxu0 0
    %1653 = vmatprep.mubr.bf16.mxu0 0
    %1654 = vmatmul.mubr.bf16.gmra.mrb[0].mxu0 %v1616
    %v1655 = vpop.f32.mrb[0].mxu0
    %v1656 = vadd.f32 0.0, %v1655
    %v1657 = vpop.f32.mrb[0].mxu0
    %v1658 = vpop.f32.mrb[0].mxu0
    %v1659 = vadd.f32 0.0, %v1658
    %v1660 = vpop.f32.mrb[0].mxu0
    %1661 = vdwg.mxu0
    %v1662 = vadd.f32 %v1316, %v1656
    %v1663 = vadd.f32 %v1317, %v1659
    %v1664 = vld [vmem:[%s7 + $0x16] sm:$0x1]
    %v1665 = vlaneseq
    %v1666 = vshrl.u32 %v1665, 7
    %v1667 = vsub.s32 0, %v1666
    %v1668 = vrot.slane %v1664, %v1667
    %v1669 = vadd.f32 %v1662, %v1668
    %v1670 = vadd.f32 %v1663, %v1668
    %v1671 = vadd.f32 %v1669, %v257
    %v1672 = vadd.f32 %v1670, %v258
    %v1673 = vld [vmem:[%s7 + $0x17] sm:$0x1]
    %v1674 = vld [vmem:[%s7 + $0x18] sm:$0x1]
    %v1675 = vsel %vm219, %v1671, 0.0
    %1676 = vadd.xlane.f32.xlu0 %v1675
    %v1677 = vpop.xlane.xlu0 %1676
    %v1678 = vsel %vm219, %v1672, 0.0
    %1679 = vadd.xlane.f32.xlu0 %v1678
    %v1680 = vpop.xlane.xlu0 %1679
    %v1681 = vmul.f32 %v1677, %v226
    %v1682 = vmul.f32 %v1680, %v226
    %v1683 = vsub.f32 %v1671, %v1681
    %v1684 = vsub.f32 %v1672, %v1682
    %v1685 = vmul.f32 %v1683, %v1683
    %v1686 = vmul.f32 %v1684, %v1684
    %v1687 = vsel %vm219, %v1685, 0.0
    %1688 = vadd.xlane.f32.xlu0 %v1687
    %v1689 = vpop.xlane.xlu0 %1688
    %v1690 = vsel %vm219, %v1686, 0.0
    %1691 = vadd.xlane.f32.xlu0 %v1690
    %v1692 = vpop.xlane.xlu0 %1691
    %v1693 = vmul.f32 %v1689, %v226
    %v1694 = vmul.f32 %v1692, %v226
    %v1695 = vadd.f32 %v1693, 1e-12
    %v1696 = vadd.f32 %v1694, 1e-12
    %v1697 = vrsqrt.pop %v1695
    %v1698 = vrsqrt.pop %v1696
    %v1699 = vmul.f32 %v1683, %v1697
    %v1700 = vmul.f32 %v1684, %v1698
    %v1701 = vlaneseq
    %v1702 = vshrl.u32 %v1701, 7
    %v1703 = vsub.s32 0, %v1702
    %v1704 = vrot.slane %v1673, %v1703
    %v1705 = vmul.f32 %v1699, %v1704
    %v1706 = vmul.f32 %v1700, %v1704
    %v1707 = vlaneseq
    %v1708 = vshrl.u32 %v1707, 7
    %v1709 = vsub.s32 0, %v1708
    %v1710 = vrot.slane %v1674, %v1709
    %v1711 = vadd.f32 %v1705, %v1710
    %v1712 = vadd.f32 %v1706, %v1710
    %v1713 = vld [vmem:[#allocation8] sm:$0xf]
    %v1714 = vld [vmem:[#allocation8 + $0x4] sm:$0xf]
    %v1715 = vld [vmem:[#allocation8 + $0x8] sm:$0xf]
    %v1716 = vld [vmem:[#allocation8 + $0xc] sm:$0xf]
    %v1717 = vld [vmem:[#allocation8 + $0x10] sm:$0xf]
    %v1718 = vld [vmem:[#allocation8 + $0x14] sm:$0xf]
    %v1719 = vld [vmem:[#allocation8 + $0x18] sm:$0xf]
    %v1720 = vld [vmem:[#allocation8 + $0x1c] sm:$0xf]
    %v1721 = vld [vmem:[#allocation8 + $0x20] sm:$0xf]
    %v1722 = vld [vmem:[#allocation8 + $0x24] sm:$0xf]
    %v1723 = vld [vmem:[#allocation8 + $0x28] sm:$0xf]
    %v1724 = vld [vmem:[#allocation8 + $0x2c] sm:$0xf]
    %v1725 = vpack.c.bf16 %v1712, %v1711
    %v1726 = vld [vmem:[%s7 + $0x19] sm:$0x1]
    %v1727 = vlaneseq
    %v1728 = vshrl.u32 %v1727, 7
    %v1729 = vsub.s32 0, %v1728
    %v1730 = vrot.slane %v1726, %v1729
    %v1735 = vunpack.c.l.b16 %v1713
    %v1736 = vunpack.c.l.b16 %v1714
    %v1737 = vunpack.c.l.b16 %v1715
    %v1738 = vunpack.c.l.b16 %v1716
    %v1739 = vpack.c.b16 %v1736, %v1735
    %v1740 = vpack.c.b16 %v1738, %v1737
    %v1744 = vsel %vm219, %v1725, 0
    %1746 = vmatprep.subr.bf16.mxu0 0
    %1747 = vmatpush1.bf16.msra.mxu0 %v1739
    %1748 = vmatprep.subr.bf16.mxu0 0
    %1749 = vmatpush1.bf16.msra.mxu0 %v1740
    %1750 = vmatprep.subr.bf16.mxu0 0
    %1751 = vmatpush1.bf16.msra.mxu0 0
    %1752 = vmatprep.subr.bf16.mxu0 0
    %1753 = vmatpush1.bf16.msra.mxu0 0
    %1754 = vmatprep.subr.bf16.mxu0 0
    %1755 = vmatpush1.bf16.msra.mxu0 0
    %1756 = vmatprep.subr.bf16.mxu0 0
    %1757 = vmatpush1.bf16.msra.mxu0 0
    %1758 = vmatprep.subr.bf16.mxu0 0
    %1759 = vmatpush1.bf16.msra.mxu0 0
    %1760 = vmatprep.subr.bf16.mxu0 0
    %1761 = vmatpush1.bf16.msra.mxu0 0
    %1762 = vmatprep.subr.bf16.mxu0 0
    %1763 = vmatpush1.bf16.msra.mxu0 0
    %1764 = vmatprep.subr.bf16.mxu0 0
    %1765 = vmatpush1.bf16.msra.mxu0 0
    %1766 = vmatprep.subr.bf16.mxu0 0
    %1767 = vmatpush1.bf16.msra.mxu0 0
    %1768 = vmatprep.subr.bf16.mxu0 0
    %1769 = vmatpush1.bf16.msra.mxu0 0
    %1770 = vmatprep.subr.bf16.mxu0 0
    %1771 = vmatpush1.bf16.msra.mxu0 0
    %1772 = vmatprep.subr.bf16.mxu0 0
    %1773 = vmatpush1.bf16.msra.mxu0 0
    %1774 = vmatprep.subr.bf16.mxu0 0
    %1775 = vmatpush1.bf16.msra.mxu0 0
    %1776 = vmatprep.subr.bf16.mxu0 0
    %1777 = vmatpush1.bf16.msra.mxu0 0
    %1778 = vmatprep.mubr.bf16.mxu0 0
    %1779 = vmatmul.mubr.bf16.gmra.mrb[0].mxu0 %v1744
    %v1780 = vpop.f32.mrb[0].mxu0
    %v1781 = vadd.f32 %v1730, %v1780
    %v1782 = vpop.f32.mrb[0].mxu0
    %v1783 = vpop.f32.mrb[0].mxu0
    %v1784 = vadd.f32 %v1730, %v1783
    %v1785 = vpop.f32.mrb[0].mxu0
    %1786 = vdwg.mxu0
    %v1787 = vmul.f32 %v1781, 0.5
    %v1788 = vmul.f32 %v1784, 0.5
    %v1789 = vmul.f32 %v1781, 0.044715
    %v1790 = vmul.f32 %v1784, 0.044715
    %v1791 = vmul.f32 %v1789, %v1781
    %v1792 = vmul.f32 %v1790, %v1784
    %v1793 = vmul.f32 %v1791, %v1781
    %v1794 = vmul.f32 %v1792, %v1784
    %v1795 = vadd.f32 %v1781, %v1793
    %v1796 = vadd.f32 %v1784, %v1794
    %v1797 = vmul.f32 %v1795, 0.7978846
    %v1798 = vmul.f32 %v1796, 0.7978846
    %v1799 = vtanh.pop %v1797
    %v1800 = vtanh.pop %v1798
    %v1801 = vadd.f32 %v1799, 1.0
    %v1802 = vadd.f32 %v1800, 1.0
    %v1803 = vmul.f32 %v1787, %v1801
    %v1804 = vmul.f32 %v1788, %v1802
    %v1805 = vpack.c.bf16 %v1804, %v1803
    %v1806 = vld [vmem:[%s7 + $0x1a] sm:$0x1]
    %v1807 = vlaneseq
    %v1808 = vshrl.u32 %v1807, 7
    %v1809 = vsub.s32 0, %v1808
    %v1810 = vrot.slane %v1806, %v1809
    %v1819 = vunpack.c.l.b16 %v1717
    %v1820 = vunpack.c.l.b16 %v1718
    %v1821 = vunpack.c.l.b16 %v1719
    %v1822 = vunpack.c.l.b16 %v1720
    %v1823 = vunpack.c.l.b16 %v1721
    %v1824 = vunpack.c.l.b16 %v1722
    %v1825 = vunpack.c.l.b16 %v1723
    %v1826 = vunpack.c.l.b16 %v1724
    %v1827 = vpack.c.b16 %v1820, %v1819
    %v1828 = vpack.c.b16 %v1822, %v1821
    %v1829 = vpack.c.b16 %v1824, %v1823
    %v1830 = vpack.c.b16 %v1826, %v1825
    %vm1835 = vcmask 523264
    %v1837 = vsel %vm1835, %v1805, 0
    %1839 = vmatprep.subr.bf16.mxu0 0
    %1840 = vmatpush1.bf16.msra.mxu0 %v1827
    %1841 = vmatprep.subr.bf16.mxu0 0
    %1842 = vmatpush1.bf16.msra.mxu0 %v1828
    %1843 = vmatprep.subr.bf16.mxu0 0
    %1844 = vmatpush1.bf16.msra.mxu0 %v1829
    %1845 = vmatprep.subr.bf16.mxu0 0
    %1846 = vmatpush1.bf16.msra.mxu0 %v1830
    %1847 = vmatprep.subr.bf16.mxu0 0
    %1848 = vmatpush1.bf16.msra.mxu0 0
    %1849 = vmatprep.subr.bf16.mxu0 0
    %1850 = vmatpush1.bf16.msra.mxu0 0
    %1851 = vmatprep.subr.bf16.mxu0 0
    %1852 = vmatpush1.bf16.msra.mxu0 0
    %1853 = vmatprep.subr.bf16.mxu0 0
    %1854 = vmatpush1.bf16.msra.mxu0 0
    %1855 = vmatprep.subr.bf16.mxu0 0
    %1856 = vmatpush1.bf16.msra.mxu0 0
    %1857 = vmatprep.subr.bf16.mxu0 0
    %1858 = vmatpush1.bf16.msra.mxu0 0
    %1859 = vmatprep.subr.bf16.mxu0 0
    %1860 = vmatpush1.bf16.msra.mxu0 0
    %1861 = vmatprep.subr.bf16.mxu0 0
    %1862 = vmatpush1.bf16.msra.mxu0 0
    %1863 = vmatprep.subr.bf16.mxu0 0
    %1864 = vmatpush1.bf16.msra.mxu0 0
    %1865 = vmatprep.subr.bf16.mxu0 0
    %1866 = vmatpush1.bf16.msra.mxu0 0
    %1867 = vmatprep.subr.bf16.mxu0 0
    %1868 = vmatpush1.bf16.msra.mxu0 0
    %1869 = vmatprep.subr.bf16.mxu0 0
    %1870 = vmatpush1.bf16.msra.mxu0 0
    %1871 = vmatprep.mubr.bf16.mxu0 0
    %1872 = vmatmul.mubr.bf16.gmra.mrb[0].mxu0 %v1837
    %v1873 = vpop.f32.mrb[0].mxu0
    %v1874 = vadd.f32 %v1810, %v1873
    %v1875 = vpop.f32.mrb[0].mxu0
    %v1876 = vpop.f32.mrb[0].mxu0
    %v1877 = vadd.f32 %v1810, %v1876
    %v1878 = vpop.f32.mrb[0].mxu0
    %1879 = vdwg.mxu0
    %v1880 = vadd.f32 %v1874, %v1711
    %v1881 = vadd.f32 %v1877, %v1712
    %v1882 = vld [vmem:[%s7 + $0x1b] sm:$0x1]
    %v1883 = vld [vmem:[%s7 + $0x1c] sm:$0x1]
    %v1884 = vsel %vm219, %v1880, 0.0
    %1885 = vadd.xlane.f32.xlu0 %v1884
    %v1886 = vpop.xlane.xlu0 %1885
    %v1887 = vsel %vm219, %v1881, 0.0
    %1888 = vadd.xlane.f32.xlu0 %v1887
    %v1889 = vpop.xlane.xlu0 %1888
    %v1890 = vmul.f32 %v1886, %v226
    %v1891 = vmul.f32 %v1889, %v226
    %v1892 = vsub.f32 %v1880, %v1890
    %v1893 = vsub.f32 %v1881, %v1891
    %v1894 = vmul.f32 %v1892, %v1892
    %v1895 = vmul.f32 %v1893, %v1893
    %v1896 = vsel %vm219, %v1894, 0.0
    %1897 = vadd.xlane.f32.xlu0 %v1896
    %v1898 = vpop.xlane.xlu0 %1897
    %v1899 = vsel %vm219, %v1895, 0.0
    %1900 = vadd.xlane.f32.xlu0 %v1899
    %v1901 = vpop.xlane.xlu0 %1900
    %v1902 = vmul.f32 %v1898, %v226
    %v1903 = vmul.f32 %v1901, %v226
    %v1904 = vadd.f32 %v1902, 1e-12
    %v1905 = vadd.f32 %v1903, 1e-12
    %v1906 = vrsqrt.pop %v1904
    %v1907 = vrsqrt.pop %v1905
    %v1908 = vmul.f32 %v1892, %v1906
    %v1909 = vmul.f32 %v1893, %v1907
    %v1910 = vlaneseq
    %v1911 = vshrl.u32 %v1910, 7
    %v1912 = vsub.s32 0, %v1911
    %v1913 = vrot.slane %v1882, %v1912
    %v1914 = vmul.f32 %v1908, %v1913
    %v1915 = vmul.f32 %v1909, %v1913
    %v1916 = vlaneseq
    %v1917 = vshrl.u32 %v1916, 7
    %v1918 = vsub.s32 0, %v1917
    %v1919 = vrot.slane %v1883, %v1918
    %v1920 = vadd.f32 %v1914, %v1919
    %v1921 = vadd.f32 %v1915, %v1919
    %v1922 = vpack.c.bf16 %v1921, %v1920
    %s1923 = scalar_lea.vmem [#allocation5], 192
    %v1924 = vld [vmem:[%s1923] sm:$0xf]
    %v1925 = vld [vmem:[%s1923 + $0x4] sm:$0xf]
    %v1926 = vld [vmem:[%s1923 + $0x8] sm:$0xf]
    %v1927 = vld [vmem:[%s1923 + $0xc] sm:$0xf]
    %v1928 = vld [vmem:[%s1923 + $0x10] sm:$0xf]
    %v1929 = vld [vmem:[%s1923 + $0x14] sm:$0xf]
    %v1930 = vld [vmem:[%s1923 + $0x18] sm:$0xf]
    %v1931 = vld [vmem:[%s1923 + $0x1c] sm:$0xf]
    %v1932 = vld [vmem:[%s1923 + $0x20] sm:$0xf]
    %v1933 = vld [vmem:[%s1923 + $0x24] sm:$0xf]
    %v1934 = vld [vmem:[%s1923 + $0x28] sm:$0xf]
    %v1935 = vld [vmem:[%s1923 + $0x2c] sm:$0xf]
    %v1936 = vld [vmem:[%s7 + $0x1d] sm:$0x1]
    %v1937 = vlaneseq
    %v1938 = vshrl.u32 %v1937, 7
    %v1939 = vsub.s32 0, %v1938
    %v1940 = vrot.slane %v1936, %v1939
    %v1945 = vunpack.c.l.b16 %v1924
    %v1946 = vunpack.c.l.b16 %v1925
    %v1947 = vunpack.c.l.b16 %v1926
    %v1948 = vunpack.c.l.b16 %v1927
    %v1949 = vpack.c.b16 %v1946, %v1945
    %v1950 = vpack.c.b16 %v1948, %v1947
    %v1954 = vsel %vm219, %v1922, 0
    %1956 = vmatprep.subr.bf16.mxu0 0
    %1957 = vmatpush1.bf16.msra.mxu0 %v1949
    %1958 = vmatprep.subr.bf16.mxu0 0
    %1959 = vmatpush1.bf16.msra.mxu0 %v1950
    %1960 = vmatprep.subr.bf16.mxu0 0
    %1961 = vmatpush1.bf16.msra.mxu0 0
    %1962 = vmatprep.subr.bf16.mxu0 0
    %1963 = vmatpush1.bf16.msra.mxu0 0
    %1964 = vmatprep.subr.bf16.mxu0 0
    %1965 = vmatpush1.bf16.msra.mxu0 0
    %1966 = vmatprep.subr.bf16.mxu0 0
    %1967 = vmatpush1.bf16.msra.mxu0 0
    %1968 = vmatprep.subr.bf16.mxu0 0
    %1969 = vmatpush1.bf16.msra.mxu0 0
    %1970 = vmatprep.subr.bf16.mxu0 0
    %1971 = vmatpush1.bf16.msra.mxu0 0
    %1972 = vmatprep.subr.bf16.mxu0 0
    %1973 = vmatpush1.bf16.msra.mxu0 0
    %1974 = vmatprep.subr.bf16.mxu0 0
    %1975 = vmatpush1.bf16.msra.mxu0 0
    %1976 = vmatprep.subr.bf16.mxu0 0
    %1977 = vmatpush1.bf16.msra.mxu0 0
    %1978 = vmatprep.subr.bf16.mxu0 0
    %1979 = vmatpush1.bf16.msra.mxu0 0
    %1980 = vmatprep.subr.bf16.mxu0 0
    %1981 = vmatpush1.bf16.msra.mxu0 0
    %1982 = vmatprep.subr.bf16.mxu0 0
    %1983 = vmatpush1.bf16.msra.mxu0 0
    %1984 = vmatprep.subr.bf16.mxu0 0
    %1985 = vmatpush1.bf16.msra.mxu0 0
    %1986 = vmatprep.subr.bf16.mxu0 0
    %1987 = vmatpush1.bf16.msra.mxu0 0
    %1988 = vmatprep.mubr.bf16.mxu0 0
    %1989 = vmatmul.mubr.bf16.gmra.mrb[0].mxu0 %v1954
    %v1990 = vpop.f32.mrb[0].mxu0
    %v1991 = vadd.f32 %v1940, %v1990
    %v1992 = vpop.f32.mrb[0].mxu0
    %v1993 = vpop.f32.mrb[0].mxu0
    %v1994 = vadd.f32 %v1940, %v1993
    %v1995 = vpop.f32.mrb[0].mxu0
    %1996 = vdwg.mxu0
    %v2001 = vunpack.c.l.b16 %v1928
    %v2002 = vunpack.c.l.b16 %v1929
    %v2003 = vunpack.c.l.b16 %v1930
    %v2004 = vunpack.c.l.b16 %v1931
    %v2005 = vpack.c.b16 %v2002, %v2001
    %v2006 = vpack.c.b16 %v2004, %v2003
    %2009 = vmatprep.subr.bf16.mxu0 0
    %2010 = vmatpush1.bf16.msra.mxu0 %v2005
    %2011 = vmatprep.subr.bf16.mxu0 0
    %2012 = vmatpush1.bf16.msra.mxu0 %v2006
    %2013 = vmatprep.subr.bf16.mxu0 0
    %2014 = vmatpush1.bf16.msra.mxu0 0
    %2015 = vmatprep.subr.bf16.mxu0 0
    %2016 = vmatpush1.bf16.msra.mxu0 0
    %2017 = vmatprep.subr.bf16.mxu0 0
    %2018 = vmatpush1.bf16.msra.mxu0 0
    %2019 = vmatprep.subr.bf16.mxu0 0
    %2020 = vmatpush1.bf16.msra.mxu0 0
    %2021 = vmatprep.subr.bf16.mxu0 0
    %2022 = vmatpush1.bf16.msra.mxu0 0
    %2023 = vmatprep.subr.bf16.mxu0 0
    %2024 = vmatpush1.bf16.msra.mxu0 0
    %2025 = vmatprep.subr.bf16.mxu0 0
    %2026 = vmatpush1.bf16.msra.mxu0 0
    %2027 = vmatprep.subr.bf16.mxu0 0
    %2028 = vmatpush1.bf16.msra.mxu0 0
    %2029 = vmatprep.subr.bf16.mxu0 0
    %2030 = vmatpush1.bf16.msra.mxu0 0
    %2031 = vmatprep.subr.bf16.mxu0 0
    %2032 = vmatpush1.bf16.msra.mxu0 0
    %2033 = vmatprep.subr.bf16.mxu0 0
    %2034 = vmatpush1.bf16.msra.mxu0 0
    %2035 = vmatprep.subr.bf16.mxu0 0
    %2036 = vmatpush1.bf16.msra.mxu0 0
    %2037 = vmatprep.subr.bf16.mxu0 0
    %2038 = vmatpush1.bf16.msra.mxu0 0
    %2039 = vmatprep.subr.bf16.mxu0 0
    %2040 = vmatpush1.bf16.msra.mxu0 0
    %2041 = vmatprep.mubr.bf16.mxu0 0
    %2042 = vmatmul.mubr.bf16.gmra.mrb[0].mxu0 %v1954
    %v2043 = vpop.f32.mrb[0].mxu0
    %v2044 = vadd.f32 0.0, %v2043
    %v2045 = vpop.f32.mrb[0].mxu0
    %v2046 = vpop.f32.mrb[0].mxu0
    %v2047 = vadd.f32 0.0, %v2046
    %v2048 = vpop.f32.mrb[0].mxu0
    %2049 = vdwg.mxu0
    %v2054 = vunpack.c.l.b16 %v1932
    %v2055 = vunpack.c.l.b16 %v1933
    %v2056 = vunpack.c.l.b16 %v1934
    %v2057 = vunpack.c.l.b16 %v1935
    %v2058 = vpack.c.b16 %v2055, %v2054
    %v2059 = vpack.c.b16 %v2057, %v2056
    %2062 = vmatprep.subr.bf16.mxu0 0
    %2063 = vmatpush1.bf16.msra.mxu0 %v2058
    %2064 = vmatprep.subr.bf16.mxu0 0
    %2065 = vmatpush1.bf16.msra.mxu0 %v2059
    %2066 = vmatprep.subr.bf16.mxu0 0
    %2067 = vmatpush1.bf16.msra.mxu0 0
    %2068 = vmatprep.subr.bf16.mxu0 0
    %2069 = vmatpush1.bf16.msra.mxu0 0
    %2070 = vmatprep.subr.bf16.mxu0 0
    %2071 = vmatpush1.bf16.msra.mxu0 0
    %2072 = vmatprep.subr.bf16.mxu0 0
    %2073 = vmatpush1.bf16.msra.mxu0 0
    %2074 = vmatprep.subr.bf16.mxu0 0
    %2075 = vmatpush1.bf16.msra.mxu0 0
    %2076 = vmatprep.subr.bf16.mxu0 0
    %2077 = vmatpush1.bf16.msra.mxu0 0
    %2078 = vmatprep.subr.bf16.mxu0 0
    %2079 = vmatpush1.bf16.msra.mxu0 0
    %2080 = vmatprep.subr.bf16.mxu0 0
    %2081 = vmatpush1.bf16.msra.mxu0 0
    %2082 = vmatprep.subr.bf16.mxu0 0
    %2083 = vmatpush1.bf16.msra.mxu0 0
    %2084 = vmatprep.subr.bf16.mxu0 0
    %2085 = vmatpush1.bf16.msra.mxu0 0
    %2086 = vmatprep.subr.bf16.mxu0 0
    %2087 = vmatpush1.bf16.msra.mxu0 0
    %2088 = vmatprep.subr.bf16.mxu0 0
    %2089 = vmatpush1.bf16.msra.mxu0 0
    %2090 = vmatprep.subr.bf16.mxu0 0
    %2091 = vmatpush1.bf16.msra.mxu0 0
    %2092 = vmatprep.subr.bf16.mxu0 0
    %2093 = vmatpush1.bf16.msra.mxu0 0
    %2094 = vmatprep.mubr.bf16.mxu0 0
    %2095 = vmatmul.mubr.bf16.gmra.mrb[0].mxu0 %v1954
    %v2096 = vpop.f32.mrb[0].mxu0
    %v2097 = vadd.f32 0.0, %v2096
    %v2098 = vpop.f32.mrb[0].mxu0
    %v2099 = vpop.f32.mrb[0].mxu0
    %v2100 = vadd.f32 0.0, %v2099
    %v2101 = vpop.f32.mrb[0].mxu0
    %2102 = vdwg.mxu0
    %v2103 = vpack.c.bf16 %v1994, %v1991
    %v2104 = vpack.c.bf16 %v2047, %v2044
    %v2106 = vsel %vm461, %v2103, 0
    %v2109 = vsel %vm461, %v2104, 0
    %2111 = vmatprep.subr.bf16.mxu0 0
    %2112 = vmatpush1.bf16.xpose.msra.mxu0 %v2109
    %2113 = vmatprep.subr.bf16.mxu0 0
    %2114 = vmatpush1.bf16.xpose.msra.mxu0 0
    %2115 = vmatprep.subr.bf16.mxu0 0
    %2116 = vmatpush1.bf16.xpose.msra.mxu0 0
    %2117 = vmatprep.subr.bf16.mxu0 0
    %2118 = vmatpush1.bf16.xpose.msra.mxu0 0
    %2119 = vmatprep.subr.bf16.mxu0 0
    %2120 = vmatpush1.bf16.xpose.msra.mxu0 0
    %2121 = vmatprep.subr.bf16.mxu0 0
    %2122 = vmatpush1.bf16.xpose.msra.mxu0 0
    %2123 = vmatprep.subr.bf16.mxu0 0
    %2124 = vmatpush1.bf16.xpose.msra.mxu0 0
    %2125 = vmatprep.subr.bf16.mxu0 0
    %2126 = vmatpush1.bf16.xpose.msra.mxu0 0
    %2127 = vmatprep.subr.bf16.mxu0 0
    %2128 = vmatpush1.bf16.xpose.msra.mxu0 0
    %2129 = vmatprep.subr.bf16.mxu0 0
    %2130 = vmatpush1.bf16.xpose.msra.mxu0 0
    %2131 = vmatprep.subr.bf16.mxu0 0
    %2132 = vmatpush1.bf16.xpose.msra.mxu0 0
    %2133 = vmatprep.subr.bf16.mxu0 0
    %2134 = vmatpush1.bf16.xpose.msra.mxu0 0
    %2135 = vmatprep.subr.bf16.mxu0 0
    %2136 = vmatpush1.bf16.xpose.msra.mxu0 0
    %2137 = vmatprep.subr.bf16.mxu0 0
    %2138 = vmatpush1.bf16.xpose.msra.mxu0 0
    %2139 = vmatprep.subr.bf16.mxu0 0
    %2140 = vmatpush1.bf16.xpose.msra.mxu0 0
    %2141 = vmatprep.subr.bf16.mxu0 0
    %2142 = vmatpush1.bf16.xpose.msra.mxu0 0
    %2143 = vmatprep.mubr.bf16.mxu0 0
    %2144 = vmatmul.mubr.bf16.gmra.mrb[0].mxu0 %v2106
    %v2145 = vpop.f32.mrb[0].mxu0
    %v2146 = vadd.f32 %v277, %v2145
    %v2147 = vpop.f32.mrb[0].mxu0
    %v2148 = vpop.f32.mrb[0].mxu0
    %v2149 = vadd.f32 %v278, %v2148
    %v2150 = vpop.f32.mrb[0].mxu0
    %2151 = vdwg.mxu0
    %v2152 = vsel %vm509, %v2146, -inf
    %2153 = vmax.xlane.f32.xlu0 %v2152
    %v2154 = vpop.xlane.xlu0 %2153
    %v2155 = vsel %vm509, %v2149, -inf
    %2156 = vmax.xlane.f32.xlu0 %v2155
    %v2157 = vpop.xlane.xlu0 %2156
    %v2158 = vsub.f32 %v2146, %v2154
    %v2159 = vsub.f32 %v2149, %v2157
    %v2160 = vmul.f32 %v2158, 1.442695
    %v2161 = vpow.pop %v2160
    %v2162 = vmul.f32 %v2159, 1.442695
    %v2163 = vpow.pop %v2162
    %v2164 = vsel %vm509, %v2161, 0.0
    %2165 = vadd.xlane.f32.xlu0 %v2164
    %v2166 = vpop.xlane.xlu0 %2165
    %v2167 = vsel %vm509, %v2163, 0.0
    %2168 = vadd.xlane.f32.xlu0 %v2167
    %v2169 = vpop.xlane.xlu0 %2168
    %v2170 = vrcp.pop %v2166
    %v2171 = vrcp.pop %v2169
    %v2172 = vmul.f32 %v2161, %v2170
    %v2173 = vmul.f32 %v2163, %v2171
    %v2174 = vpack.c.bf16 %v2173, %v2172
    %v2175 = vpack.c.bf16 %v2100, %v2097
    %v2177 = vsel %vm509, %v2174, 0
    %2179 = vmatprep.subr.bf16.mxu0 0
    %2180 = vmatpush1.bf16.msra.mxu0 %v2175
    %2181 = vmatprep.subr.bf16.mxu0 0
    %2182 = vmatpush1.bf16.msra.mxu0 0
    %2183 = vmatprep.subr.bf16.mxu0 0
    %2184 = vmatpush1.bf16.msra.mxu0 0
    %2185 = vmatprep.subr.bf16.mxu0 0
    %2186 = vmatpush1.bf16.msra.mxu0 0
    %2187 = vmatprep.subr.bf16.mxu0 0
    %2188 = vmatpush1.bf16.msra.mxu0 0
    %2189 = vmatprep.subr.bf16.mxu0 0
    %2190 = vmatpush1.bf16.msra.mxu0 0
    %2191 = vmatprep.subr.bf16.mxu0 0
    %2192 = vmatpush1.bf16.msra.mxu0 0
    %2193 = vmatprep.subr.bf16.mxu0 0
    %2194 = vmatpush1.bf16.msra.mxu0 0
    %2195 = vmatprep.subr.bf16.mxu0 0
    %2196 = vmatpush1.bf16.msra.mxu0 0
    %2197 = vmatprep.subr.bf16.mxu0 0
    %2198 = vmatpush1.bf16.msra.mxu0 0
    %2199 = vmatprep.subr.bf16.mxu0 0
    %2200 = vmatpush1.bf16.msra.mxu0 0
    %2201 = vmatprep.subr.bf16.mxu0 0
    %2202 = vmatpush1.bf16.msra.mxu0 0
    %2203 = vmatprep.subr.bf16.mxu0 0
    %2204 = vmatpush1.bf16.msra.mxu0 0
    %2205 = vmatprep.subr.bf16.mxu0 0
    %2206 = vmatpush1.bf16.msra.mxu0 0
    %2207 = vmatprep.subr.bf16.mxu0 0
    %2208 = vmatpush1.bf16.msra.mxu0 0
    %2209 = vmatprep.subr.bf16.mxu0 0
    %2210 = vmatpush1.bf16.msra.mxu0 0
    %2211 = vmatprep.mubr.bf16.mxu0 0
    %2212 = vmatmul.mubr.bf16.gmra.mrb[0].mxu0 %v2177
    %v2213 = vpop.f32.mrb[0].mxu0
    %v2214 = vadd.f32 0.0, %v2213
    %v2215 = vpop.f32.mrb[0].mxu0
    %v2216 = vpop.f32.mrb[0].mxu0
    %v2217 = vadd.f32 0.0, %v2216
    %v2218 = vpop.f32.mrb[0].mxu0
    %2219 = vdwg.mxu0
    %v2220 = vpack.c.bf16 %v2217, %v2214
    %s2221 = scalar_lea.vmem [#allocation7], 16
    %v2222 = vld [vmem:[%s2221] sm:$0xf]
    %s2223 = scalar_lea.vmem [#allocation5], 240
    %v2224 = vld [vmem:[%s2223] sm:$0xf]
    %v2225 = vld [vmem:[%s2223 + $0x4] sm:$0xf]
    %v2226 = vld [vmem:[%s2223 + $0x8] sm:$0xf]
    %v2227 = vld [vmem:[%s2223 + $0xc] sm:$0xf]
    %v2228 = vld [vmem:[%s2223 + $0x10] sm:$0xf]
    %v2229 = vld [vmem:[%s2223 + $0x14] sm:$0xf]
    %v2230 = vld [vmem:[%s2223 + $0x18] sm:$0xf]
    %v2231 = vld [vmem:[%s2223 + $0x1c] sm:$0xf]
    %v2232 = vld [vmem:[%s2223 + $0x20] sm:$0xf]
    %v2233 = vld [vmem:[%s2223 + $0x24] sm:$0xf]
    %v2234 = vld [vmem:[%s2223 + $0x28] sm:$0xf]
    %v2235 = vld [vmem:[%s2223 + $0x2c] sm:$0xf]
    %v2236 = vld [vmem:[%s7 + $0x1e] sm:$0x1]
    %v2237 = vlaneseq
    %v2238 = vshrl.u32 %v2237, 7
    %v2239 = vsub.s32 0, %v2238
    %v2240 = vrot.slane %v2236, %v2239
    %v2245 = vunpack.c.l.b16 %v2224
    %v2246 = vunpack.c.l.b16 %v2225
    %v2247 = vunpack.c.l.b16 %v2226
    %v2248 = vunpack.c.l.b16 %v2227
    %v2249 = vpack.c.b16 %v2246, %v2245
    %v2250 = vpack.c.b16 %v2248, %v2247
    %2253 = vmatprep.subr.bf16.mxu0 0
    %2254 = vmatpush1.bf16.msra.mxu0 %v2249
    %2255 = vmatprep.subr.bf16.mxu0 0
    %2256 = vmatpush1.bf16.msra.mxu0 %v2250
    %2257 = vmatprep.subr.bf16.mxu0 0
    %2258 = vmatpush1.bf16.msra.mxu0 0
    %2259 = vmatprep.subr.bf16.mxu0 0
    %2260 = vmatpush1.bf16.msra.mxu0 0
    %2261 = vmatprep.subr.bf16.mxu0 0
    %2262 = vmatpush1.bf16.msra.mxu0 0
    %2263 = vmatprep.subr.bf16.mxu0 0
    %2264 = vmatpush1.bf16.msra.mxu0 0
    %2265 = vmatprep.subr.bf16.mxu0 0
    %2266 = vmatpush1.bf16.msra.mxu0 0
    %2267 = vmatprep.subr.bf16.mxu0 0
    %2268 = vmatpush1.bf16.msra.mxu0 0
    %2269 = vmatprep.subr.bf16.mxu0 0
    %2270 = vmatpush1.bf16.msra.mxu0 0
    %2271 = vmatprep.subr.bf16.mxu0 0
    %2272 = vmatpush1.bf16.msra.mxu0 0
    %2273 = vmatprep.subr.bf16.mxu0 0
    %2274 = vmatpush1.bf16.msra.mxu0 0
    %2275 = vmatprep.subr.bf16.mxu0 0
    %2276 = vmatpush1.bf16.msra.mxu0 0
    %2277 = vmatprep.subr.bf16.mxu0 0
    %2278 = vmatpush1.bf16.msra.mxu0 0
    %2279 = vmatprep.subr.bf16.mxu0 0
    %2280 = vmatpush1.bf16.msra.mxu0 0
    %2281 = vmatprep.subr.bf16.mxu0 0
    %2282 = vmatpush1.bf16.msra.mxu0 0
    %2283 = vmatprep.subr.bf16.mxu0 0
    %2284 = vmatpush1.bf16.msra.mxu0 0
    %2285 = vmatprep.mubr.bf16.mxu0 0
    %2286 = vmatmul.mubr.bf16.gmra.mrb[0].mxu0 %v1954
    %v2287 = vpop.f32.mrb[0].mxu0
    %v2288 = vadd.f32 %v2240, %v2287
    %v2289 = vpop.f32.mrb[0].mxu0
    %v2290 = vpop.f32.mrb[0].mxu0
    %v2291 = vadd.f32 %v2240, %v2290
    %v2292 = vpop.f32.mrb[0].mxu0
    %2293 = vdwg.mxu0
    %v2298 = vunpack.c.l.b16 %v2228
    %v2299 = vunpack.c.l.b16 %v2229
    %v2300 = vunpack.c.l.b16 %v2230
    %v2301 = vunpack.c.l.b16 %v2231
    %v2302 = vpack.c.b16 %v2299, %v2298
    %v2303 = vpack.c.b16 %v2301, %v2300
    %2306 = vmatprep.subr.bf16.mxu0 0
    %2307 = vmatpush1.bf16.msra.mxu0 %v2302
    %2308 = vmatprep.subr.bf16.mxu0 0
    %2309 = vmatpush1.bf16.msra.mxu0 %v2303
    %2310 = vmatprep.subr.bf16.mxu0 0
    %2311 = vmatpush1.bf16.msra.mxu0 0
    %2312 = vmatprep.subr.bf16.mxu0 0
    %2313 = vmatpush1.bf16.msra.mxu0 0
    %2314 = vmatprep.subr.bf16.mxu0 0
    %2315 = vmatpush1.bf16.msra.mxu0 0
    %2316 = vmatprep.subr.bf16.mxu0 0
    %2317 = vmatpush1.bf16.msra.mxu0 0
    %2318 = vmatprep.subr.bf16.mxu0 0
    %2319 = vmatpush1.bf16.msra.mxu0 0
    %2320 = vmatprep.subr.bf16.mxu0 0
    %2321 = vmatpush1.bf16.msra.mxu0 0
    %2322 = vmatprep.subr.bf16.mxu0 0
    %2323 = vmatpush1.bf16.msra.mxu0 0
    %2324 = vmatprep.subr.bf16.mxu0 0
    %2325 = vmatpush1.bf16.msra.mxu0 0
    %2326 = vmatprep.subr.bf16.mxu0 0
    %2327 = vmatpush1.bf16.msra.mxu0 0
    %2328 = vmatprep.subr.bf16.mxu0 0
    %2329 = vmatpush1.bf16.msra.mxu0 0
    %2330 = vmatprep.subr.bf16.mxu0 0
    %2331 = vmatpush1.bf16.msra.mxu0 0
    %2332 = vmatprep.subr.bf16.mxu0 0
    %2333 = vmatpush1.bf16.msra.mxu0 0
    %2334 = vmatprep.subr.bf16.mxu0 0
    %2335 = vmatpush1.bf16.msra.mxu0 0
    %2336 = vmatprep.subr.bf16.mxu0 0
    %2337 = vmatpush1.bf16.msra.mxu0 0
    %2338 = vmatprep.mubr.bf16.mxu0 0
    %2339 = vmatmul.mubr.bf16.gmra.mrb[0].mxu0 %v1954
    %v2340 = vpop.f32.mrb[0].mxu0
    %v2341 = vadd.f32 0.0, %v2340
    %v2342 = vpop.f32.mrb[0].mxu0
    %v2343 = vpop.f32.mrb[0].mxu0
    %v2344 = vadd.f32 0.0, %v2343
    %v2345 = vpop.f32.mrb[0].mxu0
    %2346 = vdwg.mxu0
    %v2351 = vunpack.c.l.b16 %v2232
    %v2352 = vunpack.c.l.b16 %v2233
    %v2353 = vunpack.c.l.b16 %v2234
    %v2354 = vunpack.c.l.b16 %v2235
    %v2355 = vpack.c.b16 %v2352, %v2351
    %v2356 = vpack.c.b16 %v2354, %v2353
    %2359 = vmatprep.subr.bf16.mxu0 0
    %2360 = vmatpush1.bf16.msra.mxu0 %v2355
    %2361 = vmatprep.subr.bf16.mxu0 0
    %2362 = vmatpush1.bf16.msra.mxu0 %v2356
    %2363 = vmatprep.subr.bf16.mxu0 0
    %2364 = vmatpush1.bf16.msra.mxu0 0
    %2365 = vmatprep.subr.bf16.mxu0 0
    %2366 = vmatpush1.bf16.msra.mxu0 0
    %2367 = vmatprep.subr.bf16.mxu0 0
    %2368 = vmatpush1.bf16.msra.mxu0 0
    %2369 = vmatprep.subr.bf16.mxu0 0
    %2370 = vmatpush1.bf16.msra.mxu0 0
    %2371 = vmatprep.subr.bf16.mxu0 0
    %2372 = vmatpush1.bf16.msra.mxu0 0
    %2373 = vmatprep.subr.bf16.mxu0 0
    %2374 = vmatpush1.bf16.msra.mxu0 0
    %2375 = vmatprep.subr.bf16.mxu0 0
    %2376 = vmatpush1.bf16.msra.mxu0 0
    %2377 = vmatprep.subr.bf16.mxu0 0
    %2378 = vmatpush1.bf16.msra.mxu0 0
    %2379 = vmatprep.subr.bf16.mxu0 0
    %2380 = vmatpush1.bf16.msra.mxu0 0
    %2381 = vmatprep.subr.bf16.mxu0 0
    %2382 = vmatpush1.bf16.msra.mxu0 0
    %2383 = vmatprep.subr.bf16.mxu0 0
    %2384 = vmatpush1.bf16.msra.mxu0 0
    %2385 = vmatprep.subr.bf16.mxu0 0
    %2386 = vmatpush1.bf16.msra.mxu0 0
    %2387 = vmatprep.subr.bf16.mxu0 0
    %2388 = vmatpush1.bf16.msra.mxu0 0
    %2389 = vmatprep.subr.bf16.mxu0 0
    %2390 = vmatpush1.bf16.msra.mxu0 0
    %2391 = vmatprep.mubr.bf16.mxu0 0
    %2392 = vmatmul.mubr.bf16.gmra.mrb[0].mxu0 %v1954
    %v2393 = vpop.f32.mrb[0].mxu0
    %v2394 = vadd.f32 0.0, %v2393
    %v2395 = vpop.f32.mrb[0].mxu0
    %v2396 = vpop.f32.mrb[0].mxu0
    %v2397 = vadd.f32 0.0, %v2396
    %v2398 = vpop.f32.mrb[0].mxu0
    %2399 = vdwg.mxu0
    %v2400 = vpack.c.bf16 %v2291, %v2288
    %v2401 = vpack.c.bf16 %v2344, %v2341
    %v2403 = vsel %vm461, %v2400, 0
    %v2406 = vsel %vm461, %v2401, 0
    %2408 = vmatprep.subr.bf16.mxu0 0
    %2409 = vmatpush1.bf16.xpose.msra.mxu0 %v2406
    %2410 = vmatprep.subr.bf16.mxu0 0
    %2411 = vmatpush1.bf16.xpose.msra.mxu0 0
    %2412 = vmatprep.subr.bf16.mxu0 0
    %2413 = vmatpush1.bf16.xpose.msra.mxu0 0
    %2414 = vmatprep.subr.bf16.mxu0 0
    %2415 = vmatpush1.bf16.xpose.msra.mxu0 0
    %2416 = vmatprep.subr.bf16.mxu0 0
    %2417 = vmatpush1.bf16.xpose.msra.mxu0 0
    %2418 = vmatprep.subr.bf16.mxu0 0
    %2419 = vmatpush1.bf16.xpose.msra.mxu0 0
    %2420 = vmatprep.subr.bf16.mxu0 0
    %2421 = vmatpush1.bf16.xpose.msra.mxu0 0
    %2422 = vmatprep.subr.bf16.mxu0 0
    %2423 = vmatpush1.bf16.xpose.msra.mxu0 0
    %2424 = vmatprep.subr.bf16.mxu0 0
    %2425 = vmatpush1.bf16.xpose.msra.mxu0 0
    %2426 = vmatprep.subr.bf16.mxu0 0
    %2427 = vmatpush1.bf16.xpose.msra.mxu0 0
    %2428 = vmatprep.subr.bf16.mxu0 0
    %2429 = vmatpush1.bf16.xpose.msra.mxu0 0
    %2430 = vmatprep.subr.bf16.mxu0 0
    %2431 = vmatpush1.bf16.xpose.msra.mxu0 0
    %2432 = vmatprep.subr.bf16.mxu0 0
    %2433 = vmatpush1.bf16.xpose.msra.mxu0 0
    %2434 = vmatprep.subr.bf16.mxu0 0
    %2435 = vmatpush1.bf16.xpose.msra.mxu0 0
    %2436 = vmatprep.subr.bf16.mxu0 0
    %2437 = vmatpush1.bf16.xpose.msra.mxu0 0
    %2438 = vmatprep.subr.bf16.mxu0 0
    %2439 = vmatpush1.bf16.xpose.msra.mxu0 0
    %2440 = vmatprep.mubr.bf16.mxu0 0
    %2441 = vmatmul.mubr.bf16.gmra.mrb[0].mxu0 %v2403
    %v2442 = vpop.f32.mrb[0].mxu0
    %v2443 = vadd.f32 %v277, %v2442
    %v2444 = vpop.f32.mrb[0].mxu0
    %v2445 = vpop.f32.mrb[0].mxu0
    %v2446 = vadd.f32 %v278, %v2445
    %v2447 = vpop.f32.mrb[0].mxu0
    %2448 = vdwg.mxu0
    %v2449 = vsel %vm509, %v2443, -inf
    %2450 = vmax.xlane.f32.xlu0 %v2449
    %v2451 = vpop.xlane.xlu0 %2450
    %v2452 = vsel %vm509, %v2446, -inf
    %2453 = vmax.xlane.f32.xlu0 %v2452
    %v2454 = vpop.xlane.xlu0 %2453
    %v2455 = vsub.f32 %v2443, %v2451
    %v2456 = vsub.f32 %v2446, %v2454
    %v2457 = vmul.f32 %v2455, 1.442695
    %v2458 = vpow.pop %v2457
    %v2459 = vmul.f32 %v2456, 1.442695
    %v2460 = vpow.pop %v2459
    %v2461 = vsel %vm509, %v2458, 0.0
    %2462 = vadd.xlane.f32.xlu0 %v2461
    %v2463 = vpop.xlane.xlu0 %2462
    %v2464 = vsel %vm509, %v2460, 0.0
    %2465 = vadd.xlane.f32.xlu0 %v2464
    %v2466 = vpop.xlane.xlu0 %2465
    %v2467 = vrcp.pop %v2463
    %v2468 = vrcp.pop %v2466
    %v2469 = vmul.f32 %v2458, %v2467
    %v2470 = vmul.f32 %v2460, %v2468
    %v2471 = vpack.c.bf16 %v2470, %v2469
    %v2472 = vpack.c.bf16 %v2397, %v2394
    %v2474 = vsel %vm509, %v2471, 0
    %2476 = vmatprep.subr.bf16.mxu0 0
    %2477 = vmatpush1.bf16.msra.mxu0 %v2472
    %2478 = vmatprep.subr.bf16.mxu0 0
    %2479 = vmatpush1.bf16.msra.mxu0 0
    %2480 = vmatprep.subr.bf16.mxu0 0
    %2481 = vmatpush1.bf16.msra.mxu0 0
    %2482 = vmatprep.subr.bf16.mxu0 0
    %2483 = vmatpush1.bf16.msra.mxu0 0
    %2484 = vmatprep.subr.bf16.mxu0 0
    %2485 = vmatpush1.bf16.msra.mxu0 0
    %2486 = vmatprep.subr.bf16.mxu0 0
    %2487 = vmatpush1.bf16.msra.mxu0 0
    %2488 = vmatprep.subr.bf16.mxu0 0
    %2489 = vmatpush1.bf16.msra.mxu0 0
    %2490 = vmatprep.subr.bf16.mxu0 0
    %2491 = vmatpush1.bf16.msra.mxu0 0
    %2492 = vmatprep.subr.bf16.mxu0 0
    %2493 = vmatpush1.bf16.msra.mxu0 0
    %2494 = vmatprep.subr.bf16.mxu0 0
    %2495 = vmatpush1.bf16.msra.mxu0 0
    %2496 = vmatprep.subr.bf16.mxu0 0
    %2497 = vmatpush1.bf16.msra.mxu0 0
    %2498 = vmatprep.subr.bf16.mxu0 0
    %2499 = vmatpush1.bf16.msra.mxu0 0
    %2500 = vmatprep.subr.bf16.mxu0 0
    %2501 = vmatpush1.bf16.msra.mxu0 0
    %2502 = vmatprep.subr.bf16.mxu0 0
    %2503 = vmatpush1.bf16.msra.mxu0 0
    %2504 = vmatprep.subr.bf16.mxu0 0
    %2505 = vmatpush1.bf16.msra.mxu0 0
    %2506 = vmatprep.subr.bf16.mxu0 0
    %2507 = vmatpush1.bf16.msra.mxu0 0
    %2508 = vmatprep.mubr.bf16.mxu0 0
    %2509 = vmatmul.mubr.bf16.gmra.mrb[0].mxu0 %v2474
    %v2510 = vpop.f32.mrb[0].mxu0
    %v2511 = vadd.f32 0.0, %v2510
    %v2512 = vpop.f32.mrb[0].mxu0
    %v2513 = vpop.f32.mrb[0].mxu0
    %v2514 = vadd.f32 0.0, %v2513
    %v2515 = vpop.f32.mrb[0].mxu0
    %2516 = vdwg.mxu0
    %v2517 = vpack.c.bf16 %v2514, %v2511
    %s2518 = scalar_lea.vmem [#allocation7], 20
    %v2519 = vld [vmem:[%s2518] sm:$0xf]
    %v2521 = vsel %vm461, %v2517, 0
    %v2524 = vsel %vm880, %v2519, 0
    %2526 = vmatprep.subr.bf16.mxu0 0
    %2527 = vmatpush1.bf16.msra.mxu0 %v2524
    %2528 = vmatprep.subr.bf16.mxu0 0
    %2529 = vmatpush1.bf16.msra.mxu0 0
    %2530 = vmatprep.subr.bf16.mxu0 0
    %2531 = vmatpush1.bf16.msra.mxu0 0
    %2532 = vmatprep.subr.bf16.mxu0 0
    %2533 = vmatpush1.bf16.msra.mxu0 0
    %2534 = vmatprep.subr.bf16.mxu0 0
    %2535 = vmatpush1.bf16.msra.mxu0 0
    %2536 = vmatprep.subr.bf16.mxu0 0
    %2537 = vmatpush1.bf16.msra.mxu0 0
    %2538 = vmatprep.subr.bf16.mxu0 0
    %2539 = vmatpush1.bf16.msra.mxu0 0
    %2540 = vmatprep.subr.bf16.mxu0 0
    %2541 = vmatpush1.bf16.msra.mxu0 0
    %2542 = vmatprep.subr.bf16.mxu0 0
    %2543 = vmatpush1.bf16.msra.mxu0 0
    %2544 = vmatprep.subr.bf16.mxu0 0
    %2545 = vmatpush1.bf16.msra.mxu0 0
    %2546 = vmatprep.subr.bf16.mxu0 0
    %2547 = vmatpush1.bf16.msra.mxu0 0
    %2548 = vmatprep.subr.bf16.mxu0 0
    %2549 = vmatpush1.bf16.msra.mxu0 0
    %2550 = vmatprep.subr.bf16.mxu0 0
    %2551 = vmatpush1.bf16.msra.mxu0 0
    %2552 = vmatprep.subr.bf16.mxu0 0
    %2553 = vmatpush1.bf16.msra.mxu0 0
    %2554 = vmatprep.subr.bf16.mxu0 0
    %2555 = vmatpush1.bf16.msra.mxu0 0
    %2556 = vmatprep.subr.bf16.mxu0 0
    %2557 = vmatpush1.bf16.msra.mxu0 0
    %2558 = vmatprep.mubr.bf16.mxu0 0
    %2559 = vmatmul.mubr.bf16.gmra.mrb[0].mxu0 %v2521
    %v2560 = vpop.f32.mrb[0].mxu0
    %v2561 = vadd.f32 0.0, %v2560
    %v2562 = vpop.f32.mrb[0].mxu0
    %v2563 = vpop.f32.mrb[0].mxu0
    %v2564 = vadd.f32 0.0, %v2563
    %v2565 = vpop.f32.mrb[0].mxu0
    %2566 = vdwg.mxu0
    %v2568 = vsel %vm461, %v2220, 0
    %v2571 = vsel %vm880, %v2222, 0
    %2573 = vmatprep.subr.bf16.mxu0 0
    %2574 = vmatpush1.bf16.msra.mxu0 %v2571
    %2575 = vmatprep.subr.bf16.mxu0 0
    %2576 = vmatpush1.bf16.msra.mxu0 0
    %2577 = vmatprep.subr.bf16.mxu0 0
    %2578 = vmatpush1.bf16.msra.mxu0 0
    %2579 = vmatprep.subr.bf16.mxu0 0
    %2580 = vmatpush1.bf16.msra.mxu0 0
    %2581 = vmatprep.subr.bf16.mxu0 0
    %2582 = vmatpush1.bf16.msra.mxu0 0
    %2583 = vmatprep.subr.bf16.mxu0 0
    %2584 = vmatpush1.bf16.msra.mxu0 0
    %2585 = vmatprep.subr.bf16.mxu0 0
    %2586 = vmatpush1.bf16.msra.mxu0 0
    %2587 = vmatprep.subr.bf16.mxu0 0
    %2588 = vmatpush1.bf16.msra.mxu0 0
    %2589 = vmatprep.subr.bf16.mxu0 0
    %2590 = vmatpush1.bf16.msra.mxu0 0
    %2591 = vmatprep.subr.bf16.mxu0 0
    %2592 = vmatpush1.bf16.msra.mxu0 0
    %2593 = vmatprep.subr.bf16.mxu0 0
    %2594 = vmatpush1.bf16.msra.mxu0 0
    %2595 = vmatprep.subr.bf16.mxu0 0
    %2596 = vmatpush1.bf16.msra.mxu0 0
    %2597 = vmatprep.subr.bf16.mxu0 0
    %2598 = vmatpush1.bf16.msra.mxu0 0
    %2599 = vmatprep.subr.bf16.mxu0 0
    %2600 = vmatpush1.bf16.msra.mxu0 0
    %2601 = vmatprep.subr.bf16.mxu0 0
    %2602 = vmatpush1.bf16.msra.mxu0 0
    %2603 = vmatprep.subr.bf16.mxu0 0
    %2604 = vmatpush1.bf16.msra.mxu0 0
    %2605 = vmatprep.mubr.bf16.mxu0 0
    %2606 = vmatmul.mubr.bf16.gmra.mrb[0].mxu0 %v2568
    %v2607 = vpop.f32.mrb[0].mxu0
    %v2608 = vadd.f32 %v2561, %v2607
    %v2609 = vpop.f32.mrb[0].mxu0
    %v2610 = vpop.f32.mrb[0].mxu0
    %v2611 = vadd.f32 %v2564, %v2610
    %v2612 = vpop.f32.mrb[0].mxu0
    %2613 = vdwg.mxu0
    %s2614 = scalar_lea.vmem [#allocation5], 288
    %v2615 = vld [vmem:[%s2614] sm:$0xf]
    %v2616 = vld [vmem:[%s2614 + $0x4] sm:$0xf]
    %v2617 = vld [vmem:[%s2614 + $0x8] sm:$0xf]
    %v2618 = vld [vmem:[%s2614 + $0xc] sm:$0xf]
    %v2619 = vld [vmem:[%s2614 + $0x10] sm:$0xf]
    %v2620 = vld [vmem:[%s2614 + $0x14] sm:$0xf]
    %v2621 = vld [vmem:[%s2614 + $0x18] sm:$0xf]
    %v2622 = vld [vmem:[%s2614 + $0x1c] sm:$0xf]
    %v2623 = vld [vmem:[%s2614 + $0x20] sm:$0xf]
    %v2624 = vld [vmem:[%s2614 + $0x24] sm:$0xf]
    %v2625 = vld [vmem:[%s2614 + $0x28] sm:$0xf]
    %v2626 = vld [vmem:[%s2614 + $0x2c] sm:$0xf]
    %v2627 = vld [vmem:[%s7 + $0x1f] sm:$0x1]
    %v2628 = vlaneseq
    %v2629 = vshrl.u32 %v2628, 7
    %v2630 = vsub.s32 0, %v2629
    %v2631 = vrot.slane %v2627, %v2630
    %v2636 = vunpack.c.l.b16 %v2615
    %v2637 = vunpack.c.l.b16 %v2616
    %v2638 = vunpack.c.l.b16 %v2617
    %v2639 = vunpack.c.l.b16 %v2618
    %v2640 = vpack.c.b16 %v2637, %v2636
    %v2641 = vpack.c.b16 %v2639, %v2638
    %2644 = vmatprep.subr.bf16.mxu0 0
    %2645 = vmatpush1.bf16.msra.mxu0 %v2640
    %2646 = vmatprep.subr.bf16.mxu0 0
    %2647 = vmatpush1.bf16.msra.mxu0 %v2641
    %2648 = vmatprep.subr.bf16.mxu0 0
    %2649 = vmatpush1.bf16.msra.mxu0 0
    %2650 = vmatprep.subr.bf16.mxu0 0
    %2651 = vmatpush1.bf16.msra.mxu0 0
    %2652 = vmatprep.subr.bf16.mxu0 0
    %2653 = vmatpush1.bf16.msra.mxu0 0
    %2654 = vmatprep.subr.bf16.mxu0 0
    %2655 = vmatpush1.bf16.msra.mxu0 0
    %2656 = vmatprep.subr.bf16.mxu0 0
    %2657 = vmatpush1.bf16.msra.mxu0 0
    %2658 = vmatprep.subr.bf16.mxu0 0
    %2659 = vmatpush1.bf16.msra.mxu0 0
    %2660 = vmatprep.subr.bf16.mxu0 0
    %2661 = vmatpush1.bf16.msra.mxu0 0
    %2662 = vmatprep.subr.bf16.mxu0 0
    %2663 = vmatpush1.bf16.msra.mxu0 0
    %2664 = vmatprep.subr.bf16.mxu0 0
    %2665 = vmatpush1.bf16.msra.mxu0 0
    %2666 = vmatprep.subr.bf16.mxu0 0
    %2667 = vmatpush1.bf16.msra.mxu0 0
    %2668 = vmatprep.subr.bf16.mxu0 0
    %2669 = vmatpush1.bf16.msra.mxu0 0
    %2670 = vmatprep.subr.bf16.mxu0 0
    %2671 = vmatpush1.bf16.msra.mxu0 0
    %2672 = vmatprep.subr.bf16.mxu0 0
    %2673 = vmatpush1.bf16.msra.mxu0 0
    %2674 = vmatprep.subr.bf16.mxu0 0
    %2675 = vmatpush1.bf16.msra.mxu0 0
    %2676 = vmatprep.mubr.bf16.mxu0 0
    %2677 = vmatmul.mubr.bf16.gmra.mrb[0].mxu0 %v1954
    %v2678 = vpop.f32.mrb[0].mxu0
    %v2679 = vadd.f32 %v2631, %v2678
    %v2680 = vpop.f32.mrb[0].mxu0
    %v2681 = vpop.f32.mrb[0].mxu0
    %v2682 = vadd.f32 %v2631, %v2681
    %v2683 = vpop.f32.mrb[0].mxu0
    %2684 = vdwg.mxu0
    %v2689 = vunpack.c.l.b16 %v2619
    %v2690 = vunpack.c.l.b16 %v2620
    %v2691 = vunpack.c.l.b16 %v2621
    %v2692 = vunpack.c.l.b16 %v2622
    %v2693 = vpack.c.b16 %v2690, %v2689
    %v2694 = vpack.c.b16 %v2692, %v2691
    %2697 = vmatprep.subr.bf16.mxu0 0
    %2698 = vmatpush1.bf16.msra.mxu0 %v2693
    %2699 = vmatprep.subr.bf16.mxu0 0
    %2700 = vmatpush1.bf16.msra.mxu0 %v2694
    %2701 = vmatprep.subr.bf16.mxu0 0
    %2702 = vmatpush1.bf16.msra.mxu0 0
    %2703 = vmatprep.subr.bf16.mxu0 0
    %2704 = vmatpush1.bf16.msra.mxu0 0
    %2705 = vmatprep.subr.bf16.mxu0 0
    %2706 = vmatpush1.bf16.msra.mxu0 0
    %2707 = vmatprep.subr.bf16.mxu0 0
    %2708 = vmatpush1.bf16.msra.mxu0 0
    %2709 = vmatprep.subr.bf16.mxu0 0
    %2710 = vmatpush1.bf16.msra.mxu0 0
    %2711 = vmatprep.subr.bf16.mxu0 0
    %2712 = vmatpush1.bf16.msra.mxu0 0
    %2713 = vmatprep.subr.bf16.mxu0 0
    %2714 = vmatpush1.bf16.msra.mxu0 0
    %2715 = vmatprep.subr.bf16.mxu0 0
    %2716 = vmatpush1.bf16.msra.mxu0 0
    %2717 = vmatprep.subr.bf16.mxu0 0
    %2718 = vmatpush1.bf16.msra.mxu0 0
    %2719 = vmatprep.subr.bf16.mxu0 0
    %2720 = vmatpush1.bf16.msra.mxu0 0
    %2721 = vmatprep.subr.bf16.mxu0 0
    %2722 = vmatpush1.bf16.msra.mxu0 0
    %2723 = vmatprep.subr.bf16.mxu0 0
    %2724 = vmatpush1.bf16.msra.mxu0 0
    %2725 = vmatprep.subr.bf16.mxu0 0
    %2726 = vmatpush1.bf16.msra.mxu0 0
    %2727 = vmatprep.subr.bf16.mxu0 0
    %2728 = vmatpush1.bf16.msra.mxu0 0
    %2729 = vmatprep.mubr.bf16.mxu0 0
    %2730 = vmatmul.mubr.bf16.gmra.mrb[0].mxu0 %v1954
    %v2731 = vpop.f32.mrb[0].mxu0
    %v2732 = vadd.f32 0.0, %v2731
    %v2733 = vpop.f32.mrb[0].mxu0
    %v2734 = vpop.f32.mrb[0].mxu0
    %v2735 = vadd.f32 0.0, %v2734
    %v2736 = vpop.f32.mrb[0].mxu0
    %2737 = vdwg.mxu0
    %v2742 = vunpack.c.l.b16 %v2623
    %v2743 = vunpack.c.l.b16 %v2624
    %v2744 = vunpack.c.l.b16 %v2625
    %v2745 = vunpack.c.l.b16 %v2626
    %v2746 = vpack.c.b16 %v2743, %v2742
    %v2747 = vpack.c.b16 %v2745, %v2744
    %2750 = vmatprep.subr.bf16.mxu0 0
    %2751 = vmatpush1.bf16.msra.mxu0 %v2746
    %2752 = vmatprep.subr.bf16.mxu0 0
    %2753 = vmatpush1.bf16.msra.mxu0 %v2747
    %2754 = vmatprep.subr.bf16.mxu0 0
    %2755 = vmatpush1.bf16.msra.mxu0 0
    %2756 = vmatprep.subr.bf16.mxu0 0
    %2757 = vmatpush1.bf16.msra.mxu0 0
    %2758 = vmatprep.subr.bf16.mxu0 0
    %2759 = vmatpush1.bf16.msra.mxu0 0
    %2760 = vmatprep.subr.bf16.mxu0 0
    %2761 = vmatpush1.bf16.msra.mxu0 0
    %2762 = vmatprep.subr.bf16.mxu0 0
    %2763 = vmatpush1.bf16.msra.mxu0 0
    %2764 = vmatprep.subr.bf16.mxu0 0
    %2765 = vmatpush1.bf16.msra.mxu0 0
    %2766 = vmatprep.subr.bf16.mxu0 0
    %2767 = vmatpush1.bf16.msra.mxu0 0
    %2768 = vmatprep.subr.bf16.mxu0 0
    %2769 = vmatpush1.bf16.msra.mxu0 0
    %2770 = vmatprep.subr.bf16.mxu0 0
    %2771 = vmatpush1.bf16.msra.mxu0 0
    %2772 = vmatprep.subr.bf16.mxu0 0
    %2773 = vmatpush1.bf16.msra.mxu0 0
    %2774 = vmatprep.subr.bf16.mxu0 0
    %2775 = vmatpush1.bf16.msra.mxu0 0
    %2776 = vmatprep.subr.bf16.mxu0 0
    %2777 = vmatpush1.bf16.msra.mxu0 0
    %2778 = vmatprep.subr.bf16.mxu0 0
    %2779 = vmatpush1.bf16.msra.mxu0 0
    %2780 = vmatprep.subr.bf16.mxu0 0
    %2781 = vmatpush1.bf16.msra.mxu0 0
    %2782 = vmatprep.mubr.bf16.mxu0 0
    %2783 = vmatmul.mubr.bf16.gmra.mrb[0].mxu0 %v1954
    %v2784 = vpop.f32.mrb[0].mxu0
    %v2785 = vadd.f32 0.0, %v2784
    %v2786 = vpop.f32.mrb[0].mxu0
    %v2787 = vpop.f32.mrb[0].mxu0
    %v2788 = vadd.f32 0.0, %v2787
    %v2789 = vpop.f32.mrb[0].mxu0
    %2790 = vdwg.mxu0
    %v2791 = vpack.c.bf16 %v2682, %v2679
    %v2792 = vpack.c.bf16 %v2735, %v2732
    %v2794 = vsel %vm461, %v2791, 0
    %v2797 = vsel %vm461, %v2792, 0
    %2799 = vmatprep.subr.bf16.mxu0 0
    %2800 = vmatpush1.bf16.xpose.msra.mxu0 %v2797
    %2801 = vmatprep.subr.bf16.mxu0 0
    %2802 = vmatpush1.bf16.xpose.msra.mxu0 0
    %2803 = vmatprep.subr.bf16.mxu0 0
    %2804 = vmatpush1.bf16.xpose.msra.mxu0 0
    %2805 = vmatprep.subr.bf16.mxu0 0
    %2806 = vmatpush1.bf16.xpose.msra.mxu0 0
    %2807 = vmatprep.subr.bf16.mxu0 0
    %2808 = vmatpush1.bf16.xpose.msra.mxu0 0
    %2809 = vmatprep.subr.bf16.mxu0 0
    %2810 = vmatpush1.bf16.xpose.msra.mxu0 0
    %2811 = vmatprep.subr.bf16.mxu0 0
    %2812 = vmatpush1.bf16.xpose.msra.mxu0 0
    %2813 = vmatprep.subr.bf16.mxu0 0
    %2814 = vmatpush1.bf16.xpose.msra.mxu0 0
    %2815 = vmatprep.subr.bf16.mxu0 0
    %2816 = vmatpush1.bf16.xpose.msra.mxu0 0
    %2817 = vmatprep.subr.bf16.mxu0 0
    %2818 = vmatpush1.bf16.xpose.msra.mxu0 0
    %2819 = vmatprep.subr.bf16.mxu0 0
    %2820 = vmatpush1.bf16.xpose.msra.mxu0 0
    %2821 = vmatprep.subr.bf16.mxu0 0
    %2822 = vmatpush1.bf16.xpose.msra.mxu0 0
    %2823 = vmatprep.subr.bf16.mxu0 0
    %2824 = vmatpush1.bf16.xpose.msra.mxu0 0
    %2825 = vmatprep.subr.bf16.mxu0 0
    %2826 = vmatpush1.bf16.xpose.msra.mxu0 0
    %2827 = vmatprep.subr.bf16.mxu0 0
    %2828 = vmatpush1.bf16.xpose.msra.mxu0 0
    %2829 = vmatprep.subr.bf16.mxu0 0
    %2830 = vmatpush1.bf16.xpose.msra.mxu0 0
    %2831 = vmatprep.mubr.bf16.mxu0 0
    %2832 = vmatmul.mubr.bf16.gmra.mrb[0].mxu0 %v2794
    %v2833 = vpop.f32.mrb[0].mxu0
    %v2834 = vadd.f32 %v277, %v2833
    %v2835 = vpop.f32.mrb[0].mxu0
    %v2836 = vpop.f32.mrb[0].mxu0
    %v2837 = vadd.f32 %v278, %v2836
    %v2838 = vpop.f32.mrb[0].mxu0
    %2839 = vdwg.mxu0
    %v2840 = vsel %vm509, %v2834, -inf
    %2841 = vmax.xlane.f32.xlu0 %v2840
    %v2842 = vpop.xlane.xlu0 %2841
    %v2843 = vsel %vm509, %v2837, -inf
    %2844 = vmax.xlane.f32.xlu0 %v2843
    %v2845 = vpop.xlane.xlu0 %2844
    %v2846 = vsub.f32 %v2834, %v2842
    %v2847 = vsub.f32 %v2837, %v2845
    %v2848 = vmul.f32 %v2846, 1.442695
    %v2849 = vpow.pop %v2848
    %v2850 = vmul.f32 %v2847, 1.442695
    %v2851 = vpow.pop %v2850
    %v2852 = vsel %vm509, %v2849, 0.0
    %2853 = vadd.xlane.f32.xlu0 %v2852
    %v2854 = vpop.xlane.xlu0 %2853
    %v2855 = vsel %vm509, %v2851, 0.0
    %2856 = vadd.xlane.f32.xlu0 %v2855
    %v2857 = vpop.xlane.xlu0 %2856
    %v2858 = vrcp.pop %v2854
    %v2859 = vrcp.pop %v2857
    %v2860 = vmul.f32 %v2849, %v2858
    %v2861 = vmul.f32 %v2851, %v2859
    %v2862 = vpack.c.bf16 %v2861, %v2860
    %v2863 = vpack.c.bf16 %v2788, %v2785
    %v2865 = vsel %vm509, %v2862, 0
    %2867 = vmatprep.subr.bf16.mxu0 0
    %2868 = vmatpush1.bf16.msra.mxu0 %v2863
    %2869 = vmatprep.subr.bf16.mxu0 0
    %2870 = vmatpush1.bf16.msra.mxu0 0
    %2871 = vmatprep.subr.bf16.mxu0 0
    %2872 = vmatpush1.bf16.msra.mxu0 0
    %2873 = vmatprep.subr.bf16.mxu0 0
    %2874 = vmatpush1.bf16.msra.mxu0 0
    %2875 = vmatprep.subr.bf16.mxu0 0
    %2876 = vmatpush1.bf16.msra.mxu0 0
    %2877 = vmatprep.subr.bf16.mxu0 0
    %2878 = vmatpush1.bf16.msra.mxu0 0
    %2879 = vmatprep.subr.bf16.mxu0 0
    %2880 = vmatpush1.bf16.msra.mxu0 0
    %2881 = vmatprep.subr.bf16.mxu0 0
    %2882 = vmatpush1.bf16.msra.mxu0 0
    %2883 = vmatprep.subr.bf16.mxu0 0
    %2884 = vmatpush1.bf16.msra.mxu0 0
    %2885 = vmatprep.subr.bf16.mxu0 0
    %2886 = vmatpush1.bf16.msra.mxu0 0
    %2887 = vmatprep.subr.bf16.mxu0 0
    %2888 = vmatpush1.bf16.msra.mxu0 0
    %2889 = vmatprep.subr.bf16.mxu0 0
    %2890 = vmatpush1.bf16.msra.mxu0 0
    %2891 = vmatprep.subr.bf16.mxu0 0
    %2892 = vmatpush1.bf16.msra.mxu0 0
    %2893 = vmatprep.subr.bf16.mxu0 0
    %2894 = vmatpush1.bf16.msra.mxu0 0
    %2895 = vmatprep.subr.bf16.mxu0 0
    %2896 = vmatpush1.bf16.msra.mxu0 0
    %2897 = vmatprep.subr.bf16.mxu0 0
    %2898 = vmatpush1.bf16.msra.mxu0 0
    %2899 = vmatprep.mubr.bf16.mxu0 0
    %2900 = vmatmul.mubr.bf16.gmra.mrb[0].mxu0 %v2865
    %v2901 = vpop.f32.mrb[0].mxu0
    %v2902 = vadd.f32 0.0, %v2901
    %v2903 = vpop.f32.mrb[0].mxu0
    %v2904 = vpop.f32.mrb[0].mxu0
    %v2905 = vadd.f32 0.0, %v2904
    %v2906 = vpop.f32.mrb[0].mxu0
    %2907 = vdwg.mxu0
    %v2908 = vpack.c.bf16 %v2905, %v2902
    %s2909 = scalar_lea.vmem [#allocation7], 24
    %v2910 = vld [vmem:[%s2909] sm:$0xf]
    %v2912 = vsel %vm461, %v2908, 0
    %v2915 = vsel %vm880, %v2910, 0
    %2917 = vmatprep.subr.bf16.mxu0 0
    %2918 = vmatpush1.bf16.msra.mxu0 %v2915
    %2919 = vmatprep.subr.bf16.mxu0 0
    %2920 = vmatpush1.bf16.msra.mxu0 0
    %2921 = vmatprep.subr.bf16.mxu0 0
    %2922 = vmatpush1.bf16.msra.mxu0 0
    %2923 = vmatprep.subr.bf16.mxu0 0
    %2924 = vmatpush1.bf16.msra.mxu0 0
    %2925 = vmatprep.subr.bf16.mxu0 0
    %2926 = vmatpush1.bf16.msra.mxu0 0
    %2927 = vmatprep.subr.bf16.mxu0 0
    %2928 = vmatpush1.bf16.msra.mxu0 0
    %2929 = vmatprep.subr.bf16.mxu0 0
    %2930 = vmatpush1.bf16.msra.mxu0 0
    %2931 = vmatprep.subr.bf16.mxu0 0
    %2932 = vmatpush1.bf16.msra.mxu0 0
    %2933 = vmatprep.subr.bf16.mxu0 0
    %2934 = vmatpush1.bf16.msra.mxu0 0
    %2935 = vmatprep.subr.bf16.mxu0 0
    %2936 = vmatpush1.bf16.msra.mxu0 0
    %2937 = vmatprep.subr.bf16.mxu0 0
    %2938 = vmatpush1.bf16.msra.mxu0 0
    %2939 = vmatprep.subr.bf16.mxu0 0
    %2940 = vmatpush1.bf16.msra.mxu0 0
    %2941 = vmatprep.subr.bf16.mxu0 0
    %2942 = vmatpush1.bf16.msra.mxu0 0
    %2943 = vmatprep.subr.bf16.mxu0 0
    %2944 = vmatpush1.bf16.msra.mxu0 0
    %2945 = vmatprep.subr.bf16.mxu0 0
    %2946 = vmatpush1.bf16.msra.mxu0 0
    %2947 = vmatprep.subr.bf16.mxu0 0
    %2948 = vmatpush1.bf16.msra.mxu0 0
    %2949 = vmatprep.mubr.bf16.mxu0 0
    %2950 = vmatmul.mubr.bf16.gmra.mrb[0].mxu0 %v2912
    %v2951 = vpop.f32.mrb[0].mxu0
    %v2952 = vadd.f32 0.0, %v2951
    %v2953 = vpop.f32.mrb[0].mxu0
    %v2954 = vpop.f32.mrb[0].mxu0
    %v2955 = vadd.f32 0.0, %v2954
    %v2956 = vpop.f32.mrb[0].mxu0
    %2957 = vdwg.mxu0
    %v2958 = vadd.f32 %v2608, %v2952
    %v2959 = vadd.f32 %v2611, %v2955
    %s2960 = scalar_lea.vmem [#allocation5], 336
    %v2961 = vld [vmem:[%s2960] sm:$0xf]
    %v2962 = vld [vmem:[%s2960 + $0x4] sm:$0xf]
    %v2963 = vld [vmem:[%s2960 + $0x8] sm:$0xf]
    %v2964 = vld [vmem:[%s2960 + $0xc] sm:$0xf]
    %v2965 = vld [vmem:[%s2960 + $0x10] sm:$0xf]
    %v2966 = vld [vmem:[%s2960 + $0x14] sm:$0xf]
    %v2967 = vld [vmem:[%s2960 + $0x18] sm:$0xf]
    %v2968 = vld [vmem:[%s2960 + $0x1c] sm:$0xf]
    %v2969 = vld [vmem:[%s2960 + $0x20] sm:$0xf]
    %v2970 = vld [vmem:[%s2960 + $0x24] sm:$0xf]
    %v2971 = vld [vmem:[%s2960 + $0x28] sm:$0xf]
    %v2972 = vld [vmem:[%s2960 + $0x2c] sm:$0xf]
    %v2973 = vld [vmem:[%s7 + $0x20] sm:$0x1]
    %v2974 = vlaneseq
    %v2975 = vshrl.u32 %v2974, 7
    %v2976 = vsub.s32 0, %v2975
    %v2977 = vrot.slane %v2973, %v2976
    %v2982 = vunpack.c.l.b16 %v2961
    %v2983 = vunpack.c.l.b16 %v2962
    %v2984 = vunpack.c.l.b16 %v2963
    %v2985 = vunpack.c.l.b16 %v2964
    %v2986 = vpack.c.b16 %v2983, %v2982
    %v2987 = vpack.c.b16 %v2985, %v2984
    %2990 = vmatprep.subr.bf16.mxu0 0
    %2991 = vmatpush1.bf16.msra.mxu0 %v2986
    %2992 = vmatprep.subr.bf16.mxu0 0
    %2993 = vmatpush1.bf16.msra.mxu0 %v2987
    %2994 = vmatprep.subr.bf16.mxu0 0
    %2995 = vmatpush1.bf16.msra.mxu0 0
    %2996 = vmatprep.subr.bf16.mxu0 0
    %2997 = vmatpush1.bf16.msra.mxu0 0
    %2998 = vmatprep.subr.bf16.mxu0 0
    %2999 = vmatpush1.bf16.msra.mxu0 0
    %3000 = vmatprep.subr.bf16.mxu0 0
    %3001 = vmatpush1.bf16.msra.mxu0 0
    %3002 = vmatprep.subr.bf16.mxu0 0
    %3003 = vmatpush1.bf16.msra.mxu0 0
    %3004 = vmatprep.subr.bf16.mxu0 0
    %3005 = vmatpush1.bf16.msra.mxu0 0
    %3006 = vmatprep.subr.bf16.mxu0 0
    %3007 = vmatpush1.bf16.msra.mxu0 0
    %3008 = vmatprep.subr.bf16.mxu0 0
    %3009 = vmatpush1.bf16.msra.mxu0 0
    %3010 = vmatprep.subr.bf16.mxu0 0
    %3011 = vmatpush1.bf16.msra.mxu0 0
    %3012 = vmatprep.subr.bf16.mxu0 0
    %3013 = vmatpush1.bf16.msra.mxu0 0
    %3014 = vmatprep.subr.bf16.mxu0 0
    %3015 = vmatpush1.bf16.msra.mxu0 0
    %3016 = vmatprep.subr.bf16.mxu0 0
    %3017 = vmatpush1.bf16.msra.mxu0 0
    %3018 = vmatprep.subr.bf16.mxu0 0
    %3019 = vmatpush1.bf16.msra.mxu0 0
    %3020 = vmatprep.subr.bf16.mxu0 0
    %3021 = vmatpush1.bf16.msra.mxu0 0
    %3022 = vmatprep.mubr.bf16.mxu0 0
    %3023 = vmatmul.mubr.bf16.gmra.mrb[0].mxu0 %v1954
    %v3024 = vpop.f32.mrb[0].mxu0
    %v3025 = vadd.f32 %v2977, %v3024
    %v3026 = vpop.f32.mrb[0].mxu0
    %v3027 = vpop.f32.mrb[0].mxu0
    %v3028 = vadd.f32 %v2977, %v3027
    %v3029 = vpop.f32.mrb[0].mxu0
    %3030 = vdwg.mxu0
    %v3035 = vunpack.c.l.b16 %v2965
    %v3036 = vunpack.c.l.b16 %v2966
    %v3037 = vunpack.c.l.b16 %v2967
    %v3038 = vunpack.c.l.b16 %v2968
    %v3039 = vpack.c.b16 %v3036, %v3035
    %v3040 = vpack.c.b16 %v3038, %v3037
    %3043 = vmatprep.subr.bf16.mxu0 0
    %3044 = vmatpush1.bf16.msra.mxu0 %v3039
    %3045 = vmatprep.subr.bf16.mxu0 0
    %3046 = vmatpush1.bf16.msra.mxu0 %v3040
    %3047 = vmatprep.subr.bf16.mxu0 0
    %3048 = vmatpush1.bf16.msra.mxu0 0
    %3049 = vmatprep.subr.bf16.mxu0 0
    %3050 = vmatpush1.bf16.msra.mxu0 0
    %3051 = vmatprep.subr.bf16.mxu0 0
    %3052 = vmatpush1.bf16.msra.mxu0 0
    %3053 = vmatprep.subr.bf16.mxu0 0
    %3054 = vmatpush1.bf16.msra.mxu0 0
    %3055 = vmatprep.subr.bf16.mxu0 0
    %3056 = vmatpush1.bf16.msra.mxu0 0
    %3057 = vmatprep.subr.bf16.mxu0 0
    %3058 = vmatpush1.bf16.msra.mxu0 0
    %3059 = vmatprep.subr.bf16.mxu0 0
    %3060 = vmatpush1.bf16.msra.mxu0 0
    %3061 = vmatprep.subr.bf16.mxu0 0
    %3062 = vmatpush1.bf16.msra.mxu0 0
    %3063 = vmatprep.subr.bf16.mxu0 0
    %3064 = vmatpush1.bf16.msra.mxu0 0
    %3065 = vmatprep.subr.bf16.mxu0 0
    %3066 = vmatpush1.bf16.msra.mxu0 0
    %3067 = vmatprep.subr.bf16.mxu0 0
    %3068 = vmatpush1.bf16.msra.mxu0 0
    %3069 = vmatprep.subr.bf16.mxu0 0
    %3070 = vmatpush1.bf16.msra.mxu0 0
    %3071 = vmatprep.subr.bf16.mxu0 0
    %3072 = vmatpush1.bf16.msra.mxu0 0
    %3073 = vmatprep.subr.bf16.mxu0 0
    %3074 = vmatpush1.bf16.msra.mxu0 0
    %3075 = vmatprep.mubr.bf16.mxu0 0
    %3076 = vmatmul.mubr.bf16.gmra.mrb[0].mxu0 %v1954
    %v3077 = vpop.f32.mrb[0].mxu0
    %v3078 = vadd.f32 0.0, %v3077
    %v3079 = vpop.f32.mrb[0].mxu0
    %v3080 = vpop.f32.mrb[0].mxu0
    %v3081 = vadd.f32 0.0, %v3080
    %v3082 = vpop.f32.mrb[0].mxu0
    %3083 = vdwg.mxu0
    %v3088 = vunpack.c.l.b16 %v2969
    %v3089 = vunpack.c.l.b16 %v2970
    %v3090 = vunpack.c.l.b16 %v2971
    %v3091 = vunpack.c.l.b16 %v2972
    %v3092 = vpack.c.b16 %v3089, %v3088
    %v3093 = vpack.c.b16 %v3091, %v3090
    %3096 = vmatprep.subr.bf16.mxu0 0
    %3097 = vmatpush1.bf16.msra.mxu0 %v3092
    %3098 = vmatprep.subr.bf16.mxu0 0
    %3099 = vmatpush1.bf16.msra.mxu0 %v3093
    %3100 = vmatprep.subr.bf16.mxu0 0
    %3101 = vmatpush1.bf16.msra.mxu0 0
    %3102 = vmatprep.subr.bf16.mxu0 0
    %3103 = vmatpush1.bf16.msra.mxu0 0
    %3104 = vmatprep.subr.bf16.mxu0 0
    %3105 = vmatpush1.bf16.msra.mxu0 0
    %3106 = vmatprep.subr.bf16.mxu0 0
    %3107 = vmatpush1.bf16.msra.mxu0 0
    %3108 = vmatprep.subr.bf16.mxu0 0
    %3109 = vmatpush1.bf16.msra.mxu0 0
    %3110 = vmatprep.subr.bf16.mxu0 0
    %3111 = vmatpush1.bf16.msra.mxu0 0
    %3112 = vmatprep.subr.bf16.mxu0 0
    %3113 = vmatpush1.bf16.msra.mxu0 0
    %3114 = vmatprep.subr.bf16.mxu0 0
    %3115 = vmatpush1.bf16.msra.mxu0 0
    %3116 = vmatprep.subr.bf16.mxu0 0
    %3117 = vmatpush1.bf16.msra.mxu0 0
    %3118 = vmatprep.subr.bf16.mxu0 0
    %3119 = vmatpush1.bf16.msra.mxu0 0
    %3120 = vmatprep.subr.bf16.mxu0 0
    %3121 = vmatpush1.bf16.msra.mxu0 0
    %3122 = vmatprep.subr.bf16.mxu0 0
    %3123 = vmatpush1.bf16.msra.mxu0 0
    %3124 = vmatprep.subr.bf16.mxu0 0
    %3125 = vmatpush1.bf16.msra.mxu0 0
    %3126 = vmatprep.subr.bf16.mxu0 0
    %3127 = vmatpush1.bf16.msra.mxu0 0
    %3128 = vmatprep.mubr.bf16.mxu0 0
    %3129 = vmatmul.mubr.bf16.gmra.mrb[0].mxu0 %v1954
    %v3130 = vpop.f32.mrb[0].mxu0
    %v3131 = vadd.f32 0.0, %v3130
    %v3132 = vpop.f32.mrb[0].mxu0
    %v3133 = vpop.f32.mrb[0].mxu0
    %v3134 = vadd.f32 0.0, %v3133
    %v3135 = vpop.f32.mrb[0].mxu0
    %3136 = vdwg.mxu0
    %v3137 = vpack.c.bf16 %v3028, %v3025
    %v3138 = vpack.c.bf16 %v3081, %v3078
    %v3140 = vsel %vm461, %v3137, 0
    %v3143 = vsel %vm461, %v3138, 0
    %3145 = vmatprep.subr.bf16.mxu0 0
    %3146 = vmatpush1.bf16.xpose.msra.mxu0 %v3143
    %3147 = vmatprep.subr.bf16.mxu0 0
    %3148 = vmatpush1.bf16.xpose.msra.mxu0 0
    %3149 = vmatprep.subr.bf16.mxu0 0
    %3150 = vmatpush1.bf16.xpose.msra.mxu0 0
    %3151 = vmatprep.subr.bf16.mxu0 0
    %3152 = vmatpush1.bf16.xpose.msra.mxu0 0
    %3153 = vmatprep.subr.bf16.mxu0 0
    %3154 = vmatpush1.bf16.xpose.msra.mxu0 0
    %3155 = vmatprep.subr.bf16.mxu0 0
    %3156 = vmatpush1.bf16.xpose.msra.mxu0 0
    %3157 = vmatprep.subr.bf16.mxu0 0
    %3158 = vmatpush1.bf16.xpose.msra.mxu0 0
    %3159 = vmatprep.subr.bf16.mxu0 0
    %3160 = vmatpush1.bf16.xpose.msra.mxu0 0
    %3161 = vmatprep.subr.bf16.mxu0 0
    %3162 = vmatpush1.bf16.xpose.msra.mxu0 0
    %3163 = vmatprep.subr.bf16.mxu0 0
    %3164 = vmatpush1.bf16.xpose.msra.mxu0 0
    %3165 = vmatprep.subr.bf16.mxu0 0
    %3166 = vmatpush1.bf16.xpose.msra.mxu0 0
    %3167 = vmatprep.subr.bf16.mxu0 0
    %3168 = vmatpush1.bf16.xpose.msra.mxu0 0
    %3169 = vmatprep.subr.bf16.mxu0 0
    %3170 = vmatpush1.bf16.xpose.msra.mxu0 0
    %3171 = vmatprep.subr.bf16.mxu0 0
    %3172 = vmatpush1.bf16.xpose.msra.mxu0 0
    %3173 = vmatprep.subr.bf16.mxu0 0
    %3174 = vmatpush1.bf16.xpose.msra.mxu0 0
    %3175 = vmatprep.subr.bf16.mxu0 0
    %3176 = vmatpush1.bf16.xpose.msra.mxu0 0
    %3177 = vmatprep.mubr.bf16.mxu0 0
    %3178 = vmatmul.mubr.bf16.gmra.mrb[0].mxu0 %v3140
    %v3179 = vpop.f32.mrb[0].mxu0
    %v3180 = vadd.f32 %v277, %v3179
    %v3181 = vpop.f32.mrb[0].mxu0
    %v3182 = vpop.f32.mrb[0].mxu0
    %v3183 = vadd.f32 %v278, %v3182
    %v3184 = vpop.f32.mrb[0].mxu0
    %3185 = vdwg.mxu0
    %v3186 = vsel %vm509, %v3180, -inf
    %3187 = vmax.xlane.f32.xlu0 %v3186
    %v3188 = vpop.xlane.xlu0 %3187
    %v3189 = vsel %vm509, %v3183, -inf
    %3190 = vmax.xlane.f32.xlu0 %v3189
    %v3191 = vpop.xlane.xlu0 %3190
    %v3192 = vsub.f32 %v3180, %v3188
    %v3193 = vsub.f32 %v3183, %v3191
    %v3194 = vmul.f32 %v3192, 1.442695
    %v3195 = vpow.pop %v3194
    %v3196 = vmul.f32 %v3193, 1.442695
    %v3197 = vpow.pop %v3196
    %v3198 = vsel %vm509, %v3195, 0.0
    %3199 = vadd.xlane.f32.xlu0 %v3198
    %v3200 = vpop.xlane.xlu0 %3199
    %v3201 = vsel %vm509, %v3197, 0.0
    %3202 = vadd.xlane.f32.xlu0 %v3201
    %v3203 = vpop.xlane.xlu0 %3202
    %v3204 = vrcp.pop %v3200
    %v3205 = vrcp.pop %v3203
    %v3206 = vmul.f32 %v3195, %v3204
    %v3207 = vmul.f32 %v3197, %v3205
    %v3208 = vpack.c.bf16 %v3207, %v3206
    %v3209 = vpack.c.bf16 %v3134, %v3131
    %v3211 = vsel %vm509, %v3208, 0
    %3213 = vmatprep.subr.bf16.mxu0 0
    %3214 = vmatpush1.bf16.msra.mxu0 %v3209
    %3215 = vmatprep.subr.bf16.mxu0 0
    %3216 = vmatpush1.bf16.msra.mxu0 0
    %3217 = vmatprep.subr.bf16.mxu0 0
    %3218 = vmatpush1.bf16.msra.mxu0 0
    %3219 = vmatprep.subr.bf16.mxu0 0
    %3220 = vmatpush1.bf16.msra.mxu0 0
    %3221 = vmatprep.subr.bf16.mxu0 0
    %3222 = vmatpush1.bf16.msra.mxu0 0
    %3223 = vmatprep.subr.bf16.mxu0 0
    %3224 = vmatpush1.bf16.msra.mxu0 0
    %3225 = vmatprep.subr.bf16.mxu0 0
    %3226 = vmatpush1.bf16.msra.mxu0 0
    %3227 = vmatprep.subr.bf16.mxu0 0
    %3228 = vmatpush1.bf16.msra.mxu0 0
    %3229 = vmatprep.subr.bf16.mxu0 0
    %3230 = vmatpush1.bf16.msra.mxu0 0
    %3231 = vmatprep.subr.bf16.mxu0 0
    %3232 = vmatpush1.bf16.msra.mxu0 0
    %3233 = vmatprep.subr.bf16.mxu0 0
    %3234 = vmatpush1.bf16.msra.mxu0 0
    %3235 = vmatprep.subr.bf16.mxu0 0
    %3236 = vmatpush1.bf16.msra.mxu0 0
    %3237 = vmatprep.subr.bf16.mxu0 0
    %3238 = vmatpush1.bf16.msra.mxu0 0
    %3239 = vmatprep.subr.bf16.mxu0 0
    %3240 = vmatpush1.bf16.msra.mxu0 0
    %3241 = vmatprep.subr.bf16.mxu0 0
    %3242 = vmatpush1.bf16.msra.mxu0 0
    %3243 = vmatprep.subr.bf16.mxu0 0
    %3244 = vmatpush1.bf16.msra.mxu0 0
    %3245 = vmatprep.mubr.bf16.mxu0 0
    %3246 = vmatmul.mubr.bf16.gmra.mrb[0].mxu0 %v3211
    %v3247 = vpop.f32.mrb[0].mxu0
    %v3248 = vadd.f32 0.0, %v3247
    %v3249 = vpop.f32.mrb[0].mxu0
    %v3250 = vpop.f32.mrb[0].mxu0
    %v3251 = vadd.f32 0.0, %v3250
    %v3252 = vpop.f32.mrb[0].mxu0
    %3253 = vdwg.mxu0
    %v3254 = vpack.c.bf16 %v3251, %v3248
    %s3255 = scalar_lea.vmem [#allocation7], 28
    %v3256 = vld [vmem:[%s3255] sm:$0xf]
    %v3258 = vsel %vm461, %v3254, 0
    %v3261 = vsel %vm880, %v3256, 0
    %3263 = vmatprep.subr.bf16.mxu0 0
    %3264 = vmatpush1.bf16.msra.mxu0 %v3261
    %3265 = vmatprep.subr.bf16.mxu0 0
    %3266 = vmatpush1.bf16.msra.mxu0 0
    %3267 = vmatprep.subr.bf16.mxu0 0
    %3268 = vmatpush1.bf16.msra.mxu0 0
    %3269 = vmatprep.subr.bf16.mxu0 0
    %3270 = vmatpush1.bf16.msra.mxu0 0
    %3271 = vmatprep.subr.bf16.mxu0 0
    %3272 = vmatpush1.bf16.msra.mxu0 0
    %3273 = vmatprep.subr.bf16.mxu0 0
    %3274 = vmatpush1.bf16.msra.mxu0 0
    %3275 = vmatprep.subr.bf16.mxu0 0
    %3276 = vmatpush1.bf16.msra.mxu0 0
    %3277 = vmatprep.subr.bf16.mxu0 0
    %3278 = vmatpush1.bf16.msra.mxu0 0
    %3279 = vmatprep.subr.bf16.mxu0 0
    %3280 = vmatpush1.bf16.msra.mxu0 0
    %3281 = vmatprep.subr.bf16.mxu0 0
    %3282 = vmatpush1.bf16.msra.mxu0 0
    %3283 = vmatprep.subr.bf16.mxu0 0
    %3284 = vmatpush1.bf16.msra.mxu0 0
    %3285 = vmatprep.subr.bf16.mxu0 0
    %3286 = vmatpush1.bf16.msra.mxu0 0
    %3287 = vmatprep.subr.bf16.mxu0 0
    %3288 = vmatpush1.bf16.msra.mxu0 0
    %3289 = vmatprep.subr.bf16.mxu0 0
    %3290 = vmatpush1.bf16.msra.mxu0 0
    %3291 = vmatprep.subr.bf16.mxu0 0
    %3292 = vmatpush1.bf16.msra.mxu0 0
    %3293 = vmatprep.subr.bf16.mxu0 0
    %3294 = vmatpush1.bf16.msra.mxu0 0
    %3295 = vmatprep.mubr.bf16.mxu0 0
    %3296 = vmatmul.mubr.bf16.gmra.mrb[0].mxu0 %v3258
    %v3297 = vpop.f32.mrb[0].mxu0
    %v3298 = vadd.f32 0.0, %v3297
    %v3299 = vpop.f32.mrb[0].mxu0
    %v3300 = vpop.f32.mrb[0].mxu0
    %v3301 = vadd.f32 0.0, %v3300
    %v3302 = vpop.f32.mrb[0].mxu0
    %3303 = vdwg.mxu0
    %v3304 = vadd.f32 %v2958, %v3298
    %v3305 = vadd.f32 %v2959, %v3301
    %v3306 = vld [vmem:[%s7 + $0x21] sm:$0x1]
    %v3307 = vlaneseq
    %v3308 = vshrl.u32 %v3307, 7
    %v3309 = vsub.s32 0, %v3308
    %v3310 = vrot.slane %v3306, %v3309
    %v3311 = vadd.f32 %v3304, %v3310
    %v3312 = vadd.f32 %v3305, %v3310
    %v3313 = vadd.f32 %v3311, %v1920
    %v3314 = vadd.f32 %v3312, %v1921
    %v3315 = vld [vmem:[%s7 + $0x22] sm:$0x1]
    %v3316 = vld [vmem:[%s7 + $0x23] sm:$0x1]
    %v3317 = vsel %vm219, %v3313, 0.0
    %3318 = vadd.xlane.f32.xlu0 %v3317
    %v3319 = vpop.xlane.xlu0 %3318
    %v3320 = vsel %vm219, %v3314, 0.0
    %3321 = vadd.xlane.f32.xlu0 %v3320
    %v3322 = vpop.xlane.xlu0 %3321
    %v3323 = vmul.f32 %v3319, %v226
    %v3324 = vmul.f32 %v3322, %v226
    %v3325 = vsub.f32 %v3313, %v3323
    %v3326 = vsub.f32 %v3314, %v3324
    %v3327 = vmul.f32 %v3325, %v3325
    %v3328 = vmul.f32 %v3326, %v3326
    %v3329 = vsel %vm219, %v3327, 0.0
    %3330 = vadd.xlane.f32.xlu0 %v3329
    %v3331 = vpop.xlane.xlu0 %3330
    %v3332 = vsel %vm219, %v3328, 0.0
    %3333 = vadd.xlane.f32.xlu0 %v3332
    %v3334 = vpop.xlane.xlu0 %3333
    %v3335 = vmul.f32 %v3331, %v226
    %v3336 = vmul.f32 %v3334, %v226
    %v3337 = vadd.f32 %v3335, 1e-12
    %v3338 = vadd.f32 %v3336, 1e-12
    %v3339 = vrsqrt.pop %v3337
    %v3340 = vrsqrt.pop %v3338
    %v3341 = vmul.f32 %v3325, %v3339
    %v3342 = vmul.f32 %v3326, %v3340
    %v3343 = vlaneseq
    %v3344 = vshrl.u32 %v3343, 7
    %v3345 = vsub.s32 0, %v3344
    %v3346 = vrot.slane %v3315, %v3345
    %v3347 = vmul.f32 %v3341, %v3346
    %v3348 = vmul.f32 %v3342, %v3346
    %v3349 = vlaneseq
    %v3350 = vshrl.u32 %v3349, 7
    %v3351 = vsub.s32 0, %v3350
    %v3352 = vrot.slane %v3316, %v3351
    %v3353 = vadd.f32 %v3347, %v3352
    %v3354 = vadd.f32 %v3348, %v3352
    %s3355 = scalar_lea.vmem [#allocation8], 48
    %v3356 = vld [vmem:[%s3355] sm:$0xf]
    %v3357 = vld [vmem:[%s3355 + $0x4] sm:$0xf]
    %v3358 = vld [vmem:[%s3355 + $0x8] sm:$0xf]
    %v3359 = vld [vmem:[%s3355 + $0xc] sm:$0xf]
    %v3360 = vld [vmem:[%s3355 + $0x10] sm:$0xf]
    %v3361 = vld [vmem:[%s3355 + $0x14] sm:$0xf]
    %v3362 = vld [vmem:[%s3355 + $0x18] sm:$0xf]
    %v3363 = vld [vmem:[%s3355 + $0x1c] sm:$0xf]
    %v3364 = vld [vmem:[%s3355 + $0x20] sm:$0xf]
    %v3365 = vld [vmem:[%s3355 + $0x24] sm:$0xf]
    %v3366 = vld [vmem:[%s3355 + $0x28] sm:$0xf]
    %v3367 = vld [vmem:[%s3355 + $0x2c] sm:$0xf]
    %v3368 = vpack.c.bf16 %v3354, %v3353
    %v3369 = vld [vmem:[%s7 + $0x24] sm:$0x1]
    %v3370 = vlaneseq
    %v3371 = vshrl.u32 %v3370, 7
    %v3372 = vsub.s32 0, %v3371
    %v3373 = vrot.slane %v3369, %v3372
    %v3378 = vunpack.c.l.b16 %v3356
    %v3379 = vunpack.c.l.b16 %v3357
    %v3380 = vunpack.c.l.b16 %v3358
    %v3381 = vunpack.c.l.b16 %v3359
    %v3382 = vpack.c.b16 %v3379, %v3378
    %v3383 = vpack.c.b16 %v3381, %v3380
    %v3387 = vsel %vm219, %v3368, 0
    %3389 = vmatprep.subr.bf16.mxu0 0
    %3390 = vmatpush1.bf16.msra.mxu0 %v3382
    %3391 = vmatprep.subr.bf16.mxu0 0
    %3392 = vmatpush1.bf16.msra.mxu0 %v3383
    %3393 = vmatprep.subr.bf16.mxu0 0
    %3394 = vmatpush1.bf16.msra.mxu0 0
    %3395 = vmatprep.subr.bf16.mxu0 0
    %3396 = vmatpush1.bf16.msra.mxu0 0
    %3397 = vmatprep.subr.bf16.mxu0 0
    %3398 = vmatpush1.bf16.msra.mxu0 0
    %3399 = vmatprep.subr.bf16.mxu0 0
    %3400 = vmatpush1.bf16.msra.mxu0 0
    %3401 = vmatprep.subr.bf16.mxu0 0
    %3402 = vmatpush1.bf16.msra.mxu0 0
    %3403 = vmatprep.subr.bf16.mxu0 0
    %3404 = vmatpush1.bf16.msra.mxu0 0
    %3405 = vmatprep.subr.bf16.mxu0 0
    %3406 = vmatpush1.bf16.msra.mxu0 0
    %3407 = vmatprep.subr.bf16.mxu0 0
    %3408 = vmatpush1.bf16.msra.mxu0 0
    %3409 = vmatprep.subr.bf16.mxu0 0
    %3410 = vmatpush1.bf16.msra.mxu0 0
    %3411 = vmatprep.subr.bf16.mxu0 0
    %3412 = vmatpush1.bf16.msra.mxu0 0
    %3413 = vmatprep.subr.bf16.mxu0 0
    %3414 = vmatpush1.bf16.msra.mxu0 0
    %3415 = vmatprep.subr.bf16.mxu0 0
    %3416 = vmatpush1.bf16.msra.mxu0 0
    %3417 = vmatprep.subr.bf16.mxu0 0
    %3418 = vmatpush1.bf16.msra.mxu0 0
    %3419 = vmatprep.subr.bf16.mxu0 0
    %3420 = vmatpush1.bf16.msra.mxu0 0
    %3421 = vmatprep.mubr.bf16.mxu0 0
    %3422 = vmatmul.mubr.bf16.gmra.mrb[0].mxu0 %v3387
    %v3423 = vpop.f32.mrb[0].mxu0
    %v3424 = vadd.f32 %v3373, %v3423
    %v3425 = vpop.f32.mrb[0].mxu0
    %v3426 = vpop.f32.mrb[0].mxu0
    %v3427 = vadd.f32 %v3373, %v3426
    %v3428 = vpop.f32.mrb[0].mxu0
    %3429 = vdwg.mxu0
    %v3430 = vmul.f32 %v3424, 0.5
    %v3431 = vmul.f32 %v3427, 0.5
    %v3432 = vmul.f32 %v3424, 0.044715
    %v3433 = vmul.f32 %v3427, 0.044715
    %v3434 = vmul.f32 %v3432, %v3424
    %v3435 = vmul.f32 %v3433, %v3427
    %v3436 = vmul.f32 %v3434, %v3424
    %v3437 = vmul.f32 %v3435, %v3427
    %v3438 = vadd.f32 %v3424, %v3436
    %v3439 = vadd.f32 %v3427, %v3437
    %v3440 = vmul.f32 %v3438, 0.7978846
    %v3441 = vmul.f32 %v3439, 0.7978846
    %v3442 = vtanh.pop %v3440
    %v3443 = vtanh.pop %v3441
    %v3444 = vadd.f32 %v3442, 1.0
    %v3445 = vadd.f32 %v3443, 1.0
    %v3446 = vmul.f32 %v3430, %v3444
    %v3447 = vmul.f32 %v3431, %v3445
    %v3448 = vpack.c.bf16 %v3447, %v3446
    %v3449 = vld [vmem:[%s7 + $0x25] sm:$0x1]
    %v3450 = vlaneseq
    %v3451 = vshrl.u32 %v3450, 7
    %v3452 = vsub.s32 0, %v3451
    %v3453 = vrot.slane %v3449, %v3452
    %v3462 = vunpack.c.l.b16 %v3360
    %v3463 = vunpack.c.l.b16 %v3361
    %v3464 = vunpack.c.l.b16 %v3362
    %v3465 = vunpack.c.l.b16 %v3363
    %v3466 = vunpack.c.l.b16 %v3364
    %v3467 = vunpack.c.l.b16 %v3365
    %v3468 = vunpack.c.l.b16 %v3366
    %v3469 = vunpack.c.l.b16 %v3367
    %v3470 = vpack.c.b16 %v3463, %v3462
    %v3471 = vpack.c.b16 %v3465, %v3464
    %v3472 = vpack.c.b16 %v3467, %v3466
    %v3473 = vpack.c.b16 %v3469, %v3468
    %v3479 = vsel %vm1835, %v3448, 0
    %3481 = vmatprep.subr.bf16.mxu0 0
    %3482 = vmatpush1.bf16.msra.mxu0 %v3470
    %3483 = vmatprep.subr.bf16.mxu0 0
    %3484 = vmatpush1.bf16.msra.mxu0 %v3471
    %3485 = vmatprep.subr.bf16.mxu0 0
    %3486 = vmatpush1.bf16.msra.mxu0 %v3472
    %3487 = vmatprep.subr.bf16.mxu0 0
    %3488 = vmatpush1.bf16.msra.mxu0 %v3473
    %3489 = vmatprep.subr.bf16.mxu0 0
    %3490 = vmatpush1.bf16.msra.mxu0 0
    %3491 = vmatprep.subr.bf16.mxu0 0
    %3492 = vmatpush1.bf16.msra.mxu0 0
    %3493 = vmatprep.subr.bf16.mxu0 0
    %3494 = vmatpush1.bf16.msra.mxu0 0
    %3495 = vmatprep.subr.bf16.mxu0 0
    %3496 = vmatpush1.bf16.msra.mxu0 0
    %3497 = vmatprep.subr.bf16.mxu0 0
    %3498 = vmatpush1.bf16.msra.mxu0 0
    %3499 = vmatprep.subr.bf16.mxu0 0
    %3500 = vmatpush1.bf16.msra.mxu0 0
    %3501 = vmatprep.subr.bf16.mxu0 0
    %3502 = vmatpush1.bf16.msra.mxu0 0
    %3503 = vmatprep.subr.bf16.mxu0 0
    %3504 = vmatpush1.bf16.msra.mxu0 0
    %3505 = vmatprep.subr.bf16.mxu0 0
    %3506 = vmatpush1.bf16.msra.mxu0 0
    %3507 = vmatprep.subr.bf16.mxu0 0
    %3508 = vmatpush1.bf16.msra.mxu0 0
    %3509 = vmatprep.subr.bf16.mxu0 0
    %3510 = vmatpush1.bf16.msra.mxu0 0
    %3511 = vmatprep.subr.bf16.mxu0 0
    %3512 = vmatpush1.bf16.msra.mxu0 0
    %3513 = vmatprep.mubr.bf16.mxu0 0
    %3514 = vmatmul.mubr.bf16.gmra.mrb[0].mxu0 %v3479
    %v3515 = vpop.f32.mrb[0].mxu0
    %v3516 = vadd.f32 %v3453, %v3515
    %v3517 = vpop.f32.mrb[0].mxu0
    %v3518 = vpop.f32.mrb[0].mxu0
    %v3519 = vadd.f32 %v3453, %v3518
    %v3520 = vpop.f32.mrb[0].mxu0
    %3521 = vdwg.mxu0
    %v3522 = vadd.f32 %v3516, %v3353
    %v3523 = vadd.f32 %v3519, %v3354
    %v3524 = vld [vmem:[%s7 + $0x26] sm:$0x1]
    %v3525 = vld [vmem:[%s7 + $0x27] sm:$0x1]
    %v3526 = vsel %vm219, %v3522, 0.0
    %3527 = vadd.xlane.f32.xlu0 %v3526
    %v3528 = vpop.xlane.xlu0 %3527
    %v3529 = vsel %vm219, %v3523, 0.0
    %3530 = vadd.xlane.f32.xlu0 %v3529
    %v3531 = vpop.xlane.xlu0 %3530
    %v3532 = vmul.f32 %v3528, %v226
    %v3533 = vmul.f32 %v3531, %v226
    %v3534 = vsub.f32 %v3522, %v3532
    %v3535 = vsub.f32 %v3523, %v3533
    %v3536 = vmul.f32 %v3534, %v3534
    %v3537 = vmul.f32 %v3535, %v3535
    %v3538 = vsel %vm219, %v3536, 0.0
    %3539 = vadd.xlane.f32.xlu0 %v3538
    %v3540 = vpop.xlane.xlu0 %3539
    %v3541 = vsel %vm219, %v3537, 0.0
    %3542 = vadd.xlane.f32.xlu0 %v3541
    %v3543 = vpop.xlane.xlu0 %3542
    %v3544 = vmul.f32 %v3540, %v226
    %v3545 = vmul.f32 %v3543, %v226
    %v3546 = vadd.f32 %v3544, 1e-12
    %v3547 = vadd.f32 %v3545, 1e-12
    %v3548 = vrsqrt.pop %v3546
    %v3549 = vrsqrt.pop %v3547
    %v3550 = vmul.f32 %v3534, %v3548
    %v3551 = vmul.f32 %v3535, %v3549
    %v3552 = vlaneseq
    %v3553 = vshrl.u32 %v3552, 7
    %v3554 = vsub.s32 0, %v3553
    %v3555 = vrot.slane %v3524, %v3554
    %v3556 = vmul.f32 %v3550, %v3555
    %v3557 = vmul.f32 %v3551, %v3555
    %v3558 = vlaneseq
    %v3559 = vshrl.u32 %v3558, 7
    %v3560 = vsub.s32 0, %v3559
    %v3561 = vrot.slane %v3525, %v3560
    %v3562 = vadd.f32 %v3556, %v3561
    %v3563 = vadd.f32 %v3557, %v3561
    %v3565 = vrot.slane %v3563, 7
    %vm3567 = vcmask 1040384
    %v3568 = vsel %vm3567, %v3562, %v3565
    %v3569 = vld [vmem:[#allocation10] sm:$0xf]
    %v3570 = vld [vmem:[#allocation10 + $0x4] sm:$0xf]
    %v3571 = vld [vmem:[#allocation10 + $0x8] sm:$0xf]
    %v3572 = vld [vmem:[#allocation10 + $0xc] sm:$0xf]
    %v3573 = vld [vmem:[#allocation10 + $0x10] sm:$0xf]
    %v3574 = vld [vmem:[#allocation10 + $0x14] sm:$0xf]
    %v3575 = vld [vmem:[#allocation10 + $0x18] sm:$0xf]
    %v3576 = vld [vmem:[#allocation10 + $0x1c] sm:$0xf]
    %v3577 = vpack.c.bf16 %v3568, %v3568
    %v3578 = vld [vmem:[%s7 + $0x28] sm:$0x1]
    %v3579 = vlaneseq
    %v3580 = vshrl.u32 %v3579, 7
    %v3581 = vsub.s32 0, %v3580
    %v3582 = vrot.slane %v3578, %v3581
    %v3587 = vunpack.c.l.b16 %v3569
    %v3588 = vunpack.c.l.b16 %v3570
    %v3589 = vunpack.c.l.b16 %v3571
    %v3590 = vunpack.c.l.b16 %v3572
    %v3591 = vpack.c.b16 %v3588, %v3587
    %v3592 = vpack.c.b16 %v3590, %v3589
    %v3596 = vsel %vm219, %v3577, 0
    %3598 = vmatprep.subr.bf16.mxu0 0
    %3599 = vmatpush1.bf16.msra.mxu0 %v3591
    %3600 = vmatprep.subr.bf16.mxu0 0
    %3601 = vmatpush1.bf16.msra.mxu0 %v3592
    %3602 = vmatprep.subr.bf16.mxu0 0
    %3603 = vmatpush1.bf16.msra.mxu0 0
    %3604 = vmatprep.subr.bf16.mxu0 0
    %3605 = vmatpush1.bf16.msra.mxu0 0
    %3606 = vmatprep.subr.bf16.mxu0 0
    %3607 = vmatpush1.bf16.msra.mxu0 0
    %3608 = vmatprep.subr.bf16.mxu0 0
    %3609 = vmatpush1.bf16.msra.mxu0 0
    %3610 = vmatprep.subr.bf16.mxu0 0
    %3611 = vmatpush1.bf16.msra.mxu0 0
    %3612 = vmatprep.subr.bf16.mxu0 0
    %3613 = vmatpush1.bf16.msra.mxu0 0
    %3614 = vmatprep.subr.bf16.mxu0 0
    %3615 = vmatpush1.bf16.msra.mxu0 0
    %3616 = vmatprep.subr.bf16.mxu0 0
    %3617 = vmatpush1.bf16.msra.mxu0 0
    %3618 = vmatprep.subr.bf16.mxu0 0
    %3619 = vmatpush1.bf16.msra.mxu0 0
    %3620 = vmatprep.subr.bf16.mxu0 0
    %3621 = vmatpush1.bf16.msra.mxu0 0
    %3622 = vmatprep.subr.bf16.mxu0 0
    %3623 = vmatpush1.bf16.msra.mxu0 0
    %3624 = vmatprep.subr.bf16.mxu0 0
    %3625 = vmatpush1.bf16.msra.mxu0 0
    %3626 = vmatprep.subr.bf16.mxu0 0
    %3627 = vmatpush1.bf16.msra.mxu0 0
    %3628 = vmatprep.subr.bf16.mxu0 0
    %3629 = vmatpush1.bf16.msra.mxu0 0
    %3630 = vmatprep.mubr.bf16.mxu0 0
    %3631 = vmatmul.mubr.bf16.gmra.mrb[0].mxu0 %v3596
    %v3632 = vpop.f32.mrb[0].mxu0
    %v3633 = vadd.f32 %v3582, %v3632
    %v3634 = vpop.f32.mrb[0].mxu0
    %v3635 = vpop.f32.mrb[0].mxu0
    %v3636 = vpop.f32.mrb[0].mxu0
    %3637 = vdwg.mxu0
    %v3638 = vtanh.pop %v3633
    %v3639 = vpack.c.bf16 %v3638, %v3638
    %v3644 = vunpack.c.l.b16 %v3573
    %v3645 = vunpack.c.l.b16 %v3574
    %v3646 = vunpack.c.l.b16 %v3575
    %v3647 = vunpack.c.l.b16 %v3576
    %v3648 = vpack.c.b16 %v3645, %v3644
    %v3649 = vpack.c.b16 %v3647, %v3646
    %v3653 = vsel %vm219, %v3639, 0
    %3655 = vmatprep.subr.bf16.mxu0 0
    %3656 = vmatpush1.bf16.msra.mxu0 %v3648
    %3657 = vmatprep.subr.bf16.mxu0 0
    %3658 = vmatpush1.bf16.msra.mxu0 %v3649
    %3659 = vmatprep.subr.bf16.mxu0 0
    %3660 = vmatpush1.bf16.msra.mxu0 0
    %3661 = vmatprep.subr.bf16.mxu0 0
    %3662 = vmatpush1.bf16.msra.mxu0 0
    %3663 = vmatprep.subr.bf16.mxu0 0
    %3664 = vmatpush1.bf16.msra.mxu0 0
    %3665 = vmatprep.subr.bf16.mxu0 0
    %3666 = vmatpush1.bf16.msra.mxu0 0
    %3667 = vmatprep.subr.bf16.mxu0 0
    %3668 = vmatpush1.bf16.msra.mxu0 0
    %3669 = vmatprep.subr.bf16.mxu0 0
    %3670 = vmatpush1.bf16.msra.mxu0 0
    %3671 = vmatprep.subr.bf16.mxu0 0
    %3672 = vmatpush1.bf16.msra.mxu0 0
    %3673 = vmatprep.subr.bf16.mxu0 0
    %3674 = vmatpush1.bf16.msra.mxu0 0
    %3675 = vmatprep.subr.bf16.mxu0 0
    %3676 = vmatpush1.bf16.msra.mxu0 0
    %3677 = vmatprep.subr.bf16.mxu0 0
    %3678 = vmatpush1.bf16.msra.mxu0 0
    %3679 = vmatprep.subr.bf16.mxu0 0
    %3680 = vmatpush1.bf16.msra.mxu0 0
    %3681 = vmatprep.subr.bf16.mxu0 0
    %3682 = vmatpush1.bf16.msra.mxu0 0
    %3683 = vmatprep.subr.bf16.mxu0 0
    %3684 = vmatpush1.bf16.msra.mxu0 0
    %3685 = vmatprep.subr.bf16.mxu0 0
    %3686 = vmatpush1.bf16.msra.mxu0 0
    %3687 = vmatprep.mubr.bf16.mxu0 0
    %3688 = vmatmul.mubr.bf16.gmra.mrb[0].mxu0 %v3653
    %v3689 = vpop.f32.mrb[0].mxu0
    %v3690 = vadd.f32 0.0, %v3689
    %v3691 = vpop.f32.mrb[0].mxu0
    %v3692 = vpop.f32.mrb[0].mxu0
    %v3693 = vpop.f32.mrb[0].mxu0
    %3694 = vdwg.mxu0
    %v3695 = vld [vmem:[%s7 + $0x29] sm:$0x1]
    %v3696 = vlaneseq
    %v3697 = vshrl.u32 %v3696, 7
    %v3698 = vsub.s32 0, %v3697
    %v3699 = vrot.slane %v3695, %v3698
    %v3700 = vadd.f32 %v3690, %v3699
    %vm3701 = vcmask 25600
    %3702 = vst.msk [vmem:[#allocation11] sm:$0x3] %vm3701, %v3700
    // Predicated region
    $region54: #{bert_for_lcr_forward.1} parent=1 // pred_check
      _
    $region55: #{bert_for_lcr_forward.1} parent=1 // pred_check_branch
      %3704 = sbr.rel (0) target = $region57
    $region56: #{bert_for_lcr_forward.1} parent=1 // pred_region
      %s3706 = ssub.s32 32, 32
      %3707 = vsyncadd [#allocation4], %s3706
      %s3709 = sshll.u32 [#allocation11], 4
      %s3710 = int_to_ptr.vmem [resolvable:$true] %s3709
      %3712 = dma.vmem_to_hbm [thread:$0]  %s3710, 32, %s8, [#allocation4]
    $region57: #{bert_for_lcr_forward.1} parent=1 // pred_fallthru
      _
    // Predicated region
    $region58: #{bert_for_lcr_forward.1} parent=1 // pred_check
      _
    $region59: #{bert_for_lcr_forward.1} parent=1 // pred_check_branch
      %3714 = sbr.rel (0) target = $region61
    $region60: #{bert_for_lcr_forward.1} parent=1 // pred_region
      %3715 = dma.done [#allocation4], 32
    $region61: #{bert_for_lcr_forward.1} parent=1 // pred_fallthru
      _
    %3716 = vsyncpa [#allocation3], 1
    %3717 = vsyncpa [#allocation6], 1
    %3718 = vsyncpa [#allocation9], 1
    %3719 = vsyncpa [#allocation4], 1

</llo_original>
